<compile_context>
chip_gen: v5e
topology: v5e:2x2
jax: 0.10.0
libtpu: 0.0.40
codegen_flags: <defaults>
</compile_context>

<pallas_src>
import numpy as np
import jax
import jax.numpy as jnp
from jax.experimental import pallas as pl
from jax.experimental.pallas import tpu as pltpu

# ----------------------------- configuration --------------------------------
PATCH_NUM = 8          # perfect cube -> patch_size p = 2
DIM = 32
DEPTH = 2
HEADS = 4
DIM_HEAD = 8
MLP_DIM = 64
OUT_CHANNEL = 4
KERNEL_SIZE = 3
STRIDE = 2
PADDING = 1
BATCH = 2
LN_EPS = 1e-5

P = int(round(PATCH_NUM ** (1.0 / 3.0)))
assert P ** 3 == PATCH_NUM
N_TOK = PATCH_NUM + 1                                   # +1 cls token
INNER = HEADS * DIM_HEAD
O_SP = (P - 1) * STRIDE - 2 * PADDING + KERNEL_SIZE     # ConvTranspose3d output spatial (=3)
O3 = O_SP ** 3
OD = O3 * OUT_CHANNEL                                   # 108
OD_PAD = 128                                            # lane-dense padded conv output width
BN = BATCH * N_TOK                                      # 18 flattened tokens


# ----------------------------- in-kernel math --------------------------------
def _layer_norm(x, w, b):
    mu = jnp.mean(x, axis=-1, keepdims=True)
    d = x - mu
    var = jnp.mean(d * d, axis=-1, keepdims=True)
    return d * jax.lax.rsqrt(var + LN_EPS) * w + b


def _gelu_tanh(x):
    # tanh-based GELU: tanh runs on the EUP (own VLIW slot) instead of a VALU
    # polynomial erf; max abs error vs exact-erf GELU ~3e-4 (fine for inference).
    c0 = 0.7978845608028654   # sqrt(2/pi)
    c1 = 0.044715
    return 0.5 * x * (1.0 + jnp.tanh(c0 * (x + c1 * x * x * x)))


# ---------------------- fused forward pass (one kernel) ----------------------
def _fused_forward_kernel(x2d_ref, selx_ref, tokb_ref, selt_ref, amask_ref,
                          ln1w_ref, ln1b_ref, wqkv_ref, wo_ref, bo_ref,
                          ln2w_ref, ln2b_ref, w1_ref, b1_ref, w2_ref, b2_ref,
                          weff_ref, beff_ref, o_ref):
    f32 = jnp.float32

    # ---- token assembly: h[b*N + 0] = cls + pos[0]; h[b*N + 1 + i] = x[b,i] + pos[1+i]
    # done with a constant 0/1 selection matmul plus a precomputed bias (no concat).
    h = jnp.dot(selx_ref[...], x2d_ref[...], preferred_element_type=f32) + tokb_ref[...]
    # Dropout(p=0.1) after the pos-embed add: inference mode -> identity.

    amask = amask_ref[...]            # (BN, BN): 0 same-batch, -1e30 cross-batch

    for li in range(DEPTH):
        # ===== Attention block (pre-LN) + residual =====
        xn = _layer_norm(h, ln1w_ref[li], ln1b_ref[li])
        qkv = jnp.dot(xn, wqkv_ref[li], preferred_element_type=f32)       # (BN, 3*INNER)
        wo_l = wo_ref[li]                                                  # (INNER, D)
        attn_out = jnp.zeros((BN, DIM), f32)
        for hh in range(HEADS):
            lo = hh * DIM_HEAD
            q = qkv[:, lo:lo + DIM_HEAD]                  # scale pre-folded into w_qkv
            k = qkv[:, INNER + lo:INNER + lo + DIM_HEAD]
            v = qkv[:, 2 * INNER + lo:2 * INNER + lo + DIM_HEAD]
            # q @ k^T without materializing a transpose
            dots = jax.lax.dot_general(q, k, (((1,), (1,)), ((), ())),
                                       preferred_element_type=f32)        # (BN, BN)
            dots = dots + amask                                            # batch isolation
            m = jnp.max(dots, axis=-1, keepdims=True)
            e = jnp.exp(dots - m)
            attn = e * pl.reciprocal(jnp.sum(e, axis=-1, keepdims=True), approx=True)
            hv = jnp.dot(attn, v, preferred_element_type=f32)              # (BN, DIM_HEAD)
            # output projection folded into the head loop (no (BN, INNER) concat)
            attn_out = attn_out + jnp.dot(hv, wo_l[lo:lo + DIM_HEAD, :],
                                          preferred_element_type=f32)
        h = h + attn_out + bo_ref[li]

        # ===== FeedForward block (pre-LN) + residual =====
        xn2 = _layer_norm(h, ln2w_ref[li], ln2b_ref[li])
        h1 = jnp.dot(xn2, w1_ref[li], preferred_element_type=f32) + b1_ref[li]
        h1 = _gelu_tanh(h1)
        h2 = jnp.dot(h1, w2_ref[li], preferred_element_type=f32) + b2_ref[li]
        h = h + h2

    # ===== drop cls + PatchTo3D + ConvTranspose3d, folded into per-token matmuls =====
    # hsel row (i*B + b) = token i of batch b (cls dropped), via a constant selection matmul.
    hsel = jnp.dot(selt_ref[...], h, preferred_element_type=f32)           # (B*PATCH_NUM, D)
    out = jnp.zeros((BATCH, OD_PAD), f32) + beff_ref[...]
    for i in range(PATCH_NUM):
        xi = hsel[i * BATCH:(i + 1) * BATCH, :]                            # (B, D)
        out = out + jnp.dot(xi, weff_ref[i], preferred_element_type=f32)   # (B, OD_PAD)
    o_ref[...] = out                                                       # lane-dense store


def _full_spec(shape):
    nd = len(shape)
    return pl.BlockSpec(shape, lambda i, _nd=nd: (0,) * _nd)


def transformer_decoder_3d(x, packed):
    B, n, D = x.shape
    x2d = x.reshape(B * n, D)                                              # (B*8, 32)

    args = (x2d, packed["sel_x"], packed["tok_bias"], packed["sel_t"], packed["attn_mask"],
            packed["ln1_w"], packed["ln1_b"], packed["w_qkv"], packed["w_o"], packed["b_o"],
            packed["ln2_w"], packed["ln2_b"], packed["w1"], packed["b1"],
            packed["w2"], packed["b2"], packed["w_eff"], packed["b_eff"])

    out_flat = pl.pallas_call(
        _fused_forward_kernel,
        out_shape=jax.ShapeDtypeStruct((B, OD_PAD), jnp.float32),
        grid=(1,),
        in_specs=[_full_spec(a.shape) for a in args],
        out_specs=_full_spec((B, OD_PAD)),
        compiler_params=pltpu.CompilerParams(dimension_semantics=("arbitrary",)),
    )(*args)

    out = out_flat[:, :OD].reshape(B, O3, OUT_CHANNEL).transpose(0, 2, 1)
    return out.reshape(B, OUT_CHANNEL, O_SP, O_SP, O_SP)                   # NCDHW


# ----------------------- parameter construction (glue) -----------------------
def build_effective_convT_weight(w_ct, b_ct):
    """Fold ConvTranspose3d(weight=(Cin,Cout,K,K,K)) + PatchTo3D into per-token
    (D, OD_PAD) matmul blocks, zero-padded to a lane-dense 128-wide output:
       out[b, o*OC + j] = bias[j] + sum_{i,c} tok[b, i, c] * weff[i, c, o*OC + j]."""
    w_np = np.asarray(w_ct, np.float32)                       # (DIM, OC, K, K, K)
    weff = np.zeros((PATCH_NUM, DIM, OD_PAD), np.float32)
    for idd in range(P):
        for ih in range(P):
            for iw in range(P):
                i = (idd * P + ih) * P + iw
                for kd in range(KERNEL_SIZE):
                    od = idd * STRIDE - PADDING + kd
                    if not (0 <= od < O_SP):
                        continue
                    for kh in range(KERNEL_SIZE):
                        oh = ih * STRIDE - PADDING + kh
                        if not (0 <= oh < O_SP):
                            continue
                        for kw in range(KERNEL_SIZE):
                            ow = iw * STRIDE - PADDING + kw
                            if not (0 <= ow < O_SP):
                                continue
                            o = (od * O_SP + oh) * O_SP + ow
                            weff[i, :, o * OUT_CHANNEL:(o + 1) * OUT_CHANNEL] += \
                                w_np[:, :, kd, kh, kw]
    beff = np.zeros((1, OD_PAD), np.float32)
    beff[0, :OD] = np.tile(np.asarray(b_ct, np.float32)[None, :], (O3, 1)).reshape(-1)
    return jnp.asarray(weff), jnp.asarray(beff)


def init_params(key):
    k = jax.random.split(key, 4 + DEPTH)
    cls_token = jax.random.normal(k[0], (1, 1, DIM), jnp.float32)
    pos_embedding = jax.random.normal(k[1], (1, N_TOK, DIM), jnp.float32)
    scale = DIM_HEAD ** -0.5
    s = 0.02

    layers = []
    for li in range(DEPTH):
        lk = jax.random.split(k[2 + li], 8)
        w_qkv = s * jax.random.normal(lk[0], (DIM, 3 * INNER), jnp.float32)
        # fold 1/sqrt(dim_head) into the Q columns (to_qkv has no bias -> exact)
        w_qkv = jnp.concatenate([w_qkv[:, :INNER] * scale, w_qkv[:, INNER:]], axis=1)
        layers.append(dict(
            ln1_w=jnp.ones((1, DIM), jnp.float32),
            ln1_b=jnp.zeros((1, DIM), jnp.float32),
            w_qkv=w_qkv,
            w_o=s * jax.random.normal(lk[1], (INNER, DIM), jnp.float32),
            b_o=s * jax.random.normal(lk[2], (1, DIM), jnp.float32),
            ln2_w=jnp.ones((1, DIM), jnp.float32),
            ln2_b=jnp.zeros((1, DIM), jnp.float32),
            w1=s * jax.random.normal(lk[3], (DIM, MLP_DIM), jnp.float32),
            b1=s * jax.random.normal(lk[4], (1, MLP_DIM), jnp.float32),
            w2=s * jax.random.normal(lk[5], (MLP_DIM, DIM), jnp.float32),
            b2=s * jax.random.normal(lk[6], (1, DIM), jnp.float32),
        ))

    ck = jax.random.split(k[2 + DEPTH], 2)
    w_ct = 0.05 * jax.random.normal(
        ck[0], (DIM, OUT_CHANNEL, KERNEL_SIZE, KERNEL_SIZE, KERNEL_SIZE), jnp.float32)
    b_ct = 0.05 * jax.random.normal(ck[1], (OUT_CHANNEL,), jnp.float32)
    w_eff, b_eff = build_effective_convT_weight(w_ct, b_ct)

    packed = {}
    for name in ("ln1_w", "ln1_b", "w_qkv", "w_o", "b_o",
                 "ln2_w", "ln2_b", "w1", "b1", "w2", "b2"):
        packed[name] = jnp.stack([layers[li][name] for li in range(DEPTH)], axis=0)
    packed["w_eff"] = w_eff
    packed["b_eff"] = b_eff

    # --- constant selection matrices / masks (batch-layout glue, built once) ---
    sel_x = np.zeros((BN, BATCH * PATCH_NUM), np.float32)     # scatter x rows into tokens
    sel_t = np.zeros((BATCH * PATCH_NUM, BN), np.float32)     # gather non-cls tokens, token-major
    for b in range(BATCH):
        for i in range(PATCH_NUM):
            sel_x[b * N_TOK + 1 + i, b * PATCH_NUM + i] = 1.0
            sel_t[i * BATCH + b, b * N_TOK + 1 + i] = 1.0
    packed["sel_x"] = jnp.asarray(sel_x)
    packed["sel_t"] = jnp.asarray(sel_t)

    # pos-embedding replicated per batch, with cls_token folded into the cls rows
    tok_bias = np.tile(np.asarray(pos_embedding[0], np.float32), (BATCH, 1))   # (BN, D)
    cls_np = np.asarray(cls_token[0, 0], np.float32)
    for b in range(BATCH):
        tok_bias[b * N_TOK, :] += cls_np
    packed["tok_bias"] = jnp.asarray(tok_bias)

    # additive block-diagonal attention mask: 0 within a batch element, -1e30 across
    amask = np.full((BN, BN), -1e30, np.float32)
    for b in range(BATCH):
        amask[b * N_TOK:(b + 1) * N_TOK, b * N_TOK:(b + 1) * N_TOK] = 0.0
    packed["attn_mask"] = jnp.asarray(amask)
    return packed


# ---------------------------------- main --------------------------------------
if __name__ == "__main__":
    key = jax.random.PRNGKey(0)
    pkey, xkey = jax.random.split(key)
    packed = init_params(pkey)
    x = jax.random.normal(xkey, (BATCH, PATCH_NUM, DIM), jnp.float32)

    out = jax.jit(transformer_decoder_3d)(x, packed)
    out = jax.block_until_ready(out)
    assert out.shape == (BATCH, OUT_CHANNEL, O_SP, O_SP, O_SP), out.shape
    assert bool(jnp.all(jnp.isfinite(out)))
    print("KERNEL_OK")
</pallas_src>

<mosaic_0001>
module attributes {stable_mosaic.version = 11 : i64} {
  func.func @_fused_forward_kernel(%arg0: i32, %arg1: memref<16x32xf32, #tpu.memory_space<vmem>>, %arg2: memref<18x16xf32, #tpu.memory_space<vmem>>, %arg3: memref<18x32xf32, #tpu.memory_space<vmem>>, %arg4: memref<16x18xf32, #tpu.memory_space<vmem>>, %arg5: memref<18x18xf32, #tpu.memory_space<vmem>>, %arg6: memref<2x1x32xf32, #tpu.memory_space<vmem>>, %arg7: memref<2x1x32xf32, #tpu.memory_space<vmem>>, %arg8: memref<2x32x96xf32, #tpu.memory_space<vmem>>, %arg9: memref<2x32x32xf32, #tpu.memory_space<vmem>>, %arg10: memref<2x1x32xf32, #tpu.memory_space<vmem>>, %arg11: memref<2x1x32xf32, #tpu.memory_space<vmem>>, %arg12: memref<2x1x32xf32, #tpu.memory_space<vmem>>, %arg13: memref<2x32x64xf32, #tpu.memory_space<vmem>>, %arg14: memref<2x1x64xf32, #tpu.memory_space<vmem>>, %arg15: memref<2x64x32xf32, #tpu.memory_space<vmem>>, %arg16: memref<2x1x32xf32, #tpu.memory_space<vmem>>, %arg17: memref<8x32x128xf32, #tpu.memory_space<vmem>>, %arg18: memref<1x128xf32, #tpu.memory_space<vmem>>, %arg19: memref<2x128xf32, #tpu.memory_space<vmem>>) attributes {dimension_semantics = [#tpu.dimension_semantics<arbitrary>], iteration_bounds = array<i64: 1>, scalar_prefetch = 0 : i64, scratch_operands = 0 : i64, tpu.core_type = #tpu.core_type<tc>, window_params = [{pipeline_mode = #tpu.pipeline_mode<synchronous>, transform_indices = @transform_0, window_bounds = array<i64: 16, 32>}, {pipeline_mode = #tpu.pipeline_mode<synchronous>, transform_indices = @transform_1, window_bounds = array<i64: 18, 16>}, {pipeline_mode = #tpu.pipeline_mode<synchronous>, transform_indices = @transform_2, window_bounds = array<i64: 18, 32>}, {pipeline_mode = #tpu.pipeline_mode<synchronous>, transform_indices = @transform_3, window_bounds = array<i64: 16, 18>}, {pipeline_mode = #tpu.pipeline_mode<synchronous>, transform_indices = @transform_4, window_bounds = array<i64: 18, 18>}, {pipeline_mode = #tpu.pipeline_mode<synchronous>, transform_indices = @transform_5, window_bounds = array<i64: 2, 1, 32>}, {pipeline_mode = #tpu.pipeline_mode<synchronous>, transform_indices = @transform_6, window_bounds = array<i64: 2, 1, 32>}, {pipeline_mode = #tpu.pipeline_mode<synchronous>, transform_indices = @transform_7, window_bounds = array<i64: 2, 32, 96>}, {pipeline_mode = #tpu.pipeline_mode<synchronous>, transform_indices = @transform_8, window_bounds = array<i64: 2, 32, 32>}, {pipeline_mode = #tpu.pipeline_mode<synchronous>, transform_indices = @transform_9, window_bounds = array<i64: 2, 1, 32>}, {pipeline_mode = #tpu.pipeline_mode<synchronous>, transform_indices = @transform_10, window_bounds = array<i64: 2, 1, 32>}, {pipeline_mode = #tpu.pipeline_mode<synchronous>, transform_indices = @transform_11, window_bounds = array<i64: 2, 1, 32>}, {pipeline_mode = #tpu.pipeline_mode<synchronous>, transform_indices = @transform_12, window_bounds = array<i64: 2, 32, 64>}, {pipeline_mode = #tpu.pipeline_mode<synchronous>, transform_indices = @transform_13, window_bounds = array<i64: 2, 1, 64>}, {pipeline_mode = #tpu.pipeline_mode<synchronous>, transform_indices = @transform_14, window_bounds = array<i64: 2, 64, 32>}, {pipeline_mode = #tpu.pipeline_mode<synchronous>, transform_indices = @transform_15, window_bounds = array<i64: 2, 1, 32>}, {pipeline_mode = #tpu.pipeline_mode<synchronous>, transform_indices = @transform_16, window_bounds = array<i64: 8, 32, 128>}, {pipeline_mode = #tpu.pipeline_mode<synchronous>, transform_indices = @transform_17, window_bounds = array<i64: 1, 128>}, {pipeline_mode = #tpu.pipeline_mode<synchronous>, transform_indices = @transform_18, window_bounds = array<i64: 2, 128>}]} {
    %c0 = arith.constant 0 : index
    %c0_0 = arith.constant 0 : index
    %0 = vector.load %arg2[%c0, %c0_0] : memref<18x16xf32, #tpu.memory_space<vmem>>, vector<18x16xf32>
    %c0_1 = arith.constant 0 : index
    %c0_2 = arith.constant 0 : index
    %1 = vector.load %arg1[%c0_1, %c0_2] : memref<16x32xf32, #tpu.memory_space<vmem>>, vector<16x32xf32>
    %cst = arith.constant dense<0.000000e+00> : vector<18x32xf32>
    %2 = tpu.matmul %0, %1, %cst {dimension_numbers = #tpu.dot_dimension_numbers<[1], [0], [0], [1], [0, 0, 1, 1], [], []>} : vector<18x16xf32>, vector<16x32xf32>, vector<18x32xf32> -> vector<18x32xf32>
    %c0_3 = arith.constant 0 : index
    %c0_4 = arith.constant 0 : index
    %3 = vector.load %arg3[%c0_3, %c0_4] : memref<18x32xf32, #tpu.memory_space<vmem>>, vector<18x32xf32>
    %4 = arith.addf %2, %3 : vector<18x32xf32>
    %c0_5 = arith.constant 0 : index
    %c0_6 = arith.constant 0 : index
    %5 = vector.load %arg5[%c0_5, %c0_6] : memref<18x18xf32, #tpu.memory_space<vmem>>, vector<18x18xf32>
    %c0_7 = arith.constant 0 : index
    %c0_8 = arith.constant 0 : index
    %c0_9 = arith.constant 0 : index
    %6 = vector.load %arg6[%c0_7, %c0_8, %c0_9] : memref<2x1x32xf32, #tpu.memory_space<vmem>>, vector<1x1x32xf32>
    %7 = vector.shape_cast %6 : vector<1x1x32xf32> to vector<1x32xf32>
    %c0_10 = arith.constant 0 : index
    %c0_11 = arith.constant 0 : index
    %c0_12 = arith.constant 0 : index
    %8 = vector.load %arg7[%c0_10, %c0_11, %c0_12] : memref<2x1x32xf32, #tpu.memory_space<vmem>>, vector<1x1x32xf32>
    %9 = vector.shape_cast %8 : vector<1x1x32xf32> to vector<1x32xf32>
    %cst_13 = arith.constant dense<0.000000e+00> : vector<18xf32>
    %10 = vector.multi_reduction <add>, %4, %cst_13 [1] : vector<18x32xf32> to vector<18xf32>
    %11 = vector.shape_cast %10 : vector<18xf32> to vector<18x1xf32>
    %cst_14 = arith.constant 3.200000e+01 : f32
    %12 = vector.broadcast %cst_14 : f32 to vector<18x1xf32>
    %13 = arith.divf %11, %12 : vector<18x1xf32>
    %14 = vector.broadcast %13 : vector<18x1xf32> to vector<18x32xf32>
    %15 = arith.subf %4, %14 : vector<18x32xf32>
    %16 = arith.mulf %15, %15 : vector<18x32xf32>
    %cst_15 = arith.constant dense<0.000000e+00> : vector<18xf32>
    %17 = vector.multi_reduction <add>, %16, %cst_15 [1] : vector<18x32xf32> to vector<18xf32>
    %18 = vector.shape_cast %17 : vector<18xf32> to vector<18x1xf32>
    %cst_16 = arith.constant 3.200000e+01 : f32
    %19 = vector.broadcast %cst_16 : f32 to vector<18x1xf32>
    %20 = arith.divf %18, %19 : vector<18x1xf32>
    %cst_17 = arith.constant 9.99999974E-6 : f32
    %21 = vector.broadcast %cst_17 : f32 to vector<18x1xf32>
    %22 = arith.addf %20, %21 : vector<18x1xf32>
    %23 = math.rsqrt %22 : vector<18x1xf32>
    %24 = vector.broadcast %23 : vector<18x1xf32> to vector<18x32xf32>
    %25 = arith.mulf %15, %24 : vector<18x32xf32>
    %26 = vector.broadcast %7 : vector<1x32xf32> to vector<18x32xf32>
    %27 = arith.mulf %25, %26 : vector<18x32xf32>
    %28 = vector.broadcast %9 : vector<1x32xf32> to vector<18x32xf32>
    %29 = arith.addf %27, %28 : vector<18x32xf32>
    %c0_18 = arith.constant 0 : index
    %c0_19 = arith.constant 0 : index
    %c0_20 = arith.constant 0 : index
    %30 = vector.load %arg8[%c0_18, %c0_19, %c0_20] : memref<2x32x96xf32, #tpu.memory_space<vmem>>, vector<1x32x96xf32>
    %31 = vector.shape_cast %30 : vector<1x32x96xf32> to vector<32x96xf32>
    %cst_21 = arith.constant dense<0.000000e+00> : vector<18x96xf32>
    %32 = tpu.matmul %29, %31, %cst_21 {dimension_numbers = #tpu.dot_dimension_numbers<[1], [0], [0], [1], [0, 0, 1, 1], [], []>} : vector<18x32xf32>, vector<32x96xf32>, vector<18x96xf32> -> vector<18x96xf32>
    %c0_22 = arith.constant 0 : index
    %c0_23 = arith.constant 0 : index
    %c0_24 = arith.constant 0 : index
    %33 = vector.load %arg9[%c0_22, %c0_23, %c0_24] : memref<2x32x32xf32, #tpu.memory_space<vmem>>, vector<1x32x32xf32>
    %34 = vector.shape_cast %33 : vector<1x32x32xf32> to vector<32x32xf32>
    %cst_25 = arith.constant 0.000000e+00 : f32
    %35 = vector.broadcast %cst_25 : f32 to vector<18x32xf32>
    %36 = vector.extract_strided_slice %32 {offsets = [0, 0], sizes = [18, 8], strides = [1, 1]} : vector<18x96xf32> to vector<18x8xf32>
    %37 = vector.extract_strided_slice %32 {offsets = [0, 32], sizes = [18, 8], strides = [1, 1]} : vector<18x96xf32> to vector<18x8xf32>
    %38 = vector.extract_strided_slice %32 {offsets = [0, 64], sizes = [18, 8], strides = [1, 1]} : vector<18x96xf32> to vector<18x8xf32>
    %cst_26 = arith.constant dense<0.000000e+00> : vector<18x18xf32>
    %39 = tpu.matmul %36, %37, %cst_26 {dimension_numbers = #tpu.dot_dimension_numbers<[1], [1], [0], [0], [0, 0, 1, 0], [], []>} : vector<18x8xf32>, vector<18x8xf32>, vector<18x18xf32> -> vector<18x18xf32>
    %40 = arith.addf %39, %5 : vector<18x18xf32>
    %cst_27 = arith.constant dense<0xFF800000> : vector<18xf32>
    %41 = vector.multi_reduction <maximumf>, %40, %cst_27 [1] : vector<18x18xf32> to vector<18xf32>
    %42 = vector.shape_cast %41 : vector<18xf32> to vector<18x1xf32>
    %43 = vector.broadcast %42 : vector<18x1xf32> to vector<18x18xf32>
    %44 = arith.subf %40, %43 : vector<18x18xf32>
    %45 = math.exp %44 : vector<18x18xf32>
    %cst_28 = arith.constant dense<0.000000e+00> : vector<18xf32>
    %46 = vector.multi_reduction <add>, %45, %cst_28 [1] : vector<18x18xf32> to vector<18xf32>
    %47 = vector.shape_cast %46 : vector<18xf32> to vector<18x1xf32>
    %48 = tpu.reciprocal %47 {approx = true} : vector<18x1xf32> -> vector<18x1xf32>
    %49 = vector.broadcast %48 : vector<18x1xf32> to vector<18x18xf32>
    %50 = arith.mulf %45, %49 : vector<18x18xf32>
    %cst_29 = arith.constant dense<0.000000e+00> : vector<18x8xf32>
    %51 = tpu.matmul %50, %38, %cst_29 {dimension_numbers = #tpu.dot_dimension_numbers<[1], [0], [0], [1], [0, 0, 1, 1], [], []>} : vector<18x18xf32>, vector<18x8xf32>, vector<18x8xf32> -> vector<18x8xf32>
    %52 = vector.extract_strided_slice %34 {offsets = [0, 0], sizes = [8, 32], strides = [1, 1]} : vector<32x32xf32> to vector<8x32xf32>
    %cst_30 = arith.constant dense<0.000000e+00> : vector<18x32xf32>
    %53 = tpu.matmul %51, %52, %cst_30 {dimension_numbers = #tpu.dot_dimension_numbers<[1], [0], [0], [1], [0, 0, 1, 1], [], []>} : vector<18x8xf32>, vector<8x32xf32>, vector<18x32xf32> -> vector<18x32xf32>
    %54 = arith.addf %35, %53 : vector<18x32xf32>
    %55 = vector.extract_strided_slice %32 {offsets = [0, 8], sizes = [18, 8], strides = [1, 1]} : vector<18x96xf32> to vector<18x8xf32>
    %56 = vector.extract_strided_slice %32 {offsets = [0, 40], sizes = [18, 8], strides = [1, 1]} : vector<18x96xf32> to vector<18x8xf32>
    %57 = vector.extract_strided_slice %32 {offsets = [0, 72], sizes = [18, 8], strides = [1, 1]} : vector<18x96xf32> to vector<18x8xf32>
    %cst_31 = arith.constant dense<0.000000e+00> : vector<18x18xf32>
    %58 = tpu.matmul %55, %56, %cst_31 {dimension_numbers = #tpu.dot_dimension_numbers<[1], [1], [0], [0], [0, 0, 1, 0], [], []>} : vector<18x8xf32>, vector<18x8xf32>, vector<18x18xf32> -> vector<18x18xf32>
    %59 = arith.addf %58, %5 : vector<18x18xf32>
    %cst_32 = arith.constant dense<0xFF800000> : vector<18xf32>
    %60 = vector.multi_reduction <maximumf>, %59, %cst_32 [1] : vector<18x18xf32> to vector<18xf32>
    %61 = vector.shape_cast %60 : vector<18xf32> to vector<18x1xf32>
    %62 = vector.broadcast %61 : vector<18x1xf32> to vector<18x18xf32>
    %63 = arith.subf %59, %62 : vector<18x18xf32>
    %64 = math.exp %63 : vector<18x18xf32>
    %cst_33 = arith.constant dense<0.000000e+00> : vector<18xf32>
    %65 = vector.multi_reduction <add>, %64, %cst_33 [1] : vector<18x18xf32> to vector<18xf32>
    %66 = vector.shape_cast %65 : vector<18xf32> to vector<18x1xf32>
    %67 = tpu.reciprocal %66 {approx = true} : vector<18x1xf32> -> vector<18x1xf32>
    %68 = vector.broadcast %67 : vector<18x1xf32> to vector<18x18xf32>
    %69 = arith.mulf %64, %68 : vector<18x18xf32>
    %cst_34 = arith.constant dense<0.000000e+00> : vector<18x8xf32>
    %70 = tpu.matmul %69, %57, %cst_34 {dimension_numbers = #tpu.dot_dimension_numbers<[1], [0], [0], [1], [0, 0, 1, 1], [], []>} : vector<18x18xf32>, vector<18x8xf32>, vector<18x8xf32> -> vector<18x8xf32>
    %71 = vector.extract_strided_slice %34 {offsets = [8, 0], sizes = [8, 32], strides = [1, 1]} : vector<32x32xf32> to vector<8x32xf32>
    %cst_35 = arith.constant dense<0.000000e+00> : vector<18x32xf32>
    %72 = tpu.matmul %70, %71, %cst_35 {dimension_numbers = #tpu.dot_dimension_numbers<[1], [0], [0], [1], [0, 0, 1, 1], [], []>} : vector<18x8xf32>, vector<8x32xf32>, vector<18x32xf32> -> vector<18x32xf32>
    %73 = arith.addf %54, %72 : vector<18x32xf32>
    %74 = vector.extract_strided_slice %32 {offsets = [0, 16], sizes = [18, 8], strides = [1, 1]} : vector<18x96xf32> to vector<18x8xf32>
    %75 = vector.extract_strided_slice %32 {offsets = [0, 48], sizes = [18, 8], strides = [1, 1]} : vector<18x96xf32> to vector<18x8xf32>
    %76 = vector.extract_strided_slice %32 {offsets = [0, 80], sizes = [18, 8], strides = [1, 1]} : vector<18x96xf32> to vector<18x8xf32>
    %cst_36 = arith.constant dense<0.000000e+00> : vector<18x18xf32>
    %77 = tpu.matmul %74, %75, %cst_36 {dimension_numbers = #tpu.dot_dimension_numbers<[1], [1], [0], [0], [0, 0, 1, 0], [], []>} : vector<18x8xf32>, vector<18x8xf32>, vector<18x18xf32> -> vector<18x18xf32>
    %78 = arith.addf %77, %5 : vector<18x18xf32>
    %cst_37 = arith.constant dense<0xFF800000> : vector<18xf32>
    %79 = vector.multi_reduction <maximumf>, %78, %cst_37 [1] : vector<18x18xf32> to vector<18xf32>
    %80 = vector.shape_cast %79 : vector<18xf32> to vector<18x1xf32>
    %81 = vector.broadcast %80 : vector<18x1xf32> to vector<18x18xf32>
    %82 = arith.subf %78, %81 : vector<18x18xf32>
    %83 = math.exp %82 : vector<18x18xf32>
    %cst_38 = arith.constant dense<0.000000e+00> : vector<18xf32>
    %84 = vector.multi_reduction <add>, %83, %cst_38 [1] : vector<18x18xf32> to vector<18xf32>
    %85 = vector.shape_cast %84 : vector<18xf32> to vector<18x1xf32>
    %86 = tpu.reciprocal %85 {approx = true} : vector<18x1xf32> -> vector<18x1xf32>
    %87 = vector.broadcast %86 : vector<18x1xf32> to vector<18x18xf32>
    %88 = arith.mulf %83, %87 : vector<18x18xf32>
    %cst_39 = arith.constant dense<0.000000e+00> : vector<18x8xf32>
    %89 = tpu.matmul %88, %76, %cst_39 {dimension_numbers = #tpu.dot_dimension_numbers<[1], [0], [0], [1], [0, 0, 1, 1], [], []>} : vector<18x18xf32>, vector<18x8xf32>, vector<18x8xf32> -> vector<18x8xf32>
    %90 = vector.extract_strided_slice %34 {offsets = [16, 0], sizes = [8, 32], strides = [1, 1]} : vector<32x32xf32> to vector<8x32xf32>
    %cst_40 = arith.constant dense<0.000000e+00> : vector<18x32xf32>
    %91 = tpu.matmul %89, %90, %cst_40 {dimension_numbers = #tpu.dot_dimension_numbers<[1], [0], [0], [1], [0, 0, 1, 1], [], []>} : vector<18x8xf32>, vector<8x32xf32>, vector<18x32xf32> -> vector<18x32xf32>
    %92 = arith.addf %73, %91 : vector<18x32xf32>
    %93 = vector.extract_strided_slice %32 {offsets = [0, 24], sizes = [18, 8], strides = [1, 1]} : vector<18x96xf32> to vector<18x8xf32>
    %94 = vector.extract_strided_slice %32 {offsets = [0, 56], sizes = [18, 8], strides = [1, 1]} : vector<18x96xf32> to vector<18x8xf32>
    %95 = vector.extract_strided_slice %32 {offsets = [0, 88], sizes = [18, 8], strides = [1, 1]} : vector<18x96xf32> to vector<18x8xf32>
    %cst_41 = arith.constant dense<0.000000e+00> : vector<18x18xf32>
    %96 = tpu.matmul %93, %94, %cst_41 {dimension_numbers = #tpu.dot_dimension_numbers<[1], [1], [0], [0], [0, 0, 1, 0], [], []>} : vector<18x8xf32>, vector<18x8xf32>, vector<18x18xf32> -> vector<18x18xf32>
    %97 = arith.addf %96, %5 : vector<18x18xf32>
    %cst_42 = arith.constant dense<0xFF800000> : vector<18xf32>
    %98 = vector.multi_reduction <maximumf>, %97, %cst_42 [1] : vector<18x18xf32> to vector<18xf32>
    %99 = vector.shape_cast %98 : vector<18xf32> to vector<18x1xf32>
    %100 = vector.broadcast %99 : vector<18x1xf32> to vector<18x18xf32>
    %101 = arith.subf %97, %100 : vector<18x18xf32>
    %102 = math.exp %101 : vector<18x18xf32>
    %cst_43 = arith.constant dense<0.000000e+00> : vector<18xf32>
    %103 = vector.multi_reduction <add>, %102, %cst_43 [1] : vector<18x18xf32> to vector<18xf32>
    %104 = vector.shape_cast %103 : vector<18xf32> to vector<18x1xf32>
    %105 = tpu.reciprocal %104 {approx = true} : vector<18x1xf32> -> vector<18x1xf32>
    %106 = vector.broadcast %105 : vector<18x1xf32> to vector<18x18xf32>
    %107 = arith.mulf %102, %106 : vector<18x18xf32>
    %cst_44 = arith.constant dense<0.000000e+00> : vector<18x8xf32>
    %108 = tpu.matmul %107, %95, %cst_44 {dimension_numbers = #tpu.dot_dimension_numbers<[1], [0], [0], [1], [0, 0, 1, 1], [], []>} : vector<18x18xf32>, vector<18x8xf32>, vector<18x8xf32> -> vector<18x8xf32>
    %109 = vector.extract_strided_slice %34 {offsets = [24, 0], sizes = [8, 32], strides = [1, 1]} : vector<32x32xf32> to vector<8x32xf32>
    %cst_45 = arith.constant dense<0.000000e+00> : vector<18x32xf32>
    %110 = tpu.matmul %108, %109, %cst_45 {dimension_numbers = #tpu.dot_dimension_numbers<[1], [0], [0], [1], [0, 0, 1, 1], [], []>} : vector<18x8xf32>, vector<8x32xf32>, vector<18x32xf32> -> vector<18x32xf32>
    %111 = arith.addf %92, %110 : vector<18x32xf32>
    %112 = arith.addf %4, %111 : vector<18x32xf32>
    %c0_46 = arith.constant 0 : index
    %c0_47 = arith.constant 0 : index
    %c0_48 = arith.constant 0 : index
    %113 = vector.load %arg10[%c0_46, %c0_47, %c0_48] : memref<2x1x32xf32, #tpu.memory_space<vmem>>, vector<1x1x32xf32>
    %114 = vector.shape_cast %113 : vector<1x1x32xf32> to vector<1x32xf32>
    %115 = vector.broadcast %114 : vector<1x32xf32> to vector<18x32xf32>
    %116 = arith.addf %112, %115 : vector<18x32xf32>
    %c0_49 = arith.constant 0 : index
    %c0_50 = arith.constant 0 : index
    %c0_51 = arith.constant 0 : index
    %117 = vector.load %arg11[%c0_49, %c0_50, %c0_51] : memref<2x1x32xf32, #tpu.memory_space<vmem>>, vector<1x1x32xf32>
    %118 = vector.shape_cast %117 : vector<1x1x32xf32> to vector<1x32xf32>
    %c0_52 = arith.constant 0 : index
    %c0_53 = arith.constant 0 : index
    %c0_54 = arith.constant 0 : index
    %119 = vector.load %arg12[%c0_52, %c0_53, %c0_54] : memref<2x1x32xf32, #tpu.memory_space<vmem>>, vector<1x1x32xf32>
    %120 = vector.shape_cast %119 : vector<1x1x32xf32> to vector<1x32xf32>
    %cst_55 = arith.constant dense<0.000000e+00> : vector<18xf32>
    %121 = vector.multi_reduction <add>, %116, %cst_55 [1] : vector<18x32xf32> to vector<18xf32>
    %122 = vector.shape_cast %121 : vector<18xf32> to vector<18x1xf32>
    %cst_56 = arith.constant 3.200000e+01 : f32
    %123 = vector.broadcast %cst_56 : f32 to vector<18x1xf32>
    %124 = arith.divf %122, %123 : vector<18x1xf32>
    %125 = vector.broadcast %124 : vector<18x1xf32> to vector<18x32xf32>
    %126 = arith.subf %116, %125 : vector<18x32xf32>
    %127 = arith.mulf %126, %126 : vector<18x32xf32>
    %cst_57 = arith.constant dense<0.000000e+00> : vector<18xf32>
    %128 = vector.multi_reduction <add>, %127, %cst_57 [1] : vector<18x32xf32> to vector<18xf32>
    %129 = vector.shape_cast %128 : vector<18xf32> to vector<18x1xf32>
    %cst_58 = arith.constant 3.200000e+01 : f32
    %130 = vector.broadcast %cst_58 : f32 to vector<18x1xf32>
    %131 = arith.divf %129, %130 : vector<18x1xf32>
    %cst_59 = arith.constant 9.99999974E-6 : f32
    %132 = vector.broadcast %cst_59 : f32 to vector<18x1xf32>
    %133 = arith.addf %131, %132 : vector<18x1xf32>
    %134 = math.rsqrt %133 : vector<18x1xf32>
    %135 = vector.broadcast %134 : vector<18x1xf32> to vector<18x32xf32>
    %136 = arith.mulf %126, %135 : vector<18x32xf32>
    %137 = vector.broadcast %118 : vector<1x32xf32> to vector<18x32xf32>
    %138 = arith.mulf %136, %137 : vector<18x32xf32>
    %139 = vector.broadcast %120 : vector<1x32xf32> to vector<18x32xf32>
    %140 = arith.addf %138, %139 : vector<18x32xf32>
    %c0_60 = arith.constant 0 : index
    %c0_61 = arith.constant 0 : index
    %c0_62 = arith.constant 0 : index
    %141 = vector.load %arg13[%c0_60, %c0_61, %c0_62] : memref<2x32x64xf32, #tpu.memory_space<vmem>>, vector<1x32x64xf32>
    %142 = vector.shape_cast %141 : vector<1x32x64xf32> to vector<32x64xf32>
    %cst_63 = arith.constant dense<0.000000e+00> : vector<18x64xf32>
    %143 = tpu.matmul %140, %142, %cst_63 {dimension_numbers = #tpu.dot_dimension_numbers<[1], [0], [0], [1], [0, 0, 1, 1], [], []>} : vector<18x32xf32>, vector<32x64xf32>, vector<18x64xf32> -> vector<18x64xf32>
    %c0_64 = arith.constant 0 : index
    %c0_65 = arith.constant 0 : index
    %c0_66 = arith.constant 0 : index
    %144 = vector.load %arg14[%c0_64, %c0_65, %c0_66] : memref<2x1x64xf32, #tpu.memory_space<vmem>>, vector<1x1x64xf32>
    %145 = vector.shape_cast %144 : vector<1x1x64xf32> to vector<1x64xf32>
    %146 = vector.broadcast %145 : vector<1x64xf32> to vector<18x64xf32>
    %147 = arith.addf %143, %146 : vector<18x64xf32>
    %cst_67 = arith.constant 5.000000e-01 : f32
    %148 = vector.broadcast %cst_67 : f32 to vector<18x64xf32>
    %149 = arith.mulf %148, %147 : vector<18x64xf32>
    %cst_68 = arith.constant 4.471500e-02 : f32
    %150 = vector.broadcast %cst_68 : f32 to vector<18x64xf32>
    %151 = arith.mulf %150, %147 : vector<18x64xf32>
    %152 = arith.mulf %151, %147 : vector<18x64xf32>
    %153 = arith.mulf %152, %147 : vector<18x64xf32>
    %154 = arith.addf %147, %153 : vector<18x64xf32>
    %cst_69 = arith.constant 0.797884583 : f32
    %155 = vector.broadcast %cst_69 : f32 to vector<18x64xf32>
    %156 = arith.mulf %155, %154 : vector<18x64xf32>
    %157 = math.tanh %156 : vector<18x64xf32>
    %cst_70 = arith.constant 1.000000e+00 : f32
    %158 = vector.broadcast %cst_70 : f32 to vector<18x64xf32>
    %159 = arith.addf %158, %157 : vector<18x64xf32>
    %160 = arith.mulf %149, %159 : vector<18x64xf32>
    %c0_71 = arith.constant 0 : index
    %c0_72 = arith.constant 0 : index
    %c0_73 = arith.constant 0 : index
    %161 = vector.load %arg15[%c0_71, %c0_72, %c0_73] : memref<2x64x32xf32, #tpu.memory_space<vmem>>, vector<1x64x32xf32>
    %162 = vector.shape_cast %161 : vector<1x64x32xf32> to vector<64x32xf32>
    %cst_74 = arith.constant dense<0.000000e+00> : vector<18x32xf32>
    %163 = tpu.matmul %160, %162, %cst_74 {dimension_numbers = #tpu.dot_dimension_numbers<[1], [0], [0], [1], [0, 0, 1, 1], [], []>} : vector<18x64xf32>, vector<64x32xf32>, vector<18x32xf32> -> vector<18x32xf32>
    %c0_75 = arith.constant 0 : index
    %c0_76 = arith.constant 0 : index
    %c0_77 = arith.constant 0 : index
    %164 = vector.load %arg16[%c0_75, %c0_76, %c0_77] : memref<2x1x32xf32, #tpu.memory_space<vmem>>, vector<1x1x32xf32>
    %165 = vector.shape_cast %164 : vector<1x1x32xf32> to vector<1x32xf32>
    %166 = vector.broadcast %165 : vector<1x32xf32> to vector<18x32xf32>
    %167 = arith.addf %163, %166 : vector<18x32xf32>
    %168 = arith.addf %116, %167 : vector<18x32xf32>
    %c1 = arith.constant 1 : index
    %c0_78 = arith.constant 0 : index
    %c0_79 = arith.constant 0 : index
    %169 = vector.load %arg6[%c1, %c0_78, %c0_79] : memref<2x1x32xf32, #tpu.memory_space<vmem>>, vector<1x1x32xf32>
    %170 = vector.shape_cast %169 : vector<1x1x32xf32> to vector<1x32xf32>
    %c1_80 = arith.constant 1 : index
    %c0_81 = arith.constant 0 : index
    %c0_82 = arith.constant 0 : index
    %171 = vector.load %arg7[%c1_80, %c0_81, %c0_82] : memref<2x1x32xf32, #tpu.memory_space<vmem>>, vector<1x1x32xf32>
    %172 = vector.shape_cast %171 : vector<1x1x32xf32> to vector<1x32xf32>
    %cst_83 = arith.constant dense<0.000000e+00> : vector<18xf32>
    %173 = vector.multi_reduction <add>, %168, %cst_83 [1] : vector<18x32xf32> to vector<18xf32>
    %174 = vector.shape_cast %173 : vector<18xf32> to vector<18x1xf32>
    %cst_84 = arith.constant 3.200000e+01 : f32
    %175 = vector.broadcast %cst_84 : f32 to vector<18x1xf32>
    %176 = arith.divf %174, %175 : vector<18x1xf32>
    %177 = vector.broadcast %176 : vector<18x1xf32> to vector<18x32xf32>
    %178 = arith.subf %168, %177 : vector<18x32xf32>
    %179 = arith.mulf %178, %178 : vector<18x32xf32>
    %cst_85 = arith.constant dense<0.000000e+00> : vector<18xf32>
    %180 = vector.multi_reduction <add>, %179, %cst_85 [1] : vector<18x32xf32> to vector<18xf32>
    %181 = vector.shape_cast %180 : vector<18xf32> to vector<18x1xf32>
    %cst_86 = arith.constant 3.200000e+01 : f32
    %182 = vector.broadcast %cst_86 : f32 to vector<18x1xf32>
    %183 = arith.divf %181, %182 : vector<18x1xf32>
    %cst_87 = arith.constant 9.99999974E-6 : f32
    %184 = vector.broadcast %cst_87 : f32 to vector<18x1xf32>
    %185 = arith.addf %183, %184 : vector<18x1xf32>
    %186 = math.rsqrt %185 : vector<18x1xf32>
    %187 = vector.broadcast %186 : vector<18x1xf32> to vector<18x32xf32>
    %188 = arith.mulf %178, %187 : vector<18x32xf32>
    %189 = vector.broadcast %170 : vector<1x32xf32> to vector<18x32xf32>
    %190 = arith.mulf %188, %189 : vector<18x32xf32>
    %191 = vector.broadcast %172 : vector<1x32xf32> to vector<18x32xf32>
    %192 = arith.addf %190, %191 : vector<18x32xf32>
    %c1_88 = arith.constant 1 : index
    %c0_89 = arith.constant 0 : index
    %c0_90 = arith.constant 0 : index
    %193 = vector.load %arg8[%c1_88, %c0_89, %c0_90] : memref<2x32x96xf32, #tpu.memory_space<vmem>>, vector<1x32x96xf32>
    %194 = vector.shape_cast %193 : vector<1x32x96xf32> to vector<32x96xf32>
    %cst_91 = arith.constant dense<0.000000e+00> : vector<18x96xf32>
    %195 = tpu.matmul %192, %194, %cst_91 {dimension_numbers = #tpu.dot_dimension_numbers<[1], [0], [0], [1], [0, 0, 1, 1], [], []>} : vector<18x32xf32>, vector<32x96xf32>, vector<18x96xf32> -> vector<18x96xf32>
    %c1_92 = arith.constant 1 : index
    %c0_93 = arith.constant 0 : index
    %c0_94 = arith.constant 0 : index
    %196 = vector.load %arg9[%c1_92, %c0_93, %c0_94] : memref<2x32x32xf32, #tpu.memory_space<vmem>>, vector<1x32x32xf32>
    %197 = vector.shape_cast %196 : vector<1x32x32xf32> to vector<32x32xf32>
    %cst_95 = arith.constant 0.000000e+00 : f32
    %198 = vector.broadcast %cst_95 : f32 to vector<18x32xf32>
    %199 = vector.extract_strided_slice %195 {offsets = [0, 0], sizes = [18, 8], strides = [1, 1]} : vector<18x96xf32> to vector<18x8xf32>
    %200 = vector.extract_strided_slice %195 {offsets = [0, 32], sizes = [18, 8], strides = [1, 1]} : vector<18x96xf32> to vector<18x8xf32>
    %201 = vector.extract_strided_slice %195 {offsets = [0, 64], sizes = [18, 8], strides = [1, 1]} : vector<18x96xf32> to vector<18x8xf32>
    %cst_96 = arith.constant dense<0.000000e+00> : vector<18x18xf32>
    %202 = tpu.matmul %199, %200, %cst_96 {dimension_numbers = #tpu.dot_dimension_numbers<[1], [1], [0], [0], [0, 0, 1, 0], [], []>} : vector<18x8xf32>, vector<18x8xf32>, vector<18x18xf32> -> vector<18x18xf32>
    %203 = arith.addf %202, %5 : vector<18x18xf32>
    %cst_97 = arith.constant dense<0xFF800000> : vector<18xf32>
    %204 = vector.multi_reduction <maximumf>, %203, %cst_97 [1] : vector<18x18xf32> to vector<18xf32>
    %205 = vector.shape_cast %204 : vector<18xf32> to vector<18x1xf32>
    %206 = vector.broadcast %205 : vector<18x1xf32> to vector<18x18xf32>
    %207 = arith.subf %203, %206 : vector<18x18xf32>
    %208 = math.exp %207 : vector<18x18xf32>
    %cst_98 = arith.constant dense<0.000000e+00> : vector<18xf32>
    %209 = vector.multi_reduction <add>, %208, %cst_98 [1] : vector<18x18xf32> to vector<18xf32>
    %210 = vector.shape_cast %209 : vector<18xf32> to vector<18x1xf32>
    %211 = tpu.reciprocal %210 {approx = true} : vector<18x1xf32> -> vector<18x1xf32>
    %212 = vector.broadcast %211 : vector<18x1xf32> to vector<18x18xf32>
    %213 = arith.mulf %208, %212 : vector<18x18xf32>
    %cst_99 = arith.constant dense<0.000000e+00> : vector<18x8xf32>
    %214 = tpu.matmul %213, %201, %cst_99 {dimension_numbers = #tpu.dot_dimension_numbers<[1], [0], [0], [1], [0, 0, 1, 1], [], []>} : vector<18x18xf32>, vector<18x8xf32>, vector<18x8xf32> -> vector<18x8xf32>
    %215 = vector.extract_strided_slice %197 {offsets = [0, 0], sizes = [8, 32], strides = [1, 1]} : vector<32x32xf32> to vector<8x32xf32>
    %cst_100 = arith.constant dense<0.000000e+00> : vector<18x32xf32>
    %216 = tpu.matmul %214, %215, %cst_100 {dimension_numbers = #tpu.dot_dimension_numbers<[1], [0], [0], [1], [0, 0, 1, 1], [], []>} : vector<18x8xf32>, vector<8x32xf32>, vector<18x32xf32> -> vector<18x32xf32>
    %217 = arith.addf %198, %216 : vector<18x32xf32>
    %218 = vector.extract_strided_slice %195 {offsets = [0, 8], sizes = [18, 8], strides = [1, 1]} : vector<18x96xf32> to vector<18x8xf32>
    %219 = vector.extract_strided_slice %195 {offsets = [0, 40], sizes = [18, 8], strides = [1, 1]} : vector<18x96xf32> to vector<18x8xf32>
    %220 = vector.extract_strided_slice %195 {offsets = [0, 72], sizes = [18, 8], strides = [1, 1]} : vector<18x96xf32> to vector<18x8xf32>
    %cst_101 = arith.constant dense<0.000000e+00> : vector<18x18xf32>
    %221 = tpu.matmul %218, %219, %cst_101 {dimension_numbers = #tpu.dot_dimension_numbers<[1], [1], [0], [0], [0, 0, 1, 0], [], []>} : vector<18x8xf32>, vector<18x8xf32>, vector<18x18xf32> -> vector<18x18xf32>
    %222 = arith.addf %221, %5 : vector<18x18xf32>
    %cst_102 = arith.constant dense<0xFF800000> : vector<18xf32>
    %223 = vector.multi_reduction <maximumf>, %222, %cst_102 [1] : vector<18x18xf32> to vector<18xf32>
    %224 = vector.shape_cast %223 : vector<18xf32> to vector<18x1xf32>
    %225 = vector.broadcast %224 : vector<18x1xf32> to vector<18x18xf32>
    %226 = arith.subf %222, %225 : vector<18x18xf32>
    %227 = math.exp %226 : vector<18x18xf32>
    %cst_103 = arith.constant dense<0.000000e+00> : vector<18xf32>
    %228 = vector.multi_reduction <add>, %227, %cst_103 [1] : vector<18x18xf32> to vector<18xf32>
    %229 = vector.shape_cast %228 : vector<18xf32> to vector<18x1xf32>
    %230 = tpu.reciprocal %229 {approx = true} : vector<18x1xf32> -> vector<18x1xf32>
    %231 = vector.broadcast %230 : vector<18x1xf32> to vector<18x18xf32>
    %232 = arith.mulf %227, %231 : vector<18x18xf32>
    %cst_104 = arith.constant dense<0.000000e+00> : vector<18x8xf32>
    %233 = tpu.matmul %232, %220, %cst_104 {dimension_numbers = #tpu.dot_dimension_numbers<[1], [0], [0], [1], [0, 0, 1, 1], [], []>} : vector<18x18xf32>, vector<18x8xf32>, vector<18x8xf32> -> vector<18x8xf32>
    %234 = vector.extract_strided_slice %197 {offsets = [8, 0], sizes = [8, 32], strides = [1, 1]} : vector<32x32xf32> to vector<8x32xf32>
    %cst_105 = arith.constant dense<0.000000e+00> : vector<18x32xf32>
    %235 = tpu.matmul %233, %234, %cst_105 {dimension_numbers = #tpu.dot_dimension_numbers<[1], [0], [0], [1], [0, 0, 1, 1], [], []>} : vector<18x8xf32>, vector<8x32xf32>, vector<18x32xf32> -> vector<18x32xf32>
    %236 = arith.addf %217, %235 : vector<18x32xf32>
    %237 = vector.extract_strided_slice %195 {offsets = [0, 16], sizes = [18, 8], strides = [1, 1]} : vector<18x96xf32> to vector<18x8xf32>
    %238 = vector.extract_strided_slice %195 {offsets = [0, 48], sizes = [18, 8], strides = [1, 1]} : vector<18x96xf32> to vector<18x8xf32>
    %239 = vector.extract_strided_slice %195 {offsets = [0, 80], sizes = [18, 8], strides = [1, 1]} : vector<18x96xf32> to vector<18x8xf32>
    %cst_106 = arith.constant dense<0.000000e+00> : vector<18x18xf32>
    %240 = tpu.matmul %237, %238, %cst_106 {dimension_numbers = #tpu.dot_dimension_numbers<[1], [1], [0], [0], [0, 0, 1, 0], [], []>} : vector<18x8xf32>, vector<18x8xf32>, vector<18x18xf32> -> vector<18x18xf32>
    %241 = arith.addf %240, %5 : vector<18x18xf32>
    %cst_107 = arith.constant dense<0xFF800000> : vector<18xf32>
    %242 = vector.multi_reduction <maximumf>, %241, %cst_107 [1] : vector<18x18xf32> to vector<18xf32>
    %243 = vector.shape_cast %242 : vector<18xf32> to vector<18x1xf32>
    %244 = vector.broadcast %243 : vector<18x1xf32> to vector<18x18xf32>
    %245 = arith.subf %241, %244 : vector<18x18xf32>
    %246 = math.exp %245 : vector<18x18xf32>
    %cst_108 = arith.constant dense<0.000000e+00> : vector<18xf32>
    %247 = vector.multi_reduction <add>, %246, %cst_108 [1] : vector<18x18xf32> to vector<18xf32>
    %248 = vector.shape_cast %247 : vector<18xf32> to vector<18x1xf32>
    %249 = tpu.reciprocal %248 {approx = true} : vector<18x1xf32> -> vector<18x1xf32>
    %250 = vector.broadcast %249 : vector<18x1xf32> to vector<18x18xf32>
    %251 = arith.mulf %246, %250 : vector<18x18xf32>
    %cst_109 = arith.constant dense<0.000000e+00> : vector<18x8xf32>
    %252 = tpu.matmul %251, %239, %cst_109 {dimension_numbers = #tpu.dot_dimension_numbers<[1], [0], [0], [1], [0, 0, 1, 1], [], []>} : vector<18x18xf32>, vector<18x8xf32>, vector<18x8xf32> -> vector<18x8xf32>
    %253 = vector.extract_strided_slice %197 {offsets = [16, 0], sizes = [8, 32], strides = [1, 1]} : vector<32x32xf32> to vector<8x32xf32>
    %cst_110 = arith.constant dense<0.000000e+00> : vector<18x32xf32>
    %254 = tpu.matmul %252, %253, %cst_110 {dimension_numbers = #tpu.dot_dimension_numbers<[1], [0], [0], [1], [0, 0, 1, 1], [], []>} : vector<18x8xf32>, vector<8x32xf32>, vector<18x32xf32> -> vector<18x32xf32>
    %255 = arith.addf %236, %254 : vector<18x32xf32>
    %256 = vector.extract_strided_slice %195 {offsets = [0, 24], sizes = [18, 8], strides = [1, 1]} : vector<18x96xf32> to vector<18x8xf32>
    %257 = vector.extract_strided_slice %195 {offsets = [0, 56], sizes = [18, 8], strides = [1, 1]} : vector<18x96xf32> to vector<18x8xf32>
    %258 = vector.extract_strided_slice %195 {offsets = [0, 88], sizes = [18, 8], strides = [1, 1]} : vector<18x96xf32> to vector<18x8xf32>
    %cst_111 = arith.constant dense<0.000000e+00> : vector<18x18xf32>
    %259 = tpu.matmul %256, %257, %cst_111 {dimension_numbers = #tpu.dot_dimension_numbers<[1], [1], [0], [0], [0, 0, 1, 0], [], []>} : vector<18x8xf32>, vector<18x8xf32>, vector<18x18xf32> -> vector<18x18xf32>
    %260 = arith.addf %259, %5 : vector<18x18xf32>
    %cst_112 = arith.constant dense<0xFF800000> : vector<18xf32>
    %261 = vector.multi_reduction <maximumf>, %260, %cst_112 [1] : vector<18x18xf32> to vector<18xf32>
    %262 = vector.shape_cast %261 : vector<18xf32> to vector<18x1xf32>
    %263 = vector.broadcast %262 : vector<18x1xf32> to vector<18x18xf32>
    %264 = arith.subf %260, %263 : vector<18x18xf32>
    %265 = math.exp %264 : vector<18x18xf32>
    %cst_113 = arith.constant dense<0.000000e+00> : vector<18xf32>
    %266 = vector.multi_reduction <add>, %265, %cst_113 [1] : vector<18x18xf32> to vector<18xf32>
    %267 = vector.shape_cast %266 : vector<18xf32> to vector<18x1xf32>
    %268 = tpu.reciprocal %267 {approx = true} : vector<18x1xf32> -> vector<18x1xf32>
    %269 = vector.broadcast %268 : vector<18x1xf32> to vector<18x18xf32>
    %270 = arith.mulf %265, %269 : vector<18x18xf32>
    %cst_114 = arith.constant dense<0.000000e+00> : vector<18x8xf32>
    %271 = tpu.matmul %270, %258, %cst_114 {dimension_numbers = #tpu.dot_dimension_numbers<[1], [0], [0], [1], [0, 0, 1, 1], [], []>} : vector<18x18xf32>, vector<18x8xf32>, vector<18x8xf32> -> vector<18x8xf32>
    %272 = vector.extract_strided_slice %197 {offsets = [24, 0], sizes = [8, 32], strides = [1, 1]} : vector<32x32xf32> to vector<8x32xf32>
    %cst_115 = arith.constant dense<0.000000e+00> : vector<18x32xf32>
    %273 = tpu.matmul %271, %272, %cst_115 {dimension_numbers = #tpu.dot_dimension_numbers<[1], [0], [0], [1], [0, 0, 1, 1], [], []>} : vector<18x8xf32>, vector<8x32xf32>, vector<18x32xf32> -> vector<18x32xf32>
    %274 = arith.addf %255, %273 : vector<18x32xf32>
    %275 = arith.addf %168, %274 : vector<18x32xf32>
    %c1_116 = arith.constant 1 : index
    %c0_117 = arith.constant 0 : index
    %c0_118 = arith.constant 0 : index
    %276 = vector.load %arg10[%c1_116, %c0_117, %c0_118] : memref<2x1x32xf32, #tpu.memory_space<vmem>>, vector<1x1x32xf32>
    %277 = vector.shape_cast %276 : vector<1x1x32xf32> to vector<1x32xf32>
    %278 = vector.broadcast %277 : vector<1x32xf32> to vector<18x32xf32>
    %279 = arith.addf %275, %278 : vector<18x32xf32>
    %c1_119 = arith.constant 1 : index
    %c0_120 = arith.constant 0 : index
    %c0_121 = arith.constant 0 : index
    %280 = vector.load %arg11[%c1_119, %c0_120, %c0_121] : memref<2x1x32xf32, #tpu.memory_space<vmem>>, vector<1x1x32xf32>
    %281 = vector.shape_cast %280 : vector<1x1x32xf32> to vector<1x32xf32>
    %c1_122 = arith.constant 1 : index
    %c0_123 = arith.constant 0 : index
    %c0_124 = arith.constant 0 : index
    %282 = vector.load %arg12[%c1_122, %c0_123, %c0_124] : memref<2x1x32xf32, #tpu.memory_space<vmem>>, vector<1x1x32xf32>
    %283 = vector.shape_cast %282 : vector<1x1x32xf32> to vector<1x32xf32>
    %cst_125 = arith.constant dense<0.000000e+00> : vector<18xf32>
    %284 = vector.multi_reduction <add>, %279, %cst_125 [1] : vector<18x32xf32> to vector<18xf32>
    %285 = vector.shape_cast %284 : vector<18xf32> to vector<18x1xf32>
    %cst_126 = arith.constant 3.200000e+01 : f32
    %286 = vector.broadcast %cst_126 : f32 to vector<18x1xf32>
    %287 = arith.divf %285, %286 : vector<18x1xf32>
    %288 = vector.broadcast %287 : vector<18x1xf32> to vector<18x32xf32>
    %289 = arith.subf %279, %288 : vector<18x32xf32>
    %290 = arith.mulf %289, %289 : vector<18x32xf32>
    %cst_127 = arith.constant dense<0.000000e+00> : vector<18xf32>
    %291 = vector.multi_reduction <add>, %290, %cst_127 [1] : vector<18x32xf32> to vector<18xf32>
    %292 = vector.shape_cast %291 : vector<18xf32> to vector<18x1xf32>
    %cst_128 = arith.constant 3.200000e+01 : f32
    %293 = vector.broadcast %cst_128 : f32 to vector<18x1xf32>
    %294 = arith.divf %292, %293 : vector<18x1xf32>
    %cst_129 = arith.constant 9.99999974E-6 : f32
    %295 = vector.broadcast %cst_129 : f32 to vector<18x1xf32>
    %296 = arith.addf %294, %295 : vector<18x1xf32>
    %297 = math.rsqrt %296 : vector<18x1xf32>
    %298 = vector.broadcast %297 : vector<18x1xf32> to vector<18x32xf32>
    %299 = arith.mulf %289, %298 : vector<18x32xf32>
    %300 = vector.broadcast %281 : vector<1x32xf32> to vector<18x32xf32>
    %301 = arith.mulf %299, %300 : vector<18x32xf32>
    %302 = vector.broadcast %283 : vector<1x32xf32> to vector<18x32xf32>
    %303 = arith.addf %301, %302 : vector<18x32xf32>
    %c1_130 = arith.constant 1 : index
    %c0_131 = arith.constant 0 : index
    %c0_132 = arith.constant 0 : index
    %304 = vector.load %arg13[%c1_130, %c0_131, %c0_132] : memref<2x32x64xf32, #tpu.memory_space<vmem>>, vector<1x32x64xf32>
    %305 = vector.shape_cast %304 : vector<1x32x64xf32> to vector<32x64xf32>
    %cst_133 = arith.constant dense<0.000000e+00> : vector<18x64xf32>
    %306 = tpu.matmul %303, %305, %cst_133 {dimension_numbers = #tpu.dot_dimension_numbers<[1], [0], [0], [1], [0, 0, 1, 1], [], []>} : vector<18x32xf32>, vector<32x64xf32>, vector<18x64xf32> -> vector<18x64xf32>
    %c1_134 = arith.constant 1 : index
    %c0_135 = arith.constant 0 : index
    %c0_136 = arith.constant 0 : index
    %307 = vector.load %arg14[%c1_134, %c0_135, %c0_136] : memref<2x1x64xf32, #tpu.memory_space<vmem>>, vector<1x1x64xf32>
    %308 = vector.shape_cast %307 : vector<1x1x64xf32> to vector<1x64xf32>
    %309 = vector.broadcast %308 : vector<1x64xf32> to vector<18x64xf32>
    %310 = arith.addf %306, %309 : vector<18x64xf32>
    %cst_137 = arith.constant 5.000000e-01 : f32
    %311 = vector.broadcast %cst_137 : f32 to vector<18x64xf32>
    %312 = arith.mulf %311, %310 : vector<18x64xf32>
    %cst_138 = arith.constant 4.471500e-02 : f32
    %313 = vector.broadcast %cst_138 : f32 to vector<18x64xf32>
    %314 = arith.mulf %313, %310 : vector<18x64xf32>
    %315 = arith.mulf %314, %310 : vector<18x64xf32>
    %316 = arith.mulf %315, %310 : vector<18x64xf32>
    %317 = arith.addf %310, %316 : vector<18x64xf32>
    %cst_139 = arith.constant 0.797884583 : f32
    %318 = vector.broadcast %cst_139 : f32 to vector<18x64xf32>
    %319 = arith.mulf %318, %317 : vector<18x64xf32>
    %320 = math.tanh %319 : vector<18x64xf32>
    %cst_140 = arith.constant 1.000000e+00 : f32
    %321 = vector.broadcast %cst_140 : f32 to vector<18x64xf32>
    %322 = arith.addf %321, %320 : vector<18x64xf32>
    %323 = arith.mulf %312, %322 : vector<18x64xf32>
    %c1_141 = arith.constant 1 : index
    %c0_142 = arith.constant 0 : index
    %c0_143 = arith.constant 0 : index
    %324 = vector.load %arg15[%c1_141, %c0_142, %c0_143] : memref<2x64x32xf32, #tpu.memory_space<vmem>>, vector<1x64x32xf32>
    %325 = vector.shape_cast %324 : vector<1x64x32xf32> to vector<64x32xf32>
    %cst_144 = arith.constant dense<0.000000e+00> : vector<18x32xf32>
    %326 = tpu.matmul %323, %325, %cst_144 {dimension_numbers = #tpu.dot_dimension_numbers<[1], [0], [0], [1], [0, 0, 1, 1], [], []>} : vector<18x64xf32>, vector<64x32xf32>, vector<18x32xf32> -> vector<18x32xf32>
    %c1_145 = arith.constant 1 : index
    %c0_146 = arith.constant 0 : index
    %c0_147 = arith.constant 0 : index
    %327 = vector.load %arg16[%c1_145, %c0_146, %c0_147] : memref<2x1x32xf32, #tpu.memory_space<vmem>>, vector<1x1x32xf32>
    %328 = vector.shape_cast %327 : vector<1x1x32xf32> to vector<1x32xf32>
    %329 = vector.broadcast %328 : vector<1x32xf32> to vector<18x32xf32>
    %330 = arith.addf %326, %329 : vector<18x32xf32>
    %331 = arith.addf %279, %330 : vector<18x32xf32>
    %c0_148 = arith.constant 0 : index
    %c0_149 = arith.constant 0 : index
    %332 = vector.load %arg4[%c0_148, %c0_149] : memref<16x18xf32, #tpu.memory_space<vmem>>, vector<16x18xf32>
    %cst_150 = arith.constant dense<0.000000e+00> : vector<16x32xf32>
    %333 = tpu.matmul %332, %331, %cst_150 {dimension_numbers = #tpu.dot_dimension_numbers<[1], [0], [0], [1], [0, 0, 1, 1], [], []>} : vector<16x18xf32>, vector<18x32xf32>, vector<16x32xf32> -> vector<16x32xf32>
    %cst_151 = arith.constant 0.000000e+00 : f32
    %334 = vector.broadcast %cst_151 : f32 to vector<2x128xf32>
    %c0_152 = arith.constant 0 : index
    %c0_153 = arith.constant 0 : index
    %335 = vector.load %arg18[%c0_152, %c0_153] : memref<1x128xf32, #tpu.memory_space<vmem>>, vector<1x128xf32>
    %336 = vector.broadcast %335 : vector<1x128xf32> to vector<2x128xf32>
    %337 = arith.addf %334, %336 : vector<2x128xf32>
    %338 = vector.extract_strided_slice %333 {offsets = [0, 0], sizes = [2, 32], strides = [1, 1]} : vector<16x32xf32> to vector<2x32xf32>
    %c0_154 = arith.constant 0 : index
    %c0_155 = arith.constant 0 : index
    %c0_156 = arith.constant 0 : index
    %339 = vector.load %arg17[%c0_154, %c0_155, %c0_156] : memref<8x32x128xf32, #tpu.memory_space<vmem>>, vector<1x32x128xf32>
    %340 = vector.shape_cast %339 : vector<1x32x128xf32> to vector<32x128xf32>
    %cst_157 = arith.constant dense<0.000000e+00> : vector<2x128xf32>
    %341 = tpu.matmul %338, %340, %cst_157 {dimension_numbers = #tpu.dot_dimension_numbers<[1], [0], [0], [1], [0, 0, 1, 1], [], []>} : vector<2x32xf32>, vector<32x128xf32>, vector<2x128xf32> -> vector<2x128xf32>
    %342 = arith.addf %337, %341 : vector<2x128xf32>
    %343 = vector.extract_strided_slice %333 {offsets = [2, 0], sizes = [2, 32], strides = [1, 1]} : vector<16x32xf32> to vector<2x32xf32>
    %c1_158 = arith.constant 1 : index
    %c0_159 = arith.constant 0 : index
    %c0_160 = arith.constant 0 : index
    %344 = vector.load %arg17[%c1_158, %c0_159, %c0_160] : memref<8x32x128xf32, #tpu.memory_space<vmem>>, vector<1x32x128xf32>
    %345 = vector.shape_cast %344 : vector<1x32x128xf32> to vector<32x128xf32>
    %cst_161 = arith.constant dense<0.000000e+00> : vector<2x128xf32>
    %346 = tpu.matmul %343, %345, %cst_161 {dimension_numbers = #tpu.dot_dimension_numbers<[1], [0], [0], [1], [0, 0, 1, 1], [], []>} : vector<2x32xf32>, vector<32x128xf32>, vector<2x128xf32> -> vector<2x128xf32>
    %347 = arith.addf %342, %346 : vector<2x128xf32>
    %348 = vector.extract_strided_slice %333 {offsets = [4, 0], sizes = [2, 32], strides = [1, 1]} : vector<16x32xf32> to vector<2x32xf32>
    %c2 = arith.constant 2 : index
    %c0_162 = arith.constant 0 : index
    %c0_163 = arith.constant 0 : index
    %349 = vector.load %arg17[%c2, %c0_162, %c0_163] : memref<8x32x128xf32, #tpu.memory_space<vmem>>, vector<1x32x128xf32>
    %350 = vector.shape_cast %349 : vector<1x32x128xf32> to vector<32x128xf32>
    %cst_164 = arith.constant dense<0.000000e+00> : vector<2x128xf32>
    %351 = tpu.matmul %348, %350, %cst_164 {dimension_numbers = #tpu.dot_dimension_numbers<[1], [0], [0], [1], [0, 0, 1, 1], [], []>} : vector<2x32xf32>, vector<32x128xf32>, vector<2x128xf32> -> vector<2x128xf32>
    %352 = arith.addf %347, %351 : vector<2x128xf32>
    %353 = vector.extract_strided_slice %333 {offsets = [6, 0], sizes = [2, 32], strides = [1, 1]} : vector<16x32xf32> to vector<2x32xf32>
    %c3 = arith.constant 3 : index
    %c0_165 = arith.constant 0 : index
    %c0_166 = arith.constant 0 : index
    %354 = vector.load %arg17[%c3, %c0_165, %c0_166] : memref<8x32x128xf32, #tpu.memory_space<vmem>>, vector<1x32x128xf32>
    %355 = vector.shape_cast %354 : vector<1x32x128xf32> to vector<32x128xf32>
    %cst_167 = arith.constant dense<0.000000e+00> : vector<2x128xf32>
    %356 = tpu.matmul %353, %355, %cst_167 {dimension_numbers = #tpu.dot_dimension_numbers<[1], [0], [0], [1], [0, 0, 1, 1], [], []>} : vector<2x32xf32>, vector<32x128xf32>, vector<2x128xf32> -> vector<2x128xf32>
    %357 = arith.addf %352, %356 : vector<2x128xf32>
    %358 = vector.extract_strided_slice %333 {offsets = [8, 0], sizes = [2, 32], strides = [1, 1]} : vector<16x32xf32> to vector<2x32xf32>
    %c4 = arith.constant 4 : index
    %c0_168 = arith.constant 0 : index
    %c0_169 = arith.constant 0 : index
    %359 = vector.load %arg17[%c4, %c0_168, %c0_169] : memref<8x32x128xf32, #tpu.memory_space<vmem>>, vector<1x32x128xf32>
    %360 = vector.shape_cast %359 : vector<1x32x128xf32> to vector<32x128xf32>
    %cst_170 = arith.constant dense<0.000000e+00> : vector<2x128xf32>
    %361 = tpu.matmul %358, %360, %cst_170 {dimension_numbers = #tpu.dot_dimension_numbers<[1], [0], [0], [1], [0, 0, 1, 1], [], []>} : vector<2x32xf32>, vector<32x128xf32>, vector<2x128xf32> -> vector<2x128xf32>
    %362 = arith.addf %357, %361 : vector<2x128xf32>
    %363 = vector.extract_strided_slice %333 {offsets = [10, 0], sizes = [2, 32], strides = [1, 1]} : vector<16x32xf32> to vector<2x32xf32>
    %c5 = arith.constant 5 : index
    %c0_171 = arith.constant 0 : index
    %c0_172 = arith.constant 0 : index
    %364 = vector.load %arg17[%c5, %c0_171, %c0_172] : memref<8x32x128xf32, #tpu.memory_space<vmem>>, vector<1x32x128xf32>
    %365 = vector.shape_cast %364 : vector<1x32x128xf32> to vector<32x128xf32>
    %cst_173 = arith.constant dense<0.000000e+00> : vector<2x128xf32>
    %366 = tpu.matmul %363, %365, %cst_173 {dimension_numbers = #tpu.dot_dimension_numbers<[1], [0], [0], [1], [0, 0, 1, 1], [], []>} : vector<2x32xf32>, vector<32x128xf32>, vector<2x128xf32> -> vector<2x128xf32>
    %367 = arith.addf %362, %366 : vector<2x128xf32>
    %368 = vector.extract_strided_slice %333 {offsets = [12, 0], sizes = [2, 32], strides = [1, 1]} : vector<16x32xf32> to vector<2x32xf32>
    %c6 = arith.constant 6 : index
    %c0_174 = arith.constant 0 : index
    %c0_175 = arith.constant 0 : index
    %369 = vector.load %arg17[%c6, %c0_174, %c0_175] : memref<8x32x128xf32, #tpu.memory_space<vmem>>, vector<1x32x128xf32>
    %370 = vector.shape_cast %369 : vector<1x32x128xf32> to vector<32x128xf32>
    %cst_176 = arith.constant dense<0.000000e+00> : vector<2x128xf32>
    %371 = tpu.matmul %368, %370, %cst_176 {dimension_numbers = #tpu.dot_dimension_numbers<[1], [0], [0], [1], [0, 0, 1, 1], [], []>} : vector<2x32xf32>, vector<32x128xf32>, vector<2x128xf32> -> vector<2x128xf32>
    %372 = arith.addf %367, %371 : vector<2x128xf32>
    %373 = vector.extract_strided_slice %333 {offsets = [14, 0], sizes = [2, 32], strides = [1, 1]} : vector<16x32xf32> to vector<2x32xf32>
    %c7 = arith.constant 7 : index
    %c0_177 = arith.constant 0 : index
    %c0_178 = arith.constant 0 : index
    %374 = vector.load %arg17[%c7, %c0_177, %c0_178] : memref<8x32x128xf32, #tpu.memory_space<vmem>>, vector<1x32x128xf32>
    %375 = vector.shape_cast %374 : vector<1x32x128xf32> to vector<32x128xf32>
    %cst_179 = arith.constant dense<0.000000e+00> : vector<2x128xf32>
    %376 = tpu.matmul %373, %375, %cst_179 {dimension_numbers = #tpu.dot_dimension_numbers<[1], [0], [0], [1], [0, 0, 1, 1], [], []>} : vector<2x32xf32>, vector<32x128xf32>, vector<2x128xf32> -> vector<2x128xf32>
    %377 = arith.addf %372, %376 : vector<2x128xf32>
    %c0_180 = arith.constant 0 : index
    %c0_181 = arith.constant 0 : index
    %378 = vector.load %arg19[%c0_180, %c0_181] : memref<2x128xf32, #tpu.memory_space<vmem>>, vector<2x128xf32>
    tpu.vector_store %arg19[%c0_180, %c0_181], %377 {strides = array<i32>} : memref<2x128xf32, #tpu.memory_space<vmem>>, vector<2x128xf32>,
    return
  }
  func.func @transform_0(%arg0: i32) -> (i32, i32) {
    %c0_i32 = arith.constant 0 : i32
    %c0_i32_0 = arith.constant 0 : i32
    %c0_i32_1 = arith.constant 0 : i32
    return %c0_i32, %c0_i32_0 : i32, i32
  }
  func.func @transform_1(%arg0: i32) -> (i32, i32) {
    %c0_i32 = arith.constant 0 : i32
    %c0_i32_0 = arith.constant 0 : i32
    %c0_i32_1 = arith.constant 0 : i32
    return %c0_i32, %c0_i32_0 : i32, i32
  }
  func.func @transform_2(%arg0: i32) -> (i32, i32) {
    %c0_i32 = arith.constant 0 : i32
    %c0_i32_0 = arith.constant 0 : i32
    %c0_i32_1 = arith.constant 0 : i32
    return %c0_i32, %c0_i32_0 : i32, i32
  }
  func.func @transform_3(%arg0: i32) -> (i32, i32) {
    %c0_i32 = arith.constant 0 : i32
    %c0_i32_0 = arith.constant 0 : i32
    %c0_i32_1 = arith.constant 0 : i32
    return %c0_i32, %c0_i32_0 : i32, i32
  }
  func.func @transform_4(%arg0: i32) -> (i32, i32) {
    %c0_i32 = arith.constant 0 : i32
    %c0_i32_0 = arith.constant 0 : i32
    %c0_i32_1 = arith.constant 0 : i32
    return %c0_i32, %c0_i32_0 : i32, i32
  }
  func.func @transform_5(%arg0: i32) -> (i32, i32, i32) {
    %c0_i32 = arith.constant 0 : i32
    %c0_i32_0 = arith.constant 0 : i32
    %c0_i32_1 = arith.constant 0 : i32
    %c0_i32_2 = arith.constant 0 : i32
    return %c0_i32, %c0_i32_0, %c0_i32_1 : i32, i32, i32
  }
  func.func @transform_6(%arg0: i32) -> (i32, i32, i32) {
    %c0_i32 = arith.constant 0 : i32
    %c0_i32_0 = arith.constant 0 : i32
    %c0_i32_1 = arith.constant 0 : i32
    %c0_i32_2 = arith.constant 0 : i32
    return %c0_i32, %c0_i32_0, %c0_i32_1 : i32, i32, i32
  }
  func.func @transform_7(%arg0: i32) -> (i32, i32, i32) {
    %c0_i32 = arith.constant 0 : i32
    %c0_i32_0 = arith.constant 0 : i32
    %c0_i32_1 = arith.constant 0 : i32
    %c0_i32_2 = arith.constant 0 : i32
    return %c0_i32, %c0_i32_0, %c0_i32_1 : i32, i32, i32
  }
  func.func @transform_8(%arg0: i32) -> (i32, i32, i32) {
    %c0_i32 = arith.constant 0 : i32
    %c0_i32_0 = arith.constant 0 : i32
    %c0_i32_1 = arith.constant 0 : i32
    %c0_i32_2 = arith.constant 0 : i32
    return %c0_i32, %c0_i32_0, %c0_i32_1 : i32, i32, i32
  }
  func.func @transform_9(%arg0: i32) -> (i32, i32, i32) {
    %c0_i32 = arith.constant 0 : i32
    %c0_i32_0 = arith.constant 0 : i32
    %c0_i32_1 = arith.constant 0 : i32
    %c0_i32_2 = arith.constant 0 : i32
    return %c0_i32, %c0_i32_0, %c0_i32_1 : i32, i32, i32
  }
  func.func @transform_10(%arg0: i32) -> (i32, i32, i32) {
    %c0_i32 = arith.constant 0 : i32
    %c0_i32_0 = arith.constant 0 : i32
    %c0_i32_1 = arith.constant 0 : i32
    %c0_i32_2 = arith.constant 0 : i32
    return %c0_i32, %c0_i32_0, %c0_i32_1 : i32, i32, i32
  }
  func.func @transform_11(%arg0: i32) -> (i32, i32, i32) {
    %c0_i32 = arith.constant 0 : i32
    %c0_i32_0 = arith.constant 0 : i32
    %c0_i32_1 = arith.constant 0 : i32
    %c0_i32_2 = arith.constant 0 : i32
    return %c0_i32, %c0_i32_0, %c0_i32_1 : i32, i32, i32
  }
  func.func @transform_12(%arg0: i32) -> (i32, i32, i32) {
    %c0_i32 = arith.constant 0 : i32
    %c0_i32_0 = arith.constant 0 : i32
    %c0_i32_1 = arith.constant 0 : i32
    %c0_i32_2 = arith.constant 0 : i32
    return %c0_i32, %c0_i32_0, %c0_i32_1 : i32, i32, i32
  }
  func.func @transform_13(%arg0: i32) -> (i32, i32, i32) {
    %c0_i32 = arith.constant 0 : i32
    %c0_i32_0 = arith.constant 0 : i32
    %c0_i32_1 = arith.constant 0 : i32
    %c0_i32_2 = arith.constant 0 : i32
    return %c0_i32, %c0_i32_0, %c0_i32_1 : i32, i32, i32
  }
  func.func @transform_14(%arg0: i32) -> (i32, i32, i32) {
    %c0_i32 = arith.constant 0 : i32
    %c0_i32_0 = arith.constant 0 : i32
    %c0_i32_1 = arith.constant 0 : i32
    %c0_i32_2 = arith.constant 0 : i32
    return %c0_i32, %c0_i32_0, %c0_i32_1 : i32, i32, i32
  }
  func.func @transform_15(%arg0: i32) -> (i32, i32, i32) {
    %c0_i32 = arith.constant 0 : i32
    %c0_i32_0 = arith.constant 0 : i32
    %c0_i32_1 = arith.constant 0 : i32
    %c0_i32_2 = arith.constant 0 : i32
    return %c0_i32, %c0_i32_0, %c0_i32_1 : i32, i32, i32
  }
  func.func @transform_16(%arg0: i32) -> (i32, i32, i32) {
    %c0_i32 = arith.constant 0 : i32
    %c0_i32_0 = arith.constant 0 : i32
    %c0_i32_1 = arith.constant 0 : i32
    %c0_i32_2 = arith.constant 0 : i32
    return %c0_i32, %c0_i32_0, %c0_i32_1 : i32, i32, i32
  }
  func.func @transform_17(%arg0: i32) -> (i32, i32) {
    %c0_i32 = arith.constant 0 : i32
    %c0_i32_0 = arith.constant 0 : i32
    %c0_i32_1 = arith.constant 0 : i32
    return %c0_i32, %c0_i32_0 : i32, i32
  }
  func.func @transform_18(%arg0: i32) -> (i32, i32) {
    %c0_i32 = arith.constant 0 : i32
    %c0_i32_0 = arith.constant 0 : i32
    %c0_i32_1 = arith.constant 0 : i32
    return %c0_i32, %c0_i32_0 : i32, i32
  }
}

</mosaic_0001>

<llo_original>
// kernel: transformer_decoder_3d.1
$region0: #{transformer_decoder_3d.1}
  #allocation0 [shape = 'u32[]', space=smem, size = 0x4, offset = 0x4, fixed_abs, tag = 'smem constant byte address 0x4 - core index']
  #allocation1 [shape = 'u32[72,128]{1,0:T(1,128)}', space=vmem, size = 0x9000, scoped, tag = 'internal scratch']
  %s0 = inlined_call_operand.vmem [shape: f32[16,32], index: 0, kind: input, shape index: {}]
  %s1 = inlined_call_operand.vmem [shape: f32[18,16], index: 1, kind: input, shape index: {}]
  %s2 = inlined_call_operand.vmem [shape: f32[18,32], index: 2, kind: input, shape index: {}]
  %s3 = inlined_call_operand.hbm [shape: f32[16,18], index: 3, kind: input, shape index: {}]
  %s4 = inlined_call_operand.hbm [shape: f32[18,18], index: 4, kind: input, shape index: {}]
  %s5 = inlined_call_operand.vmem [shape: f32[2,1,32], index: 5, kind: input, shape index: {}]
  %s6 = inlined_call_operand.vmem [shape: f32[2,1,32], index: 6, kind: input, shape index: {}]
  %s7 = inlined_call_operand.vmem [shape: f32[2,32,96], index: 7, kind: input, shape index: {}]
  %s8 = inlined_call_operand.vmem [shape: f32[2,32,32], index: 8, kind: input, shape index: {}]
  %s9 = inlined_call_operand.hbm [shape: f32[2,1,32], index: 9, kind: input, shape index: {}]
  %s10 = inlined_call_operand.vmem [shape: f32[2,1,32], index: 10, kind: input, shape index: {}]
  %s11 = inlined_call_operand.vmem [shape: f32[2,1,32], index: 11, kind: input, shape index: {}]
  %s12 = inlined_call_operand.vmem [shape: f32[2,32,64], index: 12, kind: input, shape index: {}]
  %s13 = inlined_call_operand.hbm [shape: f32[2,1,64], index: 13, kind: input, shape index: {}]
  %s14 = inlined_call_operand.vmem [shape: f32[2,64,32], index: 14, kind: input, shape index: {}]
  %s15 = inlined_call_operand.hbm [shape: f32[2,1,32], index: 15, kind: input, shape index: {}]
  %s16 = inlined_call_operand.hbm [shape: f32[8,32,128], index: 16, kind: input, shape index: {}]
  %s17 = inlined_call_operand.hbm [shape: f32[1,128], index: 17, kind: input, shape index: {}]
  %s18 = inlined_call_operand.vmem [shape: f32[2,128], index: 18, kind: output, shape index: {}]
  %s19 = sld [smem:[#allocation0]]
  $region110: #{transformer_decoder_3d.1} parent=0
    _
  %s21 = ssub.s32 1, %s19
  %s22 = scalar_select 0, %s21, %s19
  $region1: #{transformer_decoder_3d.1} parent=0
    #allocation2 [shape = 'u8[8192]{0}', space=vmem, size = 0x2000, scoped, tag = 'input window, operand 3, single buffered']
    #allocation3 [shape = 's32[1]{0}', space=sflag, size = 0x4, scoped, tag = 'scoped memory for transformer_decoder_3d.1']
    #allocation4 [shape = 'u8[12288]{0}', space=vmem, size = 0x3000, scoped, tag = 'input window, operand 4, single buffered']
    #allocation5 [shape = 's32[1]{0}', space=sflag, size = 0x4, scoped, tag = 'scoped memory for transformer_decoder_3d.1']
    #allocation6 [shape = 'u8[1024]{0}', space=vmem, size = 0x400, scoped, tag = 'input window, operand 9, single buffered']
    #allocation7 [shape = 'u8[1024]{0}', space=vmem, size = 0x400, scoped, tag = 'input window, operand 13, single buffered']
    #allocation8 [shape = 's32[1]{0}', space=sflag, size = 0x4, scoped, tag = 'scoped memory for transformer_decoder_3d.1']
    #allocation9 [shape = 'u8[1024]{0}', space=vmem, size = 0x400, scoped, tag = 'input window, operand 15, single buffered']
    #allocation10 [shape = 'u8[131072]{0}', space=vmem, size = 0x20000, scoped, tag = 'input window, operand 16, single buffered']
    #allocation11 [shape = 's32[1]{0}', space=sflag, size = 0x4, scoped, tag = 'scoped memory for transformer_decoder_3d.1']
    #allocation12 [shape = 'u8[512]{0}', space=vmem, size = 0x400, scoped, tag = 'input window, operand 17, single buffered']
    %23 = vsyncpa [#allocation3], 0
    %24 = vsyncpa [#allocation5], 0
    %25 = vsyncpa [#allocation8], 0
    %26 = vsyncpa [#allocation11], 0
    // Predicated region
    $region2: #{transformer_decoder_3d.1} parent=1 // pred_check
      _
    $region3: #{transformer_decoder_3d.1} parent=1 // pred_check_branch
      %28 = sbr.rel (0) target = $region5
    $region4: #{transformer_decoder_3d.1} parent=1 // pred_region
      _
    $region5: #{transformer_decoder_3d.1} parent=1 // pred_fallthru
      _
    // Predicated region
    $region6: #{transformer_decoder_3d.1} parent=1 // pred_check
      _
    $region7: #{transformer_decoder_3d.1} parent=1 // pred_check_branch
      %30 = sbr.rel (0) target = $region9
    $region8: #{transformer_decoder_3d.1} parent=1 // pred_region
      _
    $region9: #{transformer_decoder_3d.1} parent=1 // pred_fallthru
      _
    // Predicated region
    $region10: #{transformer_decoder_3d.1} parent=1 // pred_check
      _
    $region11: #{transformer_decoder_3d.1} parent=1 // pred_check_branch
      %32 = sbr.rel (0) target = $region13
    $region12: #{transformer_decoder_3d.1} parent=1 // pred_region
      _
    $region13: #{transformer_decoder_3d.1} parent=1 // pred_fallthru
      _
    // Predicated region
    $region14: #{transformer_decoder_3d.1} parent=1 // pred_check
      _
    $region15: #{transformer_decoder_3d.1} parent=1 // pred_check_branch
      %34 = sbr.rel (0) target = $region17
    $region16: #{transformer_decoder_3d.1} parent=1 // pred_region
      %36 = vsyncadd [#allocation3], 0
      %s37 = sshll.u32 %s3, 4
      %s38 = int_to_ptr.hbm [resolvable:$true] %s37
      %s39 = sshll.u32 [#allocation2], 4
      %s40 = int_to_ptr.vmem [resolvable:$true] %s39
      %45 = dma.hbm_to_vmem [thread:$0]  %s38, 256, %s40, [#allocation3], 128, 128, 8
    $region17: #{transformer_decoder_3d.1} parent=1 // pred_fallthru
      _
    // Predicated region
    $region18: #{transformer_decoder_3d.1} parent=1 // pred_check
      _
    $region19: #{transformer_decoder_3d.1} parent=1 // pred_check_branch
      %47 = sbr.rel (0) target = $region21
    $region20: #{transformer_decoder_3d.1} parent=1 // pred_region
      %49 = vsyncadd [#allocation5], 0
      %s50 = sshll.u32 %s4, 4
      %s51 = int_to_ptr.hbm [resolvable:$true] %s50
      %s52 = sshll.u32 [#allocation4], 4
      %s53 = int_to_ptr.vmem [resolvable:$true] %s52
      %58 = dma.hbm_to_vmem [thread:$0]  %s51, 384, %s53, [#allocation5], 128, 128, 8
    $region21: #{transformer_decoder_3d.1} parent=1 // pred_fallthru
      _
    // Predicated region
    $region22: #{transformer_decoder_3d.1} parent=1 // pred_check
      _
    $region23: #{transformer_decoder_3d.1} parent=1 // pred_check_branch
      %60 = sbr.rel (0) target = $region25
    $region24: #{transformer_decoder_3d.1} parent=1 // pred_region
      _
    $region25: #{transformer_decoder_3d.1} parent=1 // pred_fallthru
      _
    // Predicated region
    $region26: #{transformer_decoder_3d.1} parent=1 // pred_check
      _
    $region27: #{transformer_decoder_3d.1} parent=1 // pred_check_branch
      %62 = sbr.rel (0) target = $region29
    $region28: #{transformer_decoder_3d.1} parent=1 // pred_region
      _
    $region29: #{transformer_decoder_3d.1} parent=1 // pred_fallthru
      _
    // Predicated region
    $region30: #{transformer_decoder_3d.1} parent=1 // pred_check
      _
    $region31: #{transformer_decoder_3d.1} parent=1 // pred_check_branch
      %64 = sbr.rel (0) target = $region33
    $region32: #{transformer_decoder_3d.1} parent=1 // pred_region
      _
    $region33: #{transformer_decoder_3d.1} parent=1 // pred_fallthru
      _
    // Predicated region
    $region34: #{transformer_decoder_3d.1} parent=1 // pred_check
      _
    $region35: #{transformer_decoder_3d.1} parent=1 // pred_check_branch
      %66 = sbr.rel (0) target = $region37
    $region36: #{transformer_decoder_3d.1} parent=1 // pred_region
      _
    $region37: #{transformer_decoder_3d.1} parent=1 // pred_fallthru
      _
    // Predicated region
    $region38: #{transformer_decoder_3d.1} parent=1 // pred_check
      _
    $region39: #{transformer_decoder_3d.1} parent=1 // pred_check_branch
      %68 = sbr.rel (0) target = $region41
    $region40: #{transformer_decoder_3d.1} parent=1 // pred_region
      %70 = vsyncadd [#allocation5], 0
      %s71 = sshll.u32 %s9, 4
      %s72 = int_to_ptr.hbm [resolvable:$true] %s71
      %s73 = sshll.u32 [#allocation6], 4
      %s74 = int_to_ptr.vmem [resolvable:$true] %s73
      %79 = dma.hbm_to_vmem [thread:$0]  %s72, 32, %s74, [#allocation5], 16, 16, 1
    $region41: #{transformer_decoder_3d.1} parent=1 // pred_fallthru
      _
    // Predicated region
    $region42: #{transformer_decoder_3d.1} parent=1 // pred_check
      _
    $region43: #{transformer_decoder_3d.1} parent=1 // pred_check_branch
      %81 = sbr.rel (0) target = $region45
    $region44: #{transformer_decoder_3d.1} parent=1 // pred_region
      _
    $region45: #{transformer_decoder_3d.1} parent=1 // pred_fallthru
      _
    // Predicated region
    $region46: #{transformer_decoder_3d.1} parent=1 // pred_check
      _
    $region47: #{transformer_decoder_3d.1} parent=1 // pred_check_branch
      %83 = sbr.rel (0) target = $region49
    $region48: #{transformer_decoder_3d.1} parent=1 // pred_region
      _
    $region49: #{transformer_decoder_3d.1} parent=1 // pred_fallthru
      _
    // Predicated region
    $region50: #{transformer_decoder_3d.1} parent=1 // pred_check
      _
    $region51: #{transformer_decoder_3d.1} parent=1 // pred_check_branch
      %85 = sbr.rel (0) target = $region53
    $region52: #{transformer_decoder_3d.1} parent=1 // pred_region
      _
    $region53: #{transformer_decoder_3d.1} parent=1 // pred_fallthru
      _
    // Predicated region
    $region54: #{transformer_decoder_3d.1} parent=1 // pred_check
      _
    $region55: #{transformer_decoder_3d.1} parent=1 // pred_check_branch
      %87 = sbr.rel (0) target = $region57
    $region56: #{transformer_decoder_3d.1} parent=1 // pred_region
      %89 = vsyncadd [#allocation8], 0
      %s90 = sshll.u32 %s13, 4
      %s91 = int_to_ptr.hbm [resolvable:$true] %s90
      %s92 = sshll.u32 [#allocation7], 4
      %s93 = int_to_ptr.vmem [resolvable:$true] %s92
      %98 = dma.hbm_to_vmem [thread:$0]  %s91, 32, %s93, [#allocation8], 16, 16, 1
    $region57: #{transformer_decoder_3d.1} parent=1 // pred_fallthru
      _
    // Predicated region
    $region58: #{transformer_decoder_3d.1} parent=1 // pred_check
      _
    $region59: #{transformer_decoder_3d.1} parent=1 // pred_check_branch
      %100 = sbr.rel (0) target = $region61
    $region60: #{transformer_decoder_3d.1} parent=1 // pred_region
      _
    $region61: #{transformer_decoder_3d.1} parent=1 // pred_fallthru
      _
    // Predicated region
    $region62: #{transformer_decoder_3d.1} parent=1 // pred_check
      _
    $region63: #{transformer_decoder_3d.1} parent=1 // pred_check_branch
      %102 = sbr.rel (0) target = $region65
    $region64: #{transformer_decoder_3d.1} parent=1 // pred_region
      %104 = vsyncadd [#allocation8], 0
      %s105 = sshll.u32 %s15, 4
      %s106 = int_to_ptr.hbm [resolvable:$true] %s105
      %s107 = sshll.u32 [#allocation9], 4
      %s108 = int_to_ptr.vmem [resolvable:$true] %s107
      %113 = dma.hbm_to_vmem [thread:$0]  %s106, 32, %s108, [#allocation8], 16, 16, 1
    $region65: #{transformer_decoder_3d.1} parent=1 // pred_fallthru
      _
    // Predicated region
    $region66: #{transformer_decoder_3d.1} parent=1 // pred_check
      _
    $region67: #{transformer_decoder_3d.1} parent=1 // pred_check_branch
      %115 = sbr.rel (0) target = $region69
    $region68: #{transformer_decoder_3d.1} parent=1 // pred_region
      %117 = vsyncadd [#allocation11], 0
      %s118 = sshll.u32 %s16, 4
      %s119 = int_to_ptr.hbm [resolvable:$true] %s118
      %s120 = sshll.u32 [#allocation10], 4
      %s121 = int_to_ptr.vmem [resolvable:$true] %s120
      %126 = dma.hbm_to_vmem [thread:$0]  %s119, 4096, %s121, [#allocation11], 128, 128, 8
    $region69: #{transformer_decoder_3d.1} parent=1 // pred_fallthru
      _
    // Predicated region
    $region70: #{transformer_decoder_3d.1} parent=1 // pred_check
      _
    $region71: #{transformer_decoder_3d.1} parent=1 // pred_check_branch
      %128 = sbr.rel (0) target = $region73
    $region72: #{transformer_decoder_3d.1} parent=1 // pred_region
      %130 = vsyncadd [#allocation11], 0
      %s132 = sshll.u32 %s17, 4
      %s133 = int_to_ptr.hbm [resolvable:$true] %s132
      %s134 = sshll.u32 [#allocation12], 4
      %s135 = int_to_ptr.vmem [resolvable:$true] %s134
      %137 = dma.hbm_to_vmem [thread:$0]  %s133, 16, %s135, [#allocation11]
    $region73: #{transformer_decoder_3d.1} parent=1 // pred_fallthru
      _
    // Predicated region
    $region74: #{transformer_decoder_3d.1} parent=1 // pred_check
      _
    $region75: #{transformer_decoder_3d.1} parent=1 // pred_check_branch
      %139 = sbr.rel (0) target = $region77
    $region76: #{transformer_decoder_3d.1} parent=1 // pred_region
      %141 = dma.done [#allocation3], 256
    $region77: #{transformer_decoder_3d.1} parent=1 // pred_fallthru
      _
    // Predicated region
    $region78: #{transformer_decoder_3d.1} parent=1 // pred_check
      _
    $region79: #{transformer_decoder_3d.1} parent=1 // pred_check_branch
      %143 = sbr.rel (0) target = $region81
    $region80: #{transformer_decoder_3d.1} parent=1 // pred_region
      %145 = dma.done [#allocation5], 384
    $region81: #{transformer_decoder_3d.1} parent=1 // pred_fallthru
      _
    // Predicated region
    $region82: #{transformer_decoder_3d.1} parent=1 // pred_check
      _
    $region83: #{transformer_decoder_3d.1} parent=1 // pred_check_branch
      %147 = sbr.rel (0) target = $region85
    $region84: #{transformer_decoder_3d.1} parent=1 // pred_region
      %149 = dma.done [#allocation5], 32
    $region85: #{transformer_decoder_3d.1} parent=1 // pred_fallthru
      _
    // Predicated region
    $region86: #{transformer_decoder_3d.1} parent=1 // pred_check
      _
    $region87: #{transformer_decoder_3d.1} parent=1 // pred_check_branch
      %151 = sbr.rel (0) target = $region89
    $region88: #{transformer_decoder_3d.1} parent=1 // pred_region
      %153 = dma.done [#allocation8], 32
    $region89: #{transformer_decoder_3d.1} parent=1 // pred_fallthru
      _
    // Predicated region
    $region90: #{transformer_decoder_3d.1} parent=1 // pred_check
      _
    $region91: #{transformer_decoder_3d.1} parent=1 // pred_check_branch
      %155 = sbr.rel (0) target = $region93
    $region92: #{transformer_decoder_3d.1} parent=1 // pred_region
      %157 = dma.done [#allocation8], 32
    $region93: #{transformer_decoder_3d.1} parent=1 // pred_fallthru
      _
    // Predicated region
    $region94: #{transformer_decoder_3d.1} parent=1 // pred_check
      _
    $region95: #{transformer_decoder_3d.1} parent=1 // pred_check_branch
      %159 = sbr.rel (0) target = $region97
    $region96: #{transformer_decoder_3d.1} parent=1 // pred_region
      %161 = dma.done [#allocation11], 4096
    $region97: #{transformer_decoder_3d.1} parent=1 // pred_fallthru
      _
    // Predicated region
    $region98: #{transformer_decoder_3d.1} parent=1 // pred_check
      _
    $region99: #{transformer_decoder_3d.1} parent=1 // pred_check_branch
      %163 = sbr.rel (0) target = $region101
    $region100: #{transformer_decoder_3d.1} parent=1 // pred_region
      %165 = dma.done [#allocation11], 16
    $region101: #{transformer_decoder_3d.1} parent=1 // pred_fallthru
      _
    %v166 = vld [vmem:[%s1] sm:$0xff]
    %v167 = vld [vmem:[%s1 + $0x8] sm:$0xff]
    %v168 = vld [vmem:[%s1 + $0x10] sm:$0x3]
    %v169 = vld [vmem:[%s0] sm:$0xff]
    %v170 = vld [vmem:[%s0 + $0x8] sm:$0xff]
    %v171 = vld [vmem:[%s2] sm:$0xff]
    %v172 = vld [vmem:[%s2 + $0x8] sm:$0xff]
    %v173 = vld [vmem:[%s2 + $0x10] sm:$0x3]
    %vm174 = vcmask 130048
    %v176 = vsel %vm174, %v166, 0
    %v179 = vsel %vm174, %v167, 0
    %v182 = vsel %vm174, %v168, 0
    %184 = vmatpush.msra.mxu0 0.0
    %185 = vmatpush.msra.mxu0 0.0
    %186 = vmatpush.msra.mxu0 0.0
    %187 = vmatpush.msra.mxu0 0.0
    %188 = vmatpush.msra.mxu0 0.0
    %189 = vmatpush.msra.mxu0 0.0
    %190 = vmatpush.msra.mxu0 0.0
    %191 = vmatpush.msra.mxu0 0.0
    %192 = vmatpush.msra.mxu0 0.0
    %193 = vmatpush.msra.mxu0 0.0
    %194 = vmatpush.msra.mxu0 0.0
    %195 = vmatpush.msra.mxu0 0.0
    %196 = vmatpush.msra.mxu0 0.0
    %197 = vmatpush.msra.mxu0 0.0
    %198 = vmatpush.msra.mxu0 %v170
    %199 = vmatpush.msra.mxu0 %v169
    %200 = vmatmul.f32.gmra.mxu0 %v176
    %v201 = vpop.f32.mrf.mxu0
    %v202 = vadd.f32 %v171, %v201
    %203 = vmatmul.f32.gmra.mxu0 %v179
    %v204 = vpop.f32.mrf.mxu0
    %v205 = vadd.f32 %v172, %v204
    %206 = vmatmul.f32.gmra.mxu0 %v182
    %v207 = vpop.f32.mrf.mxu0
    %v208 = vadd.f32 %v173, %v207
    %209 = vdwg.mxu0
    %v210 = vld [vmem:[#allocation4] sm:$0xff]
    %v211 = vld [vmem:[#allocation4 + $0x8] sm:$0xff]
    %v212 = vld [vmem:[#allocation4 + $0x10] sm:$0x3]
    %v213 = vld [vmem:[%s5] sm:$0x1]
    %v214 = vld [vmem:[%s6] sm:$0x1]
    %vm215 = vcmask 261120
    %v216 = vsel %vm215, %v202, 0.0
    %217 = vadd.xlane.f32.xlu0 %v216
    %v218 = vpop.xlane.xlu0 %217
    %v219 = vsel %vm215, %v205, 0.0
    %220 = vadd.xlane.f32.xlu0 %v219
    %v221 = vpop.xlane.xlu0 %220
    %vm222 = vcmask 254976
    %v223 = vsel %vm222, %v208, 0.0
    %224 = vadd.xlane.f32.xlu0 %v223
    %v225 = vpop.xlane.xlu0 %224
    %v226 = vrcp.pop 32.0
    %v227 = vmul.f32 32.0, %v226
    %v228 = vsub.f32 1.0, %v227
    %v229 = vmul.f32 %v226, %v228
    %v230 = vadd.f32 %v226, %v229
    %vm231 = vweird.f32 %v226
    %v232 = vsel %vm231, %v226, %v230
    %v233 = vmul.f32 %v218, %v232
    %v234 = vmul.f32 %v221, %v232
    %v235 = vmul.f32 %v225, %v232
    %v236 = vsub.f32 %v202, %v233
    %v237 = vsub.f32 %v205, %v234
    %v238 = vsub.f32 %v208, %v235
    %v239 = vmul.f32 %v236, %v236
    %v240 = vmul.f32 %v237, %v237
    %v241 = vmul.f32 %v238, %v238
    %v242 = vsel %vm215, %v239, 0.0
    %243 = vadd.xlane.f32.xlu0 %v242
    %v244 = vpop.xlane.xlu0 %243
    %v245 = vsel %vm215, %v240, 0.0
    %246 = vadd.xlane.f32.xlu0 %v245
    %v247 = vpop.xlane.xlu0 %246
    %v248 = vsel %vm222, %v241, 0.0
    %249 = vadd.xlane.f32.xlu0 %v248
    %v250 = vpop.xlane.xlu0 %249
    %v251 = vmul.f32 %v244, %v232
    %v252 = vmul.f32 %v247, %v232
    %v253 = vmul.f32 %v250, %v232
    %v254 = vadd.f32 %v251, 1e-05
    %v255 = vadd.f32 %v252, 1e-05
    %v256 = vadd.f32 %v253, 1e-05
    %v257 = vrsqrt.pop %v254
    %v258 = vmul.f32 %v257, %v254
    %v259 = vmul.f32 %v258, %v257
    %v260 = vmul.f32 0.5, %v259
    %v261 = vsub.f32 1.5, %v260
    %v262 = vmul.f32 %v257, %v261
    %vm263 = vweird.f32 %v254
    %vm264 = vweird.f32 %v257
    %vm265 = vmor %vm263, %vm264
    %v266 = vsel %vm265, %v257, %v262
    %v267 = vrsqrt.pop %v255
    %v268 = vmul.f32 %v267, %v255
    %v269 = vmul.f32 %v268, %v267
    %v270 = vmul.f32 0.5, %v269
    %v271 = vsub.f32 1.5, %v270
    %v272 = vmul.f32 %v267, %v271
    %vm273 = vweird.f32 %v255
    %vm274 = vweird.f32 %v267
    %vm275 = vmor %vm273, %vm274
    %v276 = vsel %vm275, %v267, %v272
    %v277 = vrsqrt.pop %v256
    %v278 = vmul.f32 %v277, %v256
    %v279 = vmul.f32 %v278, %v277
    %v280 = vmul.f32 0.5, %v279
    %v281 = vsub.f32 1.5, %v280
    %v282 = vmul.f32 %v277, %v281
    %vm283 = vweird.f32 %v256
    %vm284 = vweird.f32 %v277
    %vm285 = vmor %vm283, %vm284
    %v286 = vsel %vm285, %v277, %v282
    %v287 = vmul.f32 %v236, %v266
    %v288 = vmul.f32 %v237, %v276
    %v289 = vmul.f32 %v238, %v286
    %v291 = vperm.slane %v213, 0
    %v293 = vmul.f32 %v287, %v291
    %v294 = vmul.f32 %v288, %v291
    %v295 = vmul.f32 %v289, %v291
    %v297 = vperm.slane %v214, 0
    %v299 = vadd.f32 %v293, %v297
    %v300 = vadd.f32 %v294, %v297
    %v301 = vadd.f32 %v295, %v297
    %v302 = vld [vmem:[%s7] sm:$0xff]
    %v303 = vld [vmem:[%s7 + $0x8] sm:$0xff]
    %v304 = vld [vmem:[%s7 + $0x10] sm:$0xff]
    %v305 = vld [vmem:[%s7 + $0x18] sm:$0xff]
    %v307 = vsel %vm215, %v299, 0
    %v310 = vsel %vm215, %v300, 0
    %v313 = vsel %vm215, %v301, 0
    %315 = vmatpush.msra.mxu0 0.0
    %316 = vmatpush.msra.mxu0 0.0
    %317 = vmatpush.msra.mxu0 0.0
    %318 = vmatpush.msra.mxu0 0.0
    %319 = vmatpush.msra.mxu0 0.0
    %320 = vmatpush.msra.mxu0 0.0
    %321 = vmatpush.msra.mxu0 0.0
    %322 = vmatpush.msra.mxu0 0.0
    %323 = vmatpush.msra.mxu0 0.0
    %324 = vmatpush.msra.mxu0 0.0
    %325 = vmatpush.msra.mxu0 0.0
    %326 = vmatpush.msra.mxu0 0.0
    %327 = vmatpush.msra.mxu0 %v305
    %328 = vmatpush.msra.mxu0 %v304
    %329 = vmatpush.msra.mxu0 %v303
    %330 = vmatpush.msra.mxu0 %v302
    %331 = vmatmul.f32.gmra.mxu0 %v307
    %v332 = vpop.f32.mrf.mxu0
    %v333 = vadd.f32 0.0, %v332
    %334 = vmatmul.f32.gmra.mxu0 %v310
    %v335 = vpop.f32.mrf.mxu0
    %v336 = vadd.f32 0.0, %v335
    %337 = vmatmul.f32.gmra.mxu0 %v313
    %v338 = vpop.f32.mrf.mxu0
    %v339 = vadd.f32 0.0, %v338
    %340 = vdwg.mxu0
    %v341 = vld [vmem:[%s8] sm:$0xff]
    %v342 = vld [vmem:[%s8 + $0x8] sm:$0xff]
    %v343 = vld [vmem:[%s8 + $0x10] sm:$0xff]
    %v344 = vld [vmem:[%s8 + $0x18] sm:$0xff]
    %348 = vrot.lane.b32.xlu0 %v333, 96
    %v349 = vpop.permute.xlu0 %348
    %350 = vrot.lane.b32.xlu0 %v336, 96
    %v351 = vpop.permute.xlu0 %350
    %352 = vrot.lane.b32.xlu0 %v339, 96
    %v353 = vpop.permute.xlu0 %352
    %vm354 = vcmask 64512
    %v355 = vsel %vm354, %v333, 0
    %v357 = vsel %vm354, %v336, 0
    %v359 = vsel %vm354, %v339, 0
    %v361 = vsel %vm354, %v349, 0
    %v363 = vsel %vm354, %v351, 0
    %v365 = vsel %vm354, %v353, 0
    %367 = vmatpush.xpose.msra.mxu0 0.0
    %368 = vmatpush.xpose.msra.mxu0 0.0
    %369 = vmatpush.xpose.msra.mxu0 0.0
    %370 = vmatpush.xpose.msra.mxu0 0.0
    %371 = vmatpush.xpose.msra.mxu0 0.0
    %372 = vmatpush.xpose.msra.mxu0 0.0
    %373 = vmatpush.xpose.msra.mxu0 0.0
    %374 = vmatpush.xpose.msra.mxu0 0.0
    %375 = vmatpush.xpose.msra.mxu0 0.0
    %376 = vmatpush.xpose.msra.mxu0 0.0
    %377 = vmatpush.xpose.msra.mxu0 0.0
    %378 = vmatpush.xpose.msra.mxu0 0.0
    %379 = vmatpush.xpose.msra.mxu0 0.0
    %380 = vmatpush.xpose.msra.mxu0 %v365
    %381 = vmatpush.xpose.msra.mxu0 %v363
    %382 = vmatpush.xpose.msra.mxu0 %v361
    %383 = vmatmul.f32.gmra.mxu0 %v355
    %v384 = vpop.f32.mrf.mxu0
    %v385 = vadd.f32 %v210, %v384
    %386 = vmatmul.f32.gmra.mxu0 %v357
    %v387 = vpop.f32.mrf.mxu0
    %v388 = vadd.f32 %v211, %v387
    %389 = vmatmul.f32.gmra.mxu0 %v359
    %v390 = vpop.f32.mrf.mxu0
    %v391 = vadd.f32 %v212, %v390
    %392 = vdwg.mxu0
    %vm393 = vcmask 146432
    %v394 = vsel %vm393, %v385, -inf
    %395 = vmax.xlane.f32.xlu0 %v394
    %v396 = vpop.xlane.xlu0 %395
    %v397 = vsel %vm393, %v388, -inf
    %398 = vmax.xlane.f32.xlu0 %v397
    %v399 = vpop.xlane.xlu0 %398
    %vm400 = vcmask 140288
    %v401 = vsel %vm400, %v391, -inf
    %402 = vmax.xlane.f32.xlu0 %v401
    %v403 = vpop.xlane.xlu0 %402
    %v404 = vsub.f32 %v385, %v396
    %v405 = vsub.f32 %v388, %v399
    %v406 = vsub.f32 %v391, %v403
    %v407 = vmul.f32 %v404, 1.442695
    %v408 = vpow.pop %v407
    %v409 = vmul.f32 %v405, 1.442695
    %v410 = vpow.pop %v409
    %v411 = vmul.f32 %v406, 1.442695
    %v412 = vpow.pop %v411
    %v413 = vsel %vm393, %v408, 0.0
    %414 = vadd.xlane.f32.xlu0 %v413
    %v415 = vpop.xlane.xlu0 %414
    %v416 = vsel %vm393, %v410, 0.0
    %417 = vadd.xlane.f32.xlu0 %v416
    %v418 = vpop.xlane.xlu0 %417
    %v419 = vsel %vm400, %v412, 0.0
    %420 = vadd.xlane.f32.xlu0 %v419
    %v421 = vpop.xlane.xlu0 %420
    %v422 = vrcp.pop %v415
    %v423 = vrcp.pop %v418
    %v424 = vrcp.pop %v421
    %v425 = vmul.f32 %v408, %v422
    %v426 = vmul.f32 %v410, %v423
    %v427 = vmul.f32 %v412, %v424
    %428 = vrot.lane.b32.xlu0 %v333, 64
    %v429 = vpop.permute.xlu0 %428
    %430 = vrot.lane.b32.xlu0 %v336, 64
    %v431 = vpop.permute.xlu0 %430
    %432 = vrot.lane.b32.xlu0 %v339, 64
    %v433 = vpop.permute.xlu0 %432
    %v437 = vsel %vm393, %v425, 0
    %v440 = vsel %vm393, %v426, 0
    %v443 = vsel %vm393, %v427, 0
    %vm445 = vcmask 1041408
    %v446 = vsel %vm445, %v433, 0
    %448 = vmatpush.msra.mxu0 0.0
    %449 = vmatpush.msra.mxu0 0.0
    %450 = vmatpush.msra.mxu0 0.0
    %451 = vmatpush.msra.mxu0 0.0
    %452 = vmatpush.msra.mxu0 0.0
    %453 = vmatpush.msra.mxu0 0.0
    %454 = vmatpush.msra.mxu0 0.0
    %455 = vmatpush.msra.mxu0 0.0
    %456 = vmatpush.msra.mxu0 0.0
    %457 = vmatpush.msra.mxu0 0.0
    %458 = vmatpush.msra.mxu0 0.0
    %459 = vmatpush.msra.mxu0 0.0
    %460 = vmatpush.msra.mxu0 0.0
    %461 = vmatpush.msra.mxu0 %v446
    %462 = vmatpush.msra.mxu0 %v431
    %463 = vmatpush.msra.mxu0 %v429
    %464 = vmatmul.f32.gmra.mxu0 %v437
    %v465 = vpop.f32.mrf.mxu0
    %v466 = vadd.f32 0.0, %v465
    %467 = vmatmul.f32.gmra.mxu0 %v440
    %v468 = vpop.f32.mrf.mxu0
    %v469 = vadd.f32 0.0, %v468
    %470 = vmatmul.f32.gmra.mxu0 %v443
    %v471 = vpop.f32.mrf.mxu0
    %v472 = vadd.f32 0.0, %v471
    %473 = vdwg.mxu0
    %474 = vrot.lane.b32.xlu0 %v333, 120
    %v475 = vpop.permute.xlu0 %474
    %476 = vrot.lane.b32.xlu0 %v336, 120
    %v477 = vpop.permute.xlu0 %476
    %478 = vrot.lane.b32.xlu0 %v339, 120
    %v479 = vpop.permute.xlu0 %478
    %480 = vrot.lane.b32.xlu0 %v333, 88
    %v481 = vpop.permute.xlu0 %480
    %482 = vrot.lane.b32.xlu0 %v336, 88
    %v483 = vpop.permute.xlu0 %482
    %484 = vrot.lane.b32.xlu0 %v339, 88
    %v485 = vpop.permute.xlu0 %484
    %v486 = vsel %vm354, %v475, 0
    %v488 = vsel %vm354, %v477, 0
    %v490 = vsel %vm354, %v479, 0
    %v492 = vsel %vm354, %v481, 0
    %v494 = vsel %vm354, %v483, 0
    %v496 = vsel %vm354, %v485, 0
    %498 = vmatpush.xpose.msra.mxu0 0.0
    %499 = vmatpush.xpose.msra.mxu0 0.0
    %500 = vmatpush.xpose.msra.mxu0 0.0
    %501 = vmatpush.xpose.msra.mxu0 0.0
    %502 = vmatpush.xpose.msra.mxu0 0.0
    %503 = vmatpush.xpose.msra.mxu0 0.0
    %504 = vmatpush.xpose.msra.mxu0 0.0
    %505 = vmatpush.xpose.msra.mxu0 0.0
    %506 = vmatpush.xpose.msra.mxu0 0.0
    %507 = vmatpush.xpose.msra.mxu0 0.0
    %508 = vmatpush.xpose.msra.mxu0 0.0
    %509 = vmatpush.xpose.msra.mxu0 0.0
    %510 = vmatpush.xpose.msra.mxu0 0.0
    %511 = vmatpush.xpose.msra.mxu0 %v496
    %512 = vmatpush.xpose.msra.mxu0 %v494
    %513 = vmatpush.xpose.msra.mxu0 %v492
    %514 = vmatmul.f32.gmra.mxu0 %v486
    %v515 = vpop.f32.mrf.mxu0
    %v516 = vadd.f32 %v210, %v515
    %517 = vmatmul.f32.gmra.mxu0 %v488
    %v518 = vpop.f32.mrf.mxu0
    %v519 = vadd.f32 %v211, %v518
    %520 = vmatmul.f32.gmra.mxu0 %v490
    %v521 = vpop.f32.mrf.mxu0
    %v522 = vadd.f32 %v212, %v521
    %523 = vdwg.mxu0
    %v524 = vsel %vm393, %v516, -inf
    %525 = vmax.xlane.f32.xlu0 %v524
    %v526 = vpop.xlane.xlu0 %525
    %v527 = vsel %vm393, %v519, -inf
    %528 = vmax.xlane.f32.xlu0 %v527
    %v529 = vpop.xlane.xlu0 %528
    %v530 = vsel %vm400, %v522, -inf
    %531 = vmax.xlane.f32.xlu0 %v530
    %v532 = vpop.xlane.xlu0 %531
    %v533 = vsub.f32 %v516, %v526
    %v534 = vsub.f32 %v519, %v529
    %v535 = vsub.f32 %v522, %v532
    %v536 = vmul.f32 %v533, 1.442695
    %v537 = vpow.pop %v536
    %v538 = vmul.f32 %v534, 1.442695
    %v539 = vpow.pop %v538
    %v540 = vmul.f32 %v535, 1.442695
    %v541 = vpow.pop %v540
    %v542 = vsel %vm393, %v537, 0.0
    %543 = vadd.xlane.f32.xlu0 %v542
    %v544 = vpop.xlane.xlu0 %543
    %v545 = vsel %vm393, %v539, 0.0
    %546 = vadd.xlane.f32.xlu0 %v545
    %v547 = vpop.xlane.xlu0 %546
    %v548 = vsel %vm400, %v541, 0.0
    %549 = vadd.xlane.f32.xlu0 %v548
    %v550 = vpop.xlane.xlu0 %549
    %v551 = vrcp.pop %v544
    %v552 = vrcp.pop %v547
    %v553 = vrcp.pop %v550
    %v554 = vmul.f32 %v537, %v551
    %v555 = vmul.f32 %v539, %v552
    %v556 = vmul.f32 %v541, %v553
    %557 = vrot.lane.b32.xlu0 %v333, 56
    %v558 = vpop.permute.xlu0 %557
    %559 = vrot.lane.b32.xlu0 %v336, 56
    %v560 = vpop.permute.xlu0 %559
    %561 = vrot.lane.b32.xlu0 %v339, 56
    %v562 = vpop.permute.xlu0 %561
    %v566 = vsel %vm393, %v554, 0
    %v569 = vsel %vm393, %v555, 0
    %v572 = vsel %vm393, %v556, 0
    %v574 = vsel %vm445, %v562, 0
    %576 = vmatpush.msra.mxu0 0.0
    %577 = vmatpush.msra.mxu0 0.0
    %578 = vmatpush.msra.mxu0 0.0
    %579 = vmatpush.msra.mxu0 0.0
    %580 = vmatpush.msra.mxu0 0.0
    %581 = vmatpush.msra.mxu0 0.0
    %582 = vmatpush.msra.mxu0 0.0
    %583 = vmatpush.msra.mxu0 0.0
    %584 = vmatpush.msra.mxu0 0.0
    %585 = vmatpush.msra.mxu0 0.0
    %586 = vmatpush.msra.mxu0 0.0
    %587 = vmatpush.msra.mxu0 0.0
    %588 = vmatpush.msra.mxu0 0.0
    %589 = vmatpush.msra.mxu0 %v574
    %590 = vmatpush.msra.mxu0 %v560
    %591 = vmatpush.msra.mxu0 %v558
    %592 = vmatmul.f32.gmra.mxu0 %v566
    %v593 = vpop.f32.mrf.mxu0
    %v594 = vadd.f32 0.0, %v593
    %595 = vmatmul.f32.gmra.mxu0 %v569
    %v596 = vpop.f32.mrf.mxu0
    %v597 = vadd.f32 0.0, %v596
    %598 = vmatmul.f32.gmra.mxu0 %v572
    %v599 = vpop.f32.mrf.mxu0
    %v600 = vadd.f32 0.0, %v599
    %601 = vdwg.mxu0
    %v603 = vsel %vm354, %v594, 0
    %v606 = vsel %vm354, %v597, 0
    %v609 = vsel %vm354, %v600, 0
    %611 = vmatpush.msra.mxu0 0.0
    %612 = vmatpush.msra.mxu0 0.0
    %613 = vmatpush.msra.mxu0 0.0
    %614 = vmatpush.msra.mxu0 0.0
    %615 = vmatpush.msra.mxu0 0.0
    %616 = vmatpush.msra.mxu0 0.0
    %617 = vmatpush.msra.mxu0 0.0
    %618 = vmatpush.msra.mxu0 0.0
    %619 = vmatpush.msra.mxu0 0.0
    %620 = vmatpush.msra.mxu0 0.0
    %621 = vmatpush.msra.mxu0 0.0
    %622 = vmatpush.msra.mxu0 0.0
    %623 = vmatpush.msra.mxu0 0.0
    %624 = vmatpush.msra.mxu0 0.0
    %625 = vmatpush.msra.mxu0 0.0
    %626 = vmatpush.msra.mxu0 %v342
    %627 = vmatmul.f32.gmra.mxu0 %v603
    %v628 = vpop.f32.mrf.mxu0
    %v629 = vadd.f32 0.0, %v628
    %630 = vmatmul.f32.gmra.mxu0 %v606
    %v631 = vpop.f32.mrf.mxu0
    %v632 = vadd.f32 0.0, %v631
    %633 = vmatmul.f32.gmra.mxu0 %v609
    %v634 = vpop.f32.mrf.mxu0
    %v635 = vadd.f32 0.0, %v634
    %636 = vdwg.mxu0
    %v638 = vsel %vm354, %v466, 0
    %v641 = vsel %vm354, %v469, 0
    %v644 = vsel %vm354, %v472, 0
    %646 = vmatpush.msra.mxu0 0.0
    %647 = vmatpush.msra.mxu0 0.0
    %648 = vmatpush.msra.mxu0 0.0
    %649 = vmatpush.msra.mxu0 0.0
    %650 = vmatpush.msra.mxu0 0.0
    %651 = vmatpush.msra.mxu0 0.0
    %652 = vmatpush.msra.mxu0 0.0
    %653 = vmatpush.msra.mxu0 0.0
    %654 = vmatpush.msra.mxu0 0.0
    %655 = vmatpush.msra.mxu0 0.0
    %656 = vmatpush.msra.mxu0 0.0
    %657 = vmatpush.msra.mxu0 0.0
    %658 = vmatpush.msra.mxu0 0.0
    %659 = vmatpush.msra.mxu0 0.0
    %660 = vmatpush.msra.mxu0 0.0
    %661 = vmatpush.msra.mxu0 %v341
    %662 = vmatmul.f32.gmra.mxu0 %v638
    %v663 = vpop.f32.mrf.mxu0
    %v664 = vadd.f32 %v629, %v663
    %665 = vmatmul.f32.gmra.mxu0 %v641
    %v666 = vpop.f32.mrf.mxu0
    %v667 = vadd.f32 %v632, %v666
    %668 = vmatmul.f32.gmra.mxu0 %v644
    %v669 = vpop.f32.mrf.mxu0
    %v670 = vadd.f32 %v635, %v669
    %671 = vdwg.mxu0
    %672 = vrot.lane.b32.xlu0 %v333, 112
    %v673 = vpop.permute.xlu0 %672
    %674 = vrot.lane.b32.xlu0 %v336, 112
    %v675 = vpop.permute.xlu0 %674
    %676 = vrot.lane.b32.xlu0 %v339, 112
    %v677 = vpop.permute.xlu0 %676
    %678 = vrot.lane.b32.xlu0 %v333, 80
    %v679 = vpop.permute.xlu0 %678
    %680 = vrot.lane.b32.xlu0 %v336, 80
    %v681 = vpop.permute.xlu0 %680
    %682 = vrot.lane.b32.xlu0 %v339, 80
    %v683 = vpop.permute.xlu0 %682
    %v684 = vsel %vm354, %v673, 0
    %v686 = vsel %vm354, %v675, 0
    %v688 = vsel %vm354, %v677, 0
    %v690 = vsel %vm354, %v679, 0
    %v692 = vsel %vm354, %v681, 0
    %v694 = vsel %vm354, %v683, 0
    %696 = vmatpush.xpose.msra.mxu0 0.0
    %697 = vmatpush.xpose.msra.mxu0 0.0
    %698 = vmatpush.xpose.msra.mxu0 0.0
    %699 = vmatpush.xpose.msra.mxu0 0.0
    %700 = vmatpush.xpose.msra.mxu0 0.0
    %701 = vmatpush.xpose.msra.mxu0 0.0
    %702 = vmatpush.xpose.msra.mxu0 0.0
    %703 = vmatpush.xpose.msra.mxu0 0.0
    %704 = vmatpush.xpose.msra.mxu0 0.0
    %705 = vmatpush.xpose.msra.mxu0 0.0
    %706 = vmatpush.xpose.msra.mxu0 0.0
    %707 = vmatpush.xpose.msra.mxu0 0.0
    %708 = vmatpush.xpose.msra.mxu0 0.0
    %709 = vmatpush.xpose.msra.mxu0 %v694
    %710 = vmatpush.xpose.msra.mxu0 %v692
    %711 = vmatpush.xpose.msra.mxu0 %v690
    %712 = vmatmul.f32.gmra.mxu0 %v684
    %v713 = vpop.f32.mrf.mxu0
    %v714 = vadd.f32 %v210, %v713
    %715 = vmatmul.f32.gmra.mxu0 %v686
    %v716 = vpop.f32.mrf.mxu0
    %v717 = vadd.f32 %v211, %v716
    %718 = vmatmul.f32.gmra.mxu0 %v688
    %v719 = vpop.f32.mrf.mxu0
    %v720 = vadd.f32 %v212, %v719
    %721 = vdwg.mxu0
    %v722 = vsel %vm393, %v714, -inf
    %723 = vmax.xlane.f32.xlu0 %v722
    %v724 = vpop.xlane.xlu0 %723
    %v725 = vsel %vm393, %v717, -inf
    %726 = vmax.xlane.f32.xlu0 %v725
    %v727 = vpop.xlane.xlu0 %726
    %v728 = vsel %vm400, %v720, -inf
    %729 = vmax.xlane.f32.xlu0 %v728
    %v730 = vpop.xlane.xlu0 %729
    %v731 = vsub.f32 %v714, %v724
    %v732 = vsub.f32 %v717, %v727
    %v733 = vsub.f32 %v720, %v730
    %v734 = vmul.f32 %v731, 1.442695
    %v735 = vpow.pop %v734
    %v736 = vmul.f32 %v732, 1.442695
    %v737 = vpow.pop %v736
    %v738 = vmul.f32 %v733, 1.442695
    %v739 = vpow.pop %v738
    %v740 = vsel %vm393, %v735, 0.0
    %741 = vadd.xlane.f32.xlu0 %v740
    %v742 = vpop.xlane.xlu0 %741
    %v743 = vsel %vm393, %v737, 0.0
    %744 = vadd.xlane.f32.xlu0 %v743
    %v745 = vpop.xlane.xlu0 %744
    %v746 = vsel %vm400, %v739, 0.0
    %747 = vadd.xlane.f32.xlu0 %v746
    %v748 = vpop.xlane.xlu0 %747
    %v749 = vrcp.pop %v742
    %v750 = vrcp.pop %v745
    %v751 = vrcp.pop %v748
    %v752 = vmul.f32 %v735, %v749
    %v753 = vmul.f32 %v737, %v750
    %v754 = vmul.f32 %v739, %v751
    %755 = vrot.lane.b32.xlu0 %v333, 48
    %v756 = vpop.permute.xlu0 %755
    %757 = vrot.lane.b32.xlu0 %v336, 48
    %v758 = vpop.permute.xlu0 %757
    %759 = vrot.lane.b32.xlu0 %v339, 48
    %v760 = vpop.permute.xlu0 %759
    %v764 = vsel %vm393, %v752, 0
    %v767 = vsel %vm393, %v753, 0
    %v770 = vsel %vm393, %v754, 0
    %v772 = vsel %vm445, %v760, 0
    %774 = vmatpush.msra.mxu0 0.0
    %775 = vmatpush.msra.mxu0 0.0
    %776 = vmatpush.msra.mxu0 0.0
    %777 = vmatpush.msra.mxu0 0.0
    %778 = vmatpush.msra.mxu0 0.0
    %779 = vmatpush.msra.mxu0 0.0
    %780 = vmatpush.msra.mxu0 0.0
    %781 = vmatpush.msra.mxu0 0.0
    %782 = vmatpush.msra.mxu0 0.0
    %783 = vmatpush.msra.mxu0 0.0
    %784 = vmatpush.msra.mxu0 0.0
    %785 = vmatpush.msra.mxu0 0.0
    %786 = vmatpush.msra.mxu0 0.0
    %787 = vmatpush.msra.mxu0 %v772
    %788 = vmatpush.msra.mxu0 %v758
    %789 = vmatpush.msra.mxu0 %v756
    %790 = vmatmul.f32.gmra.mxu0 %v764
    %v791 = vpop.f32.mrf.mxu0
    %v792 = vadd.f32 0.0, %v791
    %793 = vmatmul.f32.gmra.mxu0 %v767
    %v794 = vpop.f32.mrf.mxu0
    %v795 = vadd.f32 0.0, %v794
    %796 = vmatmul.f32.gmra.mxu0 %v770
    %v797 = vpop.f32.mrf.mxu0
    %v798 = vadd.f32 0.0, %v797
    %799 = vdwg.mxu0
    %v801 = vsel %vm354, %v792, 0
    %v804 = vsel %vm354, %v795, 0
    %v807 = vsel %vm354, %v798, 0
    %809 = vmatpush.msra.mxu0 0.0
    %810 = vmatpush.msra.mxu0 0.0
    %811 = vmatpush.msra.mxu0 0.0
    %812 = vmatpush.msra.mxu0 0.0
    %813 = vmatpush.msra.mxu0 0.0
    %814 = vmatpush.msra.mxu0 0.0
    %815 = vmatpush.msra.mxu0 0.0
    %816 = vmatpush.msra.mxu0 0.0
    %817 = vmatpush.msra.mxu0 0.0
    %818 = vmatpush.msra.mxu0 0.0
    %819 = vmatpush.msra.mxu0 0.0
    %820 = vmatpush.msra.mxu0 0.0
    %821 = vmatpush.msra.mxu0 0.0
    %822 = vmatpush.msra.mxu0 0.0
    %823 = vmatpush.msra.mxu0 0.0
    %824 = vmatpush.msra.mxu0 %v343
    %825 = vmatmul.f32.gmra.mxu0 %v801
    %v826 = vpop.f32.mrf.mxu0
    %v827 = vadd.f32 0.0, %v826
    %828 = vmatmul.f32.gmra.mxu0 %v804
    %v829 = vpop.f32.mrf.mxu0
    %v830 = vadd.f32 0.0, %v829
    %831 = vmatmul.f32.gmra.mxu0 %v807
    %v832 = vpop.f32.mrf.mxu0
    %v833 = vadd.f32 0.0, %v832
    %834 = vdwg.mxu0
    %v835 = vadd.f32 %v664, %v827
    %v836 = vadd.f32 %v667, %v830
    %v837 = vadd.f32 %v670, %v833
    %838 = vrot.lane.b32.xlu0 %v333, 104
    %v839 = vpop.permute.xlu0 %838
    %840 = vrot.lane.b32.xlu0 %v336, 104
    %v841 = vpop.permute.xlu0 %840
    %842 = vrot.lane.b32.xlu0 %v339, 104
    %v843 = vpop.permute.xlu0 %842
    %844 = vrot.lane.b32.xlu0 %v333, 72
    %v845 = vpop.permute.xlu0 %844
    %846 = vrot.lane.b32.xlu0 %v336, 72
    %v847 = vpop.permute.xlu0 %846
    %848 = vrot.lane.b32.xlu0 %v339, 72
    %v849 = vpop.permute.xlu0 %848
    %v850 = vsel %vm354, %v839, 0
    %v852 = vsel %vm354, %v841, 0
    %v854 = vsel %vm354, %v843, 0
    %v856 = vsel %vm354, %v845, 0
    %v858 = vsel %vm354, %v847, 0
    %v860 = vsel %vm354, %v849, 0
    %862 = vmatpush.xpose.msra.mxu0 0.0
    %863 = vmatpush.xpose.msra.mxu0 0.0
    %864 = vmatpush.xpose.msra.mxu0 0.0
    %865 = vmatpush.xpose.msra.mxu0 0.0
    %866 = vmatpush.xpose.msra.mxu0 0.0
    %867 = vmatpush.xpose.msra.mxu0 0.0
    %868 = vmatpush.xpose.msra.mxu0 0.0
    %869 = vmatpush.xpose.msra.mxu0 0.0
    %870 = vmatpush.xpose.msra.mxu0 0.0
    %871 = vmatpush.xpose.msra.mxu0 0.0
    %872 = vmatpush.xpose.msra.mxu0 0.0
    %873 = vmatpush.xpose.msra.mxu0 0.0
    %874 = vmatpush.xpose.msra.mxu0 0.0
    %875 = vmatpush.xpose.msra.mxu0 %v860
    %876 = vmatpush.xpose.msra.mxu0 %v858
    %877 = vmatpush.xpose.msra.mxu0 %v856
    %878 = vmatmul.f32.gmra.mxu0 %v850
    %v879 = vpop.f32.mrf.mxu0
    %v880 = vadd.f32 %v210, %v879
    %881 = vmatmul.f32.gmra.mxu0 %v852
    %v882 = vpop.f32.mrf.mxu0
    %v883 = vadd.f32 %v211, %v882
    %884 = vmatmul.f32.gmra.mxu0 %v854
    %v885 = vpop.f32.mrf.mxu0
    %v886 = vadd.f32 %v212, %v885
    %887 = vdwg.mxu0
    %v888 = vsel %vm393, %v880, -inf
    %889 = vmax.xlane.f32.xlu0 %v888
    %v890 = vpop.xlane.xlu0 %889
    %v891 = vsel %vm393, %v883, -inf
    %892 = vmax.xlane.f32.xlu0 %v891
    %v893 = vpop.xlane.xlu0 %892
    %v894 = vsel %vm400, %v886, -inf
    %895 = vmax.xlane.f32.xlu0 %v894
    %v896 = vpop.xlane.xlu0 %895
    %v897 = vsub.f32 %v880, %v890
    %v898 = vsub.f32 %v883, %v893
    %v899 = vsub.f32 %v886, %v896
    %v900 = vmul.f32 %v897, 1.442695
    %v901 = vpow.pop %v900
    %v902 = vmul.f32 %v898, 1.442695
    %v903 = vpow.pop %v902
    %v904 = vmul.f32 %v899, 1.442695
    %v905 = vpow.pop %v904
    %v906 = vsel %vm393, %v901, 0.0
    %907 = vadd.xlane.f32.xlu0 %v906
    %v908 = vpop.xlane.xlu0 %907
    %v909 = vsel %vm393, %v903, 0.0
    %910 = vadd.xlane.f32.xlu0 %v909
    %v911 = vpop.xlane.xlu0 %910
    %v912 = vsel %vm400, %v905, 0.0
    %913 = vadd.xlane.f32.xlu0 %v912
    %v914 = vpop.xlane.xlu0 %913
    %v915 = vrcp.pop %v908
    %v916 = vrcp.pop %v911
    %v917 = vrcp.pop %v914
    %v918 = vmul.f32 %v901, %v915
    %v919 = vmul.f32 %v903, %v916
    %v920 = vmul.f32 %v905, %v917
    %921 = vrot.lane.b32.xlu0 %v333, 40
    %v922 = vpop.permute.xlu0 %921
    %923 = vrot.lane.b32.xlu0 %v336, 40
    %v924 = vpop.permute.xlu0 %923
    %925 = vrot.lane.b32.xlu0 %v339, 40
    %v926 = vpop.permute.xlu0 %925
    %v930 = vsel %vm393, %v918, 0
    %v933 = vsel %vm393, %v919, 0
    %v936 = vsel %vm393, %v920, 0
    %v938 = vsel %vm445, %v926, 0
    %940 = vmatpush.msra.mxu0 0.0
    %941 = vmatpush.msra.mxu0 0.0
    %942 = vmatpush.msra.mxu0 0.0
    %943 = vmatpush.msra.mxu0 0.0
    %944 = vmatpush.msra.mxu0 0.0
    %945 = vmatpush.msra.mxu0 0.0
    %946 = vmatpush.msra.mxu0 0.0
    %947 = vmatpush.msra.mxu0 0.0
    %948 = vmatpush.msra.mxu0 0.0
    %949 = vmatpush.msra.mxu0 0.0
    %950 = vmatpush.msra.mxu0 0.0
    %951 = vmatpush.msra.mxu0 0.0
    %952 = vmatpush.msra.mxu0 0.0
    %953 = vmatpush.msra.mxu0 %v938
    %954 = vmatpush.msra.mxu0 %v924
    %955 = vmatpush.msra.mxu0 %v922
    %956 = vmatmul.f32.gmra.mxu0 %v930
    %v957 = vpop.f32.mrf.mxu0
    %v958 = vadd.f32 0.0, %v957
    %959 = vmatmul.f32.gmra.mxu0 %v933
    %v960 = vpop.f32.mrf.mxu0
    %v961 = vadd.f32 0.0, %v960
    %962 = vmatmul.f32.gmra.mxu0 %v936
    %v963 = vpop.f32.mrf.mxu0
    %v964 = vadd.f32 0.0, %v963
    %965 = vdwg.mxu0
    %v967 = vsel %vm354, %v958, 0
    %v970 = vsel %vm354, %v961, 0
    %v973 = vsel %vm354, %v964, 0
    %975 = vmatpush.msra.mxu0 0.0
    %976 = vmatpush.msra.mxu0 0.0
    %977 = vmatpush.msra.mxu0 0.0
    %978 = vmatpush.msra.mxu0 0.0
    %979 = vmatpush.msra.mxu0 0.0
    %980 = vmatpush.msra.mxu0 0.0
    %981 = vmatpush.msra.mxu0 0.0
    %982 = vmatpush.msra.mxu0 0.0
    %983 = vmatpush.msra.mxu0 0.0
    %984 = vmatpush.msra.mxu0 0.0
    %985 = vmatpush.msra.mxu0 0.0
    %986 = vmatpush.msra.mxu0 0.0
    %987 = vmatpush.msra.mxu0 0.0
    %988 = vmatpush.msra.mxu0 0.0
    %989 = vmatpush.msra.mxu0 0.0
    %990 = vmatpush.msra.mxu0 %v344
    %991 = vmatmul.f32.gmra.mxu0 %v967
    %v992 = vpop.f32.mrf.mxu0
    %v993 = vadd.f32 0.0, %v992
    %994 = vmatmul.f32.gmra.mxu0 %v970
    %v995 = vpop.f32.mrf.mxu0
    %v996 = vadd.f32 0.0, %v995
    %997 = vmatmul.f32.gmra.mxu0 %v973
    %v998 = vpop.f32.mrf.mxu0
    %v999 = vadd.f32 0.0, %v998
    %1000 = vdwg.mxu0
    %v1001 = vadd.f32 %v835, %v993
    %v1002 = vadd.f32 %v836, %v996
    %v1003 = vadd.f32 %v837, %v999
    %v1004 = vadd.f32 %v202, %v1001
    %v1005 = vadd.f32 %v205, %v1002
    %v1006 = vadd.f32 %v208, %v1003
    %v1007 = vld [vmem:[#allocation6] sm:$0x1]
    %v1009 = vperm.slane %v1007, 0
    %v1011 = vadd.f32 %v1004, %v1009
    %v1012 = vadd.f32 %v1005, %v1009
    %v1013 = vadd.f32 %v1006, %v1009
    %v1014 = vld [vmem:[%s10] sm:$0x1]
    %v1015 = vld [vmem:[%s11] sm:$0x1]
    %v1016 = vsel %vm215, %v1011, 0.0
    %1017 = vadd.xlane.f32.xlu0 %v1016
    %v1018 = vpop.xlane.xlu0 %1017
    %v1019 = vsel %vm215, %v1012, 0.0
    %1020 = vadd.xlane.f32.xlu0 %v1019
    %v1021 = vpop.xlane.xlu0 %1020
    %v1022 = vsel %vm222, %v1013, 0.0
    %1023 = vadd.xlane.f32.xlu0 %v1022
    %v1024 = vpop.xlane.xlu0 %1023
    %v1025 = vmul.f32 %v1018, %v232
    %v1026 = vmul.f32 %v1021, %v232
    %v1027 = vmul.f32 %v1024, %v232
    %v1028 = vsub.f32 %v1011, %v1025
    %v1029 = vsub.f32 %v1012, %v1026
    %v1030 = vsub.f32 %v1013, %v1027
    %v1031 = vmul.f32 %v1028, %v1028
    %v1032 = vmul.f32 %v1029, %v1029
    %v1033 = vmul.f32 %v1030, %v1030
    %v1034 = vsel %vm215, %v1031, 0.0
    %1035 = vadd.xlane.f32.xlu0 %v1034
    %v1036 = vpop.xlane.xlu0 %1035
    %v1037 = vsel %vm215, %v1032, 0.0
    %1038 = vadd.xlane.f32.xlu0 %v1037
    %v1039 = vpop.xlane.xlu0 %1038
    %v1040 = vsel %vm222, %v1033, 0.0
    %1041 = vadd.xlane.f32.xlu0 %v1040
    %v1042 = vpop.xlane.xlu0 %1041
    %v1043 = vmul.f32 %v1036, %v232
    %v1044 = vmul.f32 %v1039, %v232
    %v1045 = vmul.f32 %v1042, %v232
    %v1046 = vadd.f32 %v1043, 1e-05
    %v1047 = vadd.f32 %v1044, 1e-05
    %v1048 = vadd.f32 %v1045, 1e-05
    %v1049 = vrsqrt.pop %v1046
    %v1050 = vmul.f32 %v1049, %v1046
    %v1051 = vmul.f32 %v1050, %v1049
    %v1052 = vmul.f32 0.5, %v1051
    %v1053 = vsub.f32 1.5, %v1052
    %v1054 = vmul.f32 %v1049, %v1053
    %vm1055 = vweird.f32 %v1046
    %vm1056 = vweird.f32 %v1049
    %vm1057 = vmor %vm1055, %vm1056
    %v1058 = vsel %vm1057, %v1049, %v1054
    %v1059 = vrsqrt.pop %v1047
    %v1060 = vmul.f32 %v1059, %v1047
    %v1061 = vmul.f32 %v1060, %v1059
    %v1062 = vmul.f32 0.5, %v1061
    %v1063 = vsub.f32 1.5, %v1062
    %v1064 = vmul.f32 %v1059, %v1063
    %vm1065 = vweird.f32 %v1047
    %vm1066 = vweird.f32 %v1059
    %vm1067 = vmor %vm1065, %vm1066
    %v1068 = vsel %vm1067, %v1059, %v1064
    %v1069 = vrsqrt.pop %v1048
    %v1070 = vmul.f32 %v1069, %v1048
    %v1071 = vmul.f32 %v1070, %v1069
    %v1072 = vmul.f32 0.5, %v1071
    %v1073 = vsub.f32 1.5, %v1072
    %v1074 = vmul.f32 %v1069, %v1073
    %vm1075 = vweird.f32 %v1048
    %vm1076 = vweird.f32 %v1069
    %vm1077 = vmor %vm1075, %vm1076
    %v1078 = vsel %vm1077, %v1069, %v1074
    %v1079 = vmul.f32 %v1028, %v1058
    %v1080 = vmul.f32 %v1029, %v1068
    %v1081 = vmul.f32 %v1030, %v1078
    %v1083 = vperm.slane %v1014, 0
    %v1085 = vmul.f32 %v1079, %v1083
    %v1086 = vmul.f32 %v1080, %v1083
    %v1087 = vmul.f32 %v1081, %v1083
    %v1089 = vperm.slane %v1015, 0
    %v1091 = vadd.f32 %v1085, %v1089
    %v1092 = vadd.f32 %v1086, %v1089
    %v1093 = vadd.f32 %v1087, %v1089
    %v1094 = vld [vmem:[%s12] sm:$0xff]
    %v1095 = vld [vmem:[%s12 + $0x8] sm:$0xff]
    %v1096 = vld [vmem:[%s12 + $0x10] sm:$0xff]
    %v1097 = vld [vmem:[%s12 + $0x18] sm:$0xff]
    %v1098 = vld [vmem:[#allocation7] sm:$0x1]
    %v1100 = vperm.slane %v1098, 0
    %v1103 = vsel %vm215, %v1091, 0
    %v1106 = vsel %vm215, %v1092, 0
    %v1109 = vsel %vm215, %v1093, 0
    %1111 = vmatpush.msra.mxu0 0.0
    %1112 = vmatpush.msra.mxu0 0.0
    %1113 = vmatpush.msra.mxu0 0.0
    %1114 = vmatpush.msra.mxu0 0.0
    %1115 = vmatpush.msra.mxu0 0.0
    %1116 = vmatpush.msra.mxu0 0.0
    %1117 = vmatpush.msra.mxu0 0.0
    %1118 = vmatpush.msra.mxu0 0.0
    %1119 = vmatpush.msra.mxu0 0.0
    %1120 = vmatpush.msra.mxu0 0.0
    %1121 = vmatpush.msra.mxu0 0.0
    %1122 = vmatpush.msra.mxu0 0.0
    %1123 = vmatpush.msra.mxu0 %v1097
    %1124 = vmatpush.msra.mxu0 %v1096
    %1125 = vmatpush.msra.mxu0 %v1095
    %1126 = vmatpush.msra.mxu0 %v1094
    %1127 = vmatmul.f32.gmra.mxu0 %v1103
    %v1128 = vpop.f32.mrf.mxu0
    %v1129 = vadd.f32 %v1100, %v1128
    %1130 = vmatmul.f32.gmra.mxu0 %v1106
    %v1131 = vpop.f32.mrf.mxu0
    %v1132 = vadd.f32 %v1100, %v1131
    %1133 = vmatmul.f32.gmra.mxu0 %v1109
    %v1134 = vpop.f32.mrf.mxu0
    %v1135 = vadd.f32 %v1100, %v1134
    %1136 = vdwg.mxu0
    %v1137 = vmul.f32 %v1129, 0.5
    %v1138 = vmul.f32 %v1132, 0.5
    %v1139 = vmul.f32 %v1135, 0.5
    %v1140 = vmul.f32 %v1129, 0.044715
    %v1141 = vmul.f32 %v1132, 0.044715
    %v1142 = vmul.f32 %v1135, 0.044715
    %v1143 = vmul.f32 %v1140, %v1129
    %v1144 = vmul.f32 %v1141, %v1132
    %v1145 = vmul.f32 %v1142, %v1135
    %v1146 = vmul.f32 %v1143, %v1129
    %v1147 = vmul.f32 %v1144, %v1132
    %v1148 = vmul.f32 %v1145, %v1135
    %v1149 = vadd.f32 %v1129, %v1146
    %v1150 = vadd.f32 %v1132, %v1147
    %v1151 = vadd.f32 %v1135, %v1148
    %v1152 = vmul.f32 %v1149, 0.7978846
    %v1153 = vmul.f32 %v1150, 0.7978846
    %v1154 = vmul.f32 %v1151, 0.7978846
    %v1155 = vtanh.pop %v1152
    %v1156 = vtanh.pop %v1153
    %v1157 = vtanh.pop %v1154
    %v1158 = vadd.f32 %v1155, 1.0
    %v1159 = vadd.f32 %v1156, 1.0
    %v1160 = vadd.f32 %v1157, 1.0
    %v1161 = vmul.f32 %v1137, %v1158
    %v1162 = vmul.f32 %v1138, %v1159
    %v1163 = vmul.f32 %v1139, %v1160
    %v1164 = vld [vmem:[%s14] sm:$0xff]
    %v1165 = vld [vmem:[%s14 + $0x8] sm:$0xff]
    %v1166 = vld [vmem:[%s14 + $0x10] sm:$0xff]
    %v1167 = vld [vmem:[%s14 + $0x18] sm:$0xff]
    %v1168 = vld [vmem:[%s14 + $0x20] sm:$0xff]
    %v1169 = vld [vmem:[%s14 + $0x28] sm:$0xff]
    %v1170 = vld [vmem:[%s14 + $0x30] sm:$0xff]
    %v1171 = vld [vmem:[%s14 + $0x38] sm:$0xff]
    %v1172 = vld [vmem:[#allocation9] sm:$0x1]
    %v1174 = vperm.slane %v1172, 0
    %vm1176 = vcmask 523264
    %v1178 = vsel %vm1176, %v1161, 0
    %v1181 = vsel %vm1176, %v1162, 0
    %v1184 = vsel %vm1176, %v1163, 0
    %1186 = vmatpush.msra.mxu0 0.0
    %1187 = vmatpush.msra.mxu0 0.0
    %1188 = vmatpush.msra.mxu0 0.0
    %1189 = vmatpush.msra.mxu0 0.0
    %1190 = vmatpush.msra.mxu0 0.0
    %1191 = vmatpush.msra.mxu0 0.0
    %1192 = vmatpush.msra.mxu0 0.0
    %1193 = vmatpush.msra.mxu0 0.0
    %1194 = vmatpush.msra.mxu0 %v1171
    %1195 = vmatpush.msra.mxu0 %v1170
    %1196 = vmatpush.msra.mxu0 %v1169
    %1197 = vmatpush.msra.mxu0 %v1168
    %1198 = vmatpush.msra.mxu0 %v1167
    %1199 = vmatpush.msra.mxu0 %v1166
    %1200 = vmatpush.msra.mxu0 %v1165
    %1201 = vmatpush.msra.mxu0 %v1164
    %1202 = vmatmul.f32.gmra.mxu0 %v1178
    %v1203 = vpop.f32.mrf.mxu0
    %v1204 = vadd.f32 %v1174, %v1203
    %1205 = vmatmul.f32.gmra.mxu0 %v1181
    %v1206 = vpop.f32.mrf.mxu0
    %v1207 = vadd.f32 %v1174, %v1206
    %1208 = vmatmul.f32.gmra.mxu0 %v1184
    %v1209 = vpop.f32.mrf.mxu0
    %v1210 = vadd.f32 %v1174, %v1209
    %1211 = vdwg.mxu0
    %v1212 = vadd.f32 %v1011, %v1204
    %v1213 = vadd.f32 %v1012, %v1207
    %v1214 = vadd.f32 %v1013, %v1210
    %s1215 = scalar_lea.vmem %s5, 1
    %v1216 = vld [vmem:[%s1215] sm:$0x1]
    %s1217 = scalar_lea.vmem %s6, 1
    %v1218 = vld [vmem:[%s1217] sm:$0x1]
    %v1219 = vsel %vm215, %v1212, 0.0
    %1220 = vadd.xlane.f32.xlu0 %v1219
    %v1221 = vpop.xlane.xlu0 %1220
    %v1222 = vsel %vm215, %v1213, 0.0
    %1223 = vadd.xlane.f32.xlu0 %v1222
    %v1224 = vpop.xlane.xlu0 %1223
    %v1225 = vsel %vm222, %v1214, 0.0
    %1226 = vadd.xlane.f32.xlu0 %v1225
    %v1227 = vpop.xlane.xlu0 %1226
    %v1228 = vmul.f32 %v1221, %v232
    %v1229 = vmul.f32 %v1224, %v232
    %v1230 = vmul.f32 %v1227, %v232
    %v1231 = vsub.f32 %v1212, %v1228
    %v1232 = vsub.f32 %v1213, %v1229
    %v1233 = vsub.f32 %v1214, %v1230
    %v1234 = vmul.f32 %v1231, %v1231
    %v1235 = vmul.f32 %v1232, %v1232
    %v1236 = vmul.f32 %v1233, %v1233
    %v1237 = vsel %vm215, %v1234, 0.0
    %1238 = vadd.xlane.f32.xlu0 %v1237
    %v1239 = vpop.xlane.xlu0 %1238
    %v1240 = vsel %vm215, %v1235, 0.0
    %1241 = vadd.xlane.f32.xlu0 %v1240
    %v1242 = vpop.xlane.xlu0 %1241
    %v1243 = vsel %vm222, %v1236, 0.0
    %1244 = vadd.xlane.f32.xlu0 %v1243
    %v1245 = vpop.xlane.xlu0 %1244
    %v1246 = vmul.f32 %v1239, %v232
    %v1247 = vmul.f32 %v1242, %v232
    %v1248 = vmul.f32 %v1245, %v232
    %v1249 = vadd.f32 %v1246, 1e-05
    %v1250 = vadd.f32 %v1247, 1e-05
    %v1251 = vadd.f32 %v1248, 1e-05
    %v1252 = vrsqrt.pop %v1249
    %v1253 = vmul.f32 %v1252, %v1249
    %v1254 = vmul.f32 %v1253, %v1252
    %v1255 = vmul.f32 0.5, %v1254
    %v1256 = vsub.f32 1.5, %v1255
    %v1257 = vmul.f32 %v1252, %v1256
    %vm1258 = vweird.f32 %v1249
    %vm1259 = vweird.f32 %v1252
    %vm1260 = vmor %vm1258, %vm1259
    %v1261 = vsel %vm1260, %v1252, %v1257
    %v1262 = vrsqrt.pop %v1250
    %v1263 = vmul.f32 %v1262, %v1250
    %v1264 = vmul.f32 %v1263, %v1262
    %v1265 = vmul.f32 0.5, %v1264
    %v1266 = vsub.f32 1.5, %v1265
    %v1267 = vmul.f32 %v1262, %v1266
    %vm1268 = vweird.f32 %v1250
    %vm1269 = vweird.f32 %v1262
    %vm1270 = vmor %vm1268, %vm1269
    %v1271 = vsel %vm1270, %v1262, %v1267
    %v1272 = vrsqrt.pop %v1251
    %v1273 = vmul.f32 %v1272, %v1251
    %v1274 = vmul.f32 %v1273, %v1272
    %v1275 = vmul.f32 0.5, %v1274
    %v1276 = vsub.f32 1.5, %v1275
    %v1277 = vmul.f32 %v1272, %v1276
    %vm1278 = vweird.f32 %v1251
    %vm1279 = vweird.f32 %v1272
    %vm1280 = vmor %vm1278, %vm1279
    %v1281 = vsel %vm1280, %v1272, %v1277
    %v1282 = vmul.f32 %v1231, %v1261
    %v1283 = vmul.f32 %v1232, %v1271
    %v1284 = vmul.f32 %v1233, %v1281
    %v1286 = vperm.slane %v1216, 0
    %v1288 = vmul.f32 %v1282, %v1286
    %v1289 = vmul.f32 %v1283, %v1286
    %v1290 = vmul.f32 %v1284, %v1286
    %v1292 = vperm.slane %v1218, 0
    %v1294 = vadd.f32 %v1288, %v1292
    %v1295 = vadd.f32 %v1289, %v1292
    %v1296 = vadd.f32 %v1290, %v1292
    %s1297 = scalar_lea.vmem %s7, 32
    %v1298 = vld [vmem:[%s1297] sm:$0xff]
    %v1299 = vld [vmem:[%s1297 + $0x8] sm:$0xff]
    %v1300 = vld [vmem:[%s1297 + $0x10] sm:$0xff]
    %v1301 = vld [vmem:[%s1297 + $0x18] sm:$0xff]
    %v1303 = vsel %vm215, %v1294, 0
    %v1306 = vsel %vm215, %v1295, 0
    %v1309 = vsel %vm215, %v1296, 0
    %1311 = vmatpush.msra.mxu0 0.0
    %1312 = vmatpush.msra.mxu0 0.0
    %1313 = vmatpush.msra.mxu0 0.0
    %1314 = vmatpush.msra.mxu0 0.0
    %1315 = vmatpush.msra.mxu0 0.0
    %1316 = vmatpush.msra.mxu0 0.0
    %1317 = vmatpush.msra.mxu0 0.0
    %1318 = vmatpush.msra.mxu0 0.0
    %1319 = vmatpush.msra.mxu0 0.0
    %1320 = vmatpush.msra.mxu0 0.0
    %1321 = vmatpush.msra.mxu0 0.0
    %1322 = vmatpush.msra.mxu0 0.0
    %1323 = vmatpush.msra.mxu0 %v1301
    %1324 = vmatpush.msra.mxu0 %v1300
    %1325 = vmatpush.msra.mxu0 %v1299
    %1326 = vmatpush.msra.mxu0 %v1298
    %1327 = vmatmul.f32.gmra.mxu0 %v1303
    %v1328 = vpop.f32.mrf.mxu0
    %v1329 = vadd.f32 0.0, %v1328
    %1330 = vmatmul.f32.gmra.mxu0 %v1306
    %v1331 = vpop.f32.mrf.mxu0
    %v1332 = vadd.f32 0.0, %v1331
    %1333 = vmatmul.f32.gmra.mxu0 %v1309
    %v1334 = vpop.f32.mrf.mxu0
    %v1335 = vadd.f32 0.0, %v1334
    %1336 = vdwg.mxu0
    %s1337 = scalar_lea.vmem %s8, 32
    %v1338 = vld [vmem:[%s1337] sm:$0xff]
    %v1339 = vld [vmem:[%s1337 + $0x8] sm:$0xff]
    %v1340 = vld [vmem:[%s1337 + $0x10] sm:$0xff]
    %v1341 = vld [vmem:[%s1337 + $0x18] sm:$0xff]
    %1345 = vrot.lane.b32.xlu0 %v1329, 96
    %v1346 = vpop.permute.xlu0 %1345
    %1347 = vrot.lane.b32.xlu0 %v1332, 96
    %v1348 = vpop.permute.xlu0 %1347
    %1349 = vrot.lane.b32.xlu0 %v1335, 96
    %v1350 = vpop.permute.xlu0 %1349
    %v1351 = vsel %vm354, %v1329, 0
    %v1353 = vsel %vm354, %v1332, 0
    %v1355 = vsel %vm354, %v1335, 0
    %v1357 = vsel %vm354, %v1346, 0
    %v1359 = vsel %vm354, %v1348, 0
    %v1361 = vsel %vm354, %v1350, 0
    %1363 = vmatpush.xpose.msra.mxu0 0.0
    %1364 = vmatpush.xpose.msra.mxu0 0.0
    %1365 = vmatpush.xpose.msra.mxu0 0.0
    %1366 = vmatpush.xpose.msra.mxu0 0.0
    %1367 = vmatpush.xpose.msra.mxu0 0.0
    %1368 = vmatpush.xpose.msra.mxu0 0.0
    %1369 = vmatpush.xpose.msra.mxu0 0.0
    %1370 = vmatpush.xpose.msra.mxu0 0.0
    %1371 = vmatpush.xpose.msra.mxu0 0.0
    %1372 = vmatpush.xpose.msra.mxu0 0.0
    %1373 = vmatpush.xpose.msra.mxu0 0.0
    %1374 = vmatpush.xpose.msra.mxu0 0.0
    %1375 = vmatpush.xpose.msra.mxu0 0.0
    %1376 = vmatpush.xpose.msra.mxu0 %v1361
    %1377 = vmatpush.xpose.msra.mxu0 %v1359
    %1378 = vmatpush.xpose.msra.mxu0 %v1357
    %1379 = vmatmul.f32.gmra.mxu0 %v1351
    %v1380 = vpop.f32.mrf.mxu0
    %v1381 = vadd.f32 %v210, %v1380
    %1382 = vmatmul.f32.gmra.mxu0 %v1353
    %v1383 = vpop.f32.mrf.mxu0
    %v1384 = vadd.f32 %v211, %v1383
    %1385 = vmatmul.f32.gmra.mxu0 %v1355
    %v1386 = vpop.f32.mrf.mxu0
    %v1387 = vadd.f32 %v212, %v1386
    %1388 = vdwg.mxu0
    %v1389 = vsel %vm393, %v1381, -inf
    %1390 = vmax.xlane.f32.xlu0 %v1389
    %v1391 = vpop.xlane.xlu0 %1390
    %v1392 = vsel %vm393, %v1384, -inf
    %1393 = vmax.xlane.f32.xlu0 %v1392
    %v1394 = vpop.xlane.xlu0 %1393
    %v1395 = vsel %vm400, %v1387, -inf
    %1396 = vmax.xlane.f32.xlu0 %v1395
    %v1397 = vpop.xlane.xlu0 %1396
    %v1398 = vsub.f32 %v1381, %v1391
    %v1399 = vsub.f32 %v1384, %v1394
    %v1400 = vsub.f32 %v1387, %v1397
    %v1401 = vmul.f32 %v1398, 1.442695
    %v1402 = vpow.pop %v1401
    %v1403 = vmul.f32 %v1399, 1.442695
    %v1404 = vpow.pop %v1403
    %v1405 = vmul.f32 %v1400, 1.442695
    %v1406 = vpow.pop %v1405
    %v1407 = vsel %vm393, %v1402, 0.0
    %1408 = vadd.xlane.f32.xlu0 %v1407
    %v1409 = vpop.xlane.xlu0 %1408
    %v1410 = vsel %vm393, %v1404, 0.0
    %1411 = vadd.xlane.f32.xlu0 %v1410
    %v1412 = vpop.xlane.xlu0 %1411
    %v1413 = vsel %vm400, %v1406, 0.0
    %1414 = vadd.xlane.f32.xlu0 %v1413
    %v1415 = vpop.xlane.xlu0 %1414
    %v1416 = vrcp.pop %v1409
    %v1417 = vrcp.pop %v1412
    %v1418 = vrcp.pop %v1415
    %v1419 = vmul.f32 %v1402, %v1416
    %v1420 = vmul.f32 %v1404, %v1417
    %v1421 = vmul.f32 %v1406, %v1418
    %1422 = vrot.lane.b32.xlu0 %v1329, 64
    %v1423 = vpop.permute.xlu0 %1422
    %1424 = vrot.lane.b32.xlu0 %v1332, 64
    %v1425 = vpop.permute.xlu0 %1424
    %1426 = vrot.lane.b32.xlu0 %v1335, 64
    %v1427 = vpop.permute.xlu0 %1426
    %v1431 = vsel %vm393, %v1419, 0
    %v1434 = vsel %vm393, %v1420, 0
    %v1437 = vsel %vm393, %v1421, 0
    %v1439 = vsel %vm445, %v1427, 0
    %1441 = vmatpush.msra.mxu0 0.0
    %1442 = vmatpush.msra.mxu0 0.0
    %1443 = vmatpush.msra.mxu0 0.0
    %1444 = vmatpush.msra.mxu0 0.0
    %1445 = vmatpush.msra.mxu0 0.0
    %1446 = vmatpush.msra.mxu0 0.0
    %1447 = vmatpush.msra.mxu0 0.0
    %1448 = vmatpush.msra.mxu0 0.0
    %1449 = vmatpush.msra.mxu0 0.0
    %1450 = vmatpush.msra.mxu0 0.0
    %1451 = vmatpush.msra.mxu0 0.0
    %1452 = vmatpush.msra.mxu0 0.0
    %1453 = vmatpush.msra.mxu0 0.0
    %1454 = vmatpush.msra.mxu0 %v1439
    %1455 = vmatpush.msra.mxu0 %v1425
    %1456 = vmatpush.msra.mxu0 %v1423
    %1457 = vmatmul.f32.gmra.mxu0 %v1431
    %v1458 = vpop.f32.mrf.mxu0
    %v1459 = vadd.f32 0.0, %v1458
    %1460 = vmatmul.f32.gmra.mxu0 %v1434
    %v1461 = vpop.f32.mrf.mxu0
    %v1462 = vadd.f32 0.0, %v1461
    %1463 = vmatmul.f32.gmra.mxu0 %v1437
    %v1464 = vpop.f32.mrf.mxu0
    %v1465 = vadd.f32 0.0, %v1464
    %1466 = vdwg.mxu0
    %1467 = vrot.lane.b32.xlu0 %v1329, 120
    %v1468 = vpop.permute.xlu0 %1467
    %1469 = vrot.lane.b32.xlu0 %v1332, 120
    %v1470 = vpop.permute.xlu0 %1469
    %1471 = vrot.lane.b32.xlu0 %v1335, 120
    %v1472 = vpop.permute.xlu0 %1471
    %1473 = vrot.lane.b32.xlu0 %v1329, 88
    %v1474 = vpop.permute.xlu0 %1473
    %1475 = vrot.lane.b32.xlu0 %v1332, 88
    %v1476 = vpop.permute.xlu0 %1475
    %1477 = vrot.lane.b32.xlu0 %v1335, 88
    %v1478 = vpop.permute.xlu0 %1477
    %v1479 = vsel %vm354, %v1468, 0
    %v1481 = vsel %vm354, %v1470, 0
    %v1483 = vsel %vm354, %v1472, 0
    %v1485 = vsel %vm354, %v1474, 0
    %v1487 = vsel %vm354, %v1476, 0
    %v1489 = vsel %vm354, %v1478, 0
    %1491 = vmatpush.xpose.msra.mxu0 0.0
    %1492 = vmatpush.xpose.msra.mxu0 0.0
    %1493 = vmatpush.xpose.msra.mxu0 0.0
    %1494 = vmatpush.xpose.msra.mxu0 0.0
    %1495 = vmatpush.xpose.msra.mxu0 0.0
    %1496 = vmatpush.xpose.msra.mxu0 0.0
    %1497 = vmatpush.xpose.msra.mxu0 0.0
    %1498 = vmatpush.xpose.msra.mxu0 0.0
    %1499 = vmatpush.xpose.msra.mxu0 0.0
    %1500 = vmatpush.xpose.msra.mxu0 0.0
    %1501 = vmatpush.xpose.msra.mxu0 0.0
    %1502 = vmatpush.xpose.msra.mxu0 0.0
    %1503 = vmatpush.xpose.msra.mxu0 0.0
    %1504 = vmatpush.xpose.msra.mxu0 %v1489
    %1505 = vmatpush.xpose.msra.mxu0 %v1487
    %1506 = vmatpush.xpose.msra.mxu0 %v1485
    %1507 = vmatmul.f32.gmra.mxu0 %v1479
    %v1508 = vpop.f32.mrf.mxu0
    %v1509 = vadd.f32 %v210, %v1508
    %1510 = vmatmul.f32.gmra.mxu0 %v1481
    %v1511 = vpop.f32.mrf.mxu0
    %v1512 = vadd.f32 %v211, %v1511
    %1513 = vmatmul.f32.gmra.mxu0 %v1483
    %v1514 = vpop.f32.mrf.mxu0
    %v1515 = vadd.f32 %v212, %v1514
    %1516 = vdwg.mxu0
    %v1517 = vsel %vm393, %v1509, -inf
    %1518 = vmax.xlane.f32.xlu0 %v1517
    %v1519 = vpop.xlane.xlu0 %1518
    %v1520 = vsel %vm393, %v1512, -inf
    %1521 = vmax.xlane.f32.xlu0 %v1520
    %v1522 = vpop.xlane.xlu0 %1521
    %v1523 = vsel %vm400, %v1515, -inf
    %1524 = vmax.xlane.f32.xlu0 %v1523
    %v1525 = vpop.xlane.xlu0 %1524
    %v1526 = vsub.f32 %v1509, %v1519
    %v1527 = vsub.f32 %v1512, %v1522
    %v1528 = vsub.f32 %v1515, %v1525
    %v1529 = vmul.f32 %v1526, 1.442695
    %v1530 = vpow.pop %v1529
    %v1531 = vmul.f32 %v1527, 1.442695
    %v1532 = vpow.pop %v1531
    %v1533 = vmul.f32 %v1528, 1.442695
    %v1534 = vpow.pop %v1533
    %v1535 = vsel %vm393, %v1530, 0.0
    %1536 = vadd.xlane.f32.xlu0 %v1535
    %v1537 = vpop.xlane.xlu0 %1536
    %v1538 = vsel %vm393, %v1532, 0.0
    %1539 = vadd.xlane.f32.xlu0 %v1538
    %v1540 = vpop.xlane.xlu0 %1539
    %v1541 = vsel %vm400, %v1534, 0.0
    %1542 = vadd.xlane.f32.xlu0 %v1541
    %v1543 = vpop.xlane.xlu0 %1542
    %v1544 = vrcp.pop %v1537
    %v1545 = vrcp.pop %v1540
    %v1546 = vrcp.pop %v1543
    %v1547 = vmul.f32 %v1530, %v1544
    %v1548 = vmul.f32 %v1532, %v1545
    %v1549 = vmul.f32 %v1534, %v1546
    %1550 = vrot.lane.b32.xlu0 %v1329, 56
    %v1551 = vpop.permute.xlu0 %1550
    %1552 = vrot.lane.b32.xlu0 %v1332, 56
    %v1553 = vpop.permute.xlu0 %1552
    %1554 = vrot.lane.b32.xlu0 %v1335, 56
    %v1555 = vpop.permute.xlu0 %1554
    %v1559 = vsel %vm393, %v1547, 0
    %v1562 = vsel %vm393, %v1548, 0
    %v1565 = vsel %vm393, %v1549, 0
    %v1567 = vsel %vm445, %v1555, 0
    %1569 = vmatpush.msra.mxu0 0.0
    %1570 = vmatpush.msra.mxu0 0.0
    %1571 = vmatpush.msra.mxu0 0.0
    %1572 = vmatpush.msra.mxu0 0.0
    %1573 = vmatpush.msra.mxu0 0.0
    %1574 = vmatpush.msra.mxu0 0.0
    %1575 = vmatpush.msra.mxu0 0.0
    %1576 = vmatpush.msra.mxu0 0.0
    %1577 = vmatpush.msra.mxu0 0.0
    %1578 = vmatpush.msra.mxu0 0.0
    %1579 = vmatpush.msra.mxu0 0.0
    %1580 = vmatpush.msra.mxu0 0.0
    %1581 = vmatpush.msra.mxu0 0.0
    %1582 = vmatpush.msra.mxu0 %v1567
    %1583 = vmatpush.msra.mxu0 %v1553
    %1584 = vmatpush.msra.mxu0 %v1551
    %1585 = vmatmul.f32.gmra.mxu0 %v1559
    %v1586 = vpop.f32.mrf.mxu0
    %v1587 = vadd.f32 0.0, %v1586
    %1588 = vmatmul.f32.gmra.mxu0 %v1562
    %v1589 = vpop.f32.mrf.mxu0
    %v1590 = vadd.f32 0.0, %v1589
    %1591 = vmatmul.f32.gmra.mxu0 %v1565
    %v1592 = vpop.f32.mrf.mxu0
    %v1593 = vadd.f32 0.0, %v1592
    %1594 = vdwg.mxu0
    %v1596 = vsel %vm354, %v1587, 0
    %v1599 = vsel %vm354, %v1590, 0
    %v1602 = vsel %vm354, %v1593, 0
    %1604 = vmatpush.msra.mxu0 0.0
    %1605 = vmatpush.msra.mxu0 0.0
    %1606 = vmatpush.msra.mxu0 0.0
    %1607 = vmatpush.msra.mxu0 0.0
    %1608 = vmatpush.msra.mxu0 0.0
    %1609 = vmatpush.msra.mxu0 0.0
    %1610 = vmatpush.msra.mxu0 0.0
    %1611 = vmatpush.msra.mxu0 0.0
    %1612 = vmatpush.msra.mxu0 0.0
    %1613 = vmatpush.msra.mxu0 0.0
    %1614 = vmatpush.msra.mxu0 0.0
    %1615 = vmatpush.msra.mxu0 0.0
    %1616 = vmatpush.msra.mxu0 0.0
    %1617 = vmatpush.msra.mxu0 0.0
    %1618 = vmatpush.msra.mxu0 0.0
    %1619 = vmatpush.msra.mxu0 %v1339
    %1620 = vmatmul.f32.gmra.mxu0 %v1596
    %v1621 = vpop.f32.mrf.mxu0
    %v1622 = vadd.f32 0.0, %v1621
    %1623 = vmatmul.f32.gmra.mxu0 %v1599
    %v1624 = vpop.f32.mrf.mxu0
    %v1625 = vadd.f32 0.0, %v1624
    %1626 = vmatmul.f32.gmra.mxu0 %v1602
    %v1627 = vpop.f32.mrf.mxu0
    %v1628 = vadd.f32 0.0, %v1627
    %1629 = vdwg.mxu0
    %v1631 = vsel %vm354, %v1459, 0
    %v1634 = vsel %vm354, %v1462, 0
    %v1637 = vsel %vm354, %v1465, 0
    %1639 = vmatpush.msra.mxu0 0.0
    %1640 = vmatpush.msra.mxu0 0.0
    %1641 = vmatpush.msra.mxu0 0.0
    %1642 = vmatpush.msra.mxu0 0.0
    %1643 = vmatpush.msra.mxu0 0.0
    %1644 = vmatpush.msra.mxu0 0.0
    %1645 = vmatpush.msra.mxu0 0.0
    %1646 = vmatpush.msra.mxu0 0.0
    %1647 = vmatpush.msra.mxu0 0.0
    %1648 = vmatpush.msra.mxu0 0.0
    %1649 = vmatpush.msra.mxu0 0.0
    %1650 = vmatpush.msra.mxu0 0.0
    %1651 = vmatpush.msra.mxu0 0.0
    %1652 = vmatpush.msra.mxu0 0.0
    %1653 = vmatpush.msra.mxu0 0.0
    %1654 = vmatpush.msra.mxu0 %v1338
    %1655 = vmatmul.f32.gmra.mxu0 %v1631
    %v1656 = vpop.f32.mrf.mxu0
    %v1657 = vadd.f32 %v1622, %v1656
    %1658 = vmatmul.f32.gmra.mxu0 %v1634
    %v1659 = vpop.f32.mrf.mxu0
    %v1660 = vadd.f32 %v1625, %v1659
    %1661 = vmatmul.f32.gmra.mxu0 %v1637
    %v1662 = vpop.f32.mrf.mxu0
    %v1663 = vadd.f32 %v1628, %v1662
    %1664 = vdwg.mxu0
    %1665 = vrot.lane.b32.xlu0 %v1329, 112
    %v1666 = vpop.permute.xlu0 %1665
    %1667 = vrot.lane.b32.xlu0 %v1332, 112
    %v1668 = vpop.permute.xlu0 %1667
    %1669 = vrot.lane.b32.xlu0 %v1335, 112
    %v1670 = vpop.permute.xlu0 %1669
    %1671 = vrot.lane.b32.xlu0 %v1329, 80
    %v1672 = vpop.permute.xlu0 %1671
    %1673 = vrot.lane.b32.xlu0 %v1332, 80
    %v1674 = vpop.permute.xlu0 %1673
    %1675 = vrot.lane.b32.xlu0 %v1335, 80
    %v1676 = vpop.permute.xlu0 %1675
    %v1677 = vsel %vm354, %v1666, 0
    %v1679 = vsel %vm354, %v1668, 0
    %v1681 = vsel %vm354, %v1670, 0
    %v1683 = vsel %vm354, %v1672, 0
    %v1685 = vsel %vm354, %v1674, 0
    %v1687 = vsel %vm354, %v1676, 0
    %1689 = vmatpush.xpose.msra.mxu0 0.0
    %1690 = vmatpush.xpose.msra.mxu0 0.0
    %1691 = vmatpush.xpose.msra.mxu0 0.0
    %1692 = vmatpush.xpose.msra.mxu0 0.0
    %1693 = vmatpush.xpose.msra.mxu0 0.0
    %1694 = vmatpush.xpose.msra.mxu0 0.0
    %1695 = vmatpush.xpose.msra.mxu0 0.0
    %1696 = vmatpush.xpose.msra.mxu0 0.0
    %1697 = vmatpush.xpose.msra.mxu0 0.0
    %1698 = vmatpush.xpose.msra.mxu0 0.0
    %1699 = vmatpush.xpose.msra.mxu0 0.0
    %1700 = vmatpush.xpose.msra.mxu0 0.0
    %1701 = vmatpush.xpose.msra.mxu0 0.0
    %1702 = vmatpush.xpose.msra.mxu0 %v1687
    %1703 = vmatpush.xpose.msra.mxu0 %v1685
    %1704 = vmatpush.xpose.msra.mxu0 %v1683
    %1705 = vmatmul.f32.gmra.mxu0 %v1677
    %v1706 = vpop.f32.mrf.mxu0
    %v1707 = vadd.f32 %v210, %v1706
    %1708 = vmatmul.f32.gmra.mxu0 %v1679
    %v1709 = vpop.f32.mrf.mxu0
    %v1710 = vadd.f32 %v211, %v1709
    %1711 = vmatmul.f32.gmra.mxu0 %v1681
    %v1712 = vpop.f32.mrf.mxu0
    %v1713 = vadd.f32 %v212, %v1712
    %1714 = vdwg.mxu0
    %v1715 = vsel %vm393, %v1707, -inf
    %1716 = vmax.xlane.f32.xlu0 %v1715
    %v1717 = vpop.xlane.xlu0 %1716
    %v1718 = vsel %vm393, %v1710, -inf
    %1719 = vmax.xlane.f32.xlu0 %v1718
    %v1720 = vpop.xlane.xlu0 %1719
    %v1721 = vsel %vm400, %v1713, -inf
    %1722 = vmax.xlane.f32.xlu0 %v1721
    %v1723 = vpop.xlane.xlu0 %1722
    %v1724 = vsub.f32 %v1707, %v1717
    %v1725 = vsub.f32 %v1710, %v1720
    %v1726 = vsub.f32 %v1713, %v1723
    %v1727 = vmul.f32 %v1724, 1.442695
    %v1728 = vpow.pop %v1727
    %v1729 = vmul.f32 %v1725, 1.442695
    %v1730 = vpow.pop %v1729
    %v1731 = vmul.f32 %v1726, 1.442695
    %v1732 = vpow.pop %v1731
    %v1733 = vsel %vm393, %v1728, 0.0
    %1734 = vadd.xlane.f32.xlu0 %v1733
    %v1735 = vpop.xlane.xlu0 %1734
    %v1736 = vsel %vm393, %v1730, 0.0
    %1737 = vadd.xlane.f32.xlu0 %v1736
    %v1738 = vpop.xlane.xlu0 %1737
    %v1739 = vsel %vm400, %v1732, 0.0
    %1740 = vadd.xlane.f32.xlu0 %v1739
    %v1741 = vpop.xlane.xlu0 %1740
    %v1742 = vrcp.pop %v1735
    %v1743 = vrcp.pop %v1738
    %v1744 = vrcp.pop %v1741
    %v1745 = vmul.f32 %v1728, %v1742
    %v1746 = vmul.f32 %v1730, %v1743
    %v1747 = vmul.f32 %v1732, %v1744
    %1748 = vrot.lane.b32.xlu0 %v1329, 48
    %v1749 = vpop.permute.xlu0 %1748
    %1750 = vrot.lane.b32.xlu0 %v1332, 48
    %v1751 = vpop.permute.xlu0 %1750
    %1752 = vrot.lane.b32.xlu0 %v1335, 48
    %v1753 = vpop.permute.xlu0 %1752
    %v1757 = vsel %vm393, %v1745, 0
    %v1760 = vsel %vm393, %v1746, 0
    %v1763 = vsel %vm393, %v1747, 0
    %v1765 = vsel %vm445, %v1753, 0
    %1767 = vmatpush.msra.mxu0 0.0
    %1768 = vmatpush.msra.mxu0 0.0
    %1769 = vmatpush.msra.mxu0 0.0
    %1770 = vmatpush.msra.mxu0 0.0
    %1771 = vmatpush.msra.mxu0 0.0
    %1772 = vmatpush.msra.mxu0 0.0
    %1773 = vmatpush.msra.mxu0 0.0
    %1774 = vmatpush.msra.mxu0 0.0
    %1775 = vmatpush.msra.mxu0 0.0
    %1776 = vmatpush.msra.mxu0 0.0
    %1777 = vmatpush.msra.mxu0 0.0
    %1778 = vmatpush.msra.mxu0 0.0
    %1779 = vmatpush.msra.mxu0 0.0
    %1780 = vmatpush.msra.mxu0 %v1765
    %1781 = vmatpush.msra.mxu0 %v1751
    %1782 = vmatpush.msra.mxu0 %v1749
    %1783 = vmatmul.f32.gmra.mxu0 %v1757
    %v1784 = vpop.f32.mrf.mxu0
    %v1785 = vadd.f32 0.0, %v1784
    %1786 = vmatmul.f32.gmra.mxu0 %v1760
    %v1787 = vpop.f32.mrf.mxu0
    %v1788 = vadd.f32 0.0, %v1787
    %1789 = vmatmul.f32.gmra.mxu0 %v1763
    %v1790 = vpop.f32.mrf.mxu0
    %v1791 = vadd.f32 0.0, %v1790
    %1792 = vdwg.mxu0
    %v1794 = vsel %vm354, %v1785, 0
    %v1797 = vsel %vm354, %v1788, 0
    %v1800 = vsel %vm354, %v1791, 0
    %1802 = vmatpush.msra.mxu0 0.0
    %1803 = vmatpush.msra.mxu0 0.0
    %1804 = vmatpush.msra.mxu0 0.0
    %1805 = vmatpush.msra.mxu0 0.0
    %1806 = vmatpush.msra.mxu0 0.0
    %1807 = vmatpush.msra.mxu0 0.0
    %1808 = vmatpush.msra.mxu0 0.0
    %1809 = vmatpush.msra.mxu0 0.0
    %1810 = vmatpush.msra.mxu0 0.0
    %1811 = vmatpush.msra.mxu0 0.0
    %1812 = vmatpush.msra.mxu0 0.0
    %1813 = vmatpush.msra.mxu0 0.0
    %1814 = vmatpush.msra.mxu0 0.0
    %1815 = vmatpush.msra.mxu0 0.0
    %1816 = vmatpush.msra.mxu0 0.0
    %1817 = vmatpush.msra.mxu0 %v1340
    %1818 = vmatmul.f32.gmra.mxu0 %v1794
    %v1819 = vpop.f32.mrf.mxu0
    %v1820 = vadd.f32 0.0, %v1819
    %1821 = vmatmul.f32.gmra.mxu0 %v1797
    %v1822 = vpop.f32.mrf.mxu0
    %v1823 = vadd.f32 0.0, %v1822
    %1824 = vmatmul.f32.gmra.mxu0 %v1800
    %v1825 = vpop.f32.mrf.mxu0
    %v1826 = vadd.f32 0.0, %v1825
    %1827 = vdwg.mxu0
    %v1828 = vadd.f32 %v1657, %v1820
    %v1829 = vadd.f32 %v1660, %v1823
    %v1830 = vadd.f32 %v1663, %v1826
    %1831 = vrot.lane.b32.xlu0 %v1329, 104
    %v1832 = vpop.permute.xlu0 %1831
    %1833 = vrot.lane.b32.xlu0 %v1332, 104
    %v1834 = vpop.permute.xlu0 %1833
    %1835 = vrot.lane.b32.xlu0 %v1335, 104
    %v1836 = vpop.permute.xlu0 %1835
    %1837 = vrot.lane.b32.xlu0 %v1329, 72
    %v1838 = vpop.permute.xlu0 %1837
    %1839 = vrot.lane.b32.xlu0 %v1332, 72
    %v1840 = vpop.permute.xlu0 %1839
    %1841 = vrot.lane.b32.xlu0 %v1335, 72
    %v1842 = vpop.permute.xlu0 %1841
    %v1843 = vsel %vm354, %v1832, 0
    %v1845 = vsel %vm354, %v1834, 0
    %v1847 = vsel %vm354, %v1836, 0
    %v1849 = vsel %vm354, %v1838, 0
    %v1851 = vsel %vm354, %v1840, 0
    %v1853 = vsel %vm354, %v1842, 0
    %1855 = vmatpush.xpose.msra.mxu0 0.0
    %1856 = vmatpush.xpose.msra.mxu0 0.0
    %1857 = vmatpush.xpose.msra.mxu0 0.0
    %1858 = vmatpush.xpose.msra.mxu0 0.0
    %1859 = vmatpush.xpose.msra.mxu0 0.0
    %1860 = vmatpush.xpose.msra.mxu0 0.0
    %1861 = vmatpush.xpose.msra.mxu0 0.0
    %1862 = vmatpush.xpose.msra.mxu0 0.0
    %1863 = vmatpush.xpose.msra.mxu0 0.0
    %1864 = vmatpush.xpose.msra.mxu0 0.0
    %1865 = vmatpush.xpose.msra.mxu0 0.0
    %1866 = vmatpush.xpose.msra.mxu0 0.0
    %1867 = vmatpush.xpose.msra.mxu0 0.0
    %1868 = vmatpush.xpose.msra.mxu0 %v1853
    %1869 = vmatpush.xpose.msra.mxu0 %v1851
    %1870 = vmatpush.xpose.msra.mxu0 %v1849
    %1871 = vmatmul.f32.gmra.mxu0 %v1843
    %v1872 = vpop.f32.mrf.mxu0
    %v1873 = vadd.f32 %v210, %v1872
    %1874 = vmatmul.f32.gmra.mxu0 %v1845
    %v1875 = vpop.f32.mrf.mxu0
    %v1876 = vadd.f32 %v211, %v1875
    %1877 = vmatmul.f32.gmra.mxu0 %v1847
    %v1878 = vpop.f32.mrf.mxu0
    %v1879 = vadd.f32 %v212, %v1878
    %1880 = vdwg.mxu0
    %v1881 = vsel %vm393, %v1873, -inf
    %1882 = vmax.xlane.f32.xlu0 %v1881
    %v1883 = vpop.xlane.xlu0 %1882
    %v1884 = vsel %vm393, %v1876, -inf
    %1885 = vmax.xlane.f32.xlu0 %v1884
    %v1886 = vpop.xlane.xlu0 %1885
    %v1887 = vsel %vm400, %v1879, -inf
    %1888 = vmax.xlane.f32.xlu0 %v1887
    %v1889 = vpop.xlane.xlu0 %1888
    %v1890 = vsub.f32 %v1873, %v1883
    %v1891 = vsub.f32 %v1876, %v1886
    %v1892 = vsub.f32 %v1879, %v1889
    %v1893 = vmul.f32 %v1890, 1.442695
    %v1894 = vpow.pop %v1893
    %v1895 = vmul.f32 %v1891, 1.442695
    %v1896 = vpow.pop %v1895
    %v1897 = vmul.f32 %v1892, 1.442695
    %v1898 = vpow.pop %v1897
    %v1899 = vsel %vm393, %v1894, 0.0
    %1900 = vadd.xlane.f32.xlu0 %v1899
    %v1901 = vpop.xlane.xlu0 %1900
    %v1902 = vsel %vm393, %v1896, 0.0
    %1903 = vadd.xlane.f32.xlu0 %v1902
    %v1904 = vpop.xlane.xlu0 %1903
    %v1905 = vsel %vm400, %v1898, 0.0
    %1906 = vadd.xlane.f32.xlu0 %v1905
    %v1907 = vpop.xlane.xlu0 %1906
    %v1908 = vrcp.pop %v1901
    %v1909 = vrcp.pop %v1904
    %v1910 = vrcp.pop %v1907
    %v1911 = vmul.f32 %v1894, %v1908
    %v1912 = vmul.f32 %v1896, %v1909
    %v1913 = vmul.f32 %v1898, %v1910
    %1914 = vrot.lane.b32.xlu0 %v1329, 40
    %v1915 = vpop.permute.xlu0 %1914
    %1916 = vrot.lane.b32.xlu0 %v1332, 40
    %v1917 = vpop.permute.xlu0 %1916
    %1918 = vrot.lane.b32.xlu0 %v1335, 40
    %v1919 = vpop.permute.xlu0 %1918
    %v1923 = vsel %vm393, %v1911, 0
    %v1926 = vsel %vm393, %v1912, 0
    %v1929 = vsel %vm393, %v1913, 0
    %v1931 = vsel %vm445, %v1919, 0
    %1933 = vmatpush.msra.mxu0 0.0
    %1934 = vmatpush.msra.mxu0 0.0
    %1935 = vmatpush.msra.mxu0 0.0
    %1936 = vmatpush.msra.mxu0 0.0
    %1937 = vmatpush.msra.mxu0 0.0
    %1938 = vmatpush.msra.mxu0 0.0
    %1939 = vmatpush.msra.mxu0 0.0
    %1940 = vmatpush.msra.mxu0 0.0
    %1941 = vmatpush.msra.mxu0 0.0
    %1942 = vmatpush.msra.mxu0 0.0
    %1943 = vmatpush.msra.mxu0 0.0
    %1944 = vmatpush.msra.mxu0 0.0
    %1945 = vmatpush.msra.mxu0 0.0
    %1946 = vmatpush.msra.mxu0 %v1931
    %1947 = vmatpush.msra.mxu0 %v1917
    %1948 = vmatpush.msra.mxu0 %v1915
    %1949 = vmatmul.f32.gmra.mxu0 %v1923
    %v1950 = vpop.f32.mrf.mxu0
    %v1951 = vadd.f32 0.0, %v1950
    %1952 = vmatmul.f32.gmra.mxu0 %v1926
    %v1953 = vpop.f32.mrf.mxu0
    %v1954 = vadd.f32 0.0, %v1953
    %1955 = vmatmul.f32.gmra.mxu0 %v1929
    %v1956 = vpop.f32.mrf.mxu0
    %v1957 = vadd.f32 0.0, %v1956
    %1958 = vdwg.mxu0
    %v1960 = vsel %vm354, %v1951, 0
    %v1963 = vsel %vm354, %v1954, 0
    %v1966 = vsel %vm354, %v1957, 0
    %1968 = vmatpush.msra.mxu0 0.0
    %1969 = vmatpush.msra.mxu0 0.0
    %1970 = vmatpush.msra.mxu0 0.0
    %1971 = vmatpush.msra.mxu0 0.0
    %1972 = vmatpush.msra.mxu0 0.0
    %1973 = vmatpush.msra.mxu0 0.0
    %1974 = vmatpush.msra.mxu0 0.0
    %1975 = vmatpush.msra.mxu0 0.0
    %1976 = vmatpush.msra.mxu0 0.0
    %1977 = vmatpush.msra.mxu0 0.0
    %1978 = vmatpush.msra.mxu0 0.0
    %1979 = vmatpush.msra.mxu0 0.0
    %1980 = vmatpush.msra.mxu0 0.0
    %1981 = vmatpush.msra.mxu0 0.0
    %1982 = vmatpush.msra.mxu0 0.0
    %1983 = vmatpush.msra.mxu0 %v1341
    %1984 = vmatmul.f32.gmra.mxu0 %v1960
    %v1985 = vpop.f32.mrf.mxu0
    %v1986 = vadd.f32 0.0, %v1985
    %1987 = vmatmul.f32.gmra.mxu0 %v1963
    %v1988 = vpop.f32.mrf.mxu0
    %v1989 = vadd.f32 0.0, %v1988
    %1990 = vmatmul.f32.gmra.mxu0 %v1966
    %v1991 = vpop.f32.mrf.mxu0
    %v1992 = vadd.f32 0.0, %v1991
    %1993 = vdwg.mxu0
    %v1994 = vadd.f32 %v1828, %v1986
    %v1995 = vadd.f32 %v1829, %v1989
    %v1996 = vadd.f32 %v1830, %v1992
    %v1997 = vadd.f32 %v1212, %v1994
    %v1998 = vadd.f32 %v1213, %v1995
    %v1999 = vadd.f32 %v1214, %v1996
    %s2000 = scalar_lea.vmem [#allocation6], 1
    %v2001 = vld [vmem:[%s2000] sm:$0x1]
    %v2003 = vperm.slane %v2001, 0
    %v2005 = vadd.f32 %v1997, %v2003
    %v2006 = vadd.f32 %v1998, %v2003
    %v2007 = vadd.f32 %v1999, %v2003
    %s2008 = scalar_lea.vmem %s10, 1
    %v2009 = vld [vmem:[%s2008] sm:$0x1]
    %s2010 = scalar_lea.vmem %s11, 1
    %v2011 = vld [vmem:[%s2010] sm:$0x1]
    %v2012 = vsel %vm215, %v2005, 0.0
    %2013 = vadd.xlane.f32.xlu0 %v2012
    %v2014 = vpop.xlane.xlu0 %2013
    %v2015 = vsel %vm215, %v2006, 0.0
    %2016 = vadd.xlane.f32.xlu0 %v2015
    %v2017 = vpop.xlane.xlu0 %2016
    %v2018 = vsel %vm222, %v2007, 0.0
    %2019 = vadd.xlane.f32.xlu0 %v2018
    %v2020 = vpop.xlane.xlu0 %2019
    %v2021 = vmul.f32 %v2014, %v232
    %v2022 = vmul.f32 %v2017, %v232
    %v2023 = vmul.f32 %v2020, %v232
    %v2024 = vsub.f32 %v2005, %v2021
    %v2025 = vsub.f32 %v2006, %v2022
    %v2026 = vsub.f32 %v2007, %v2023
    %v2027 = vmul.f32 %v2024, %v2024
    %v2028 = vmul.f32 %v2025, %v2025
    %v2029 = vmul.f32 %v2026, %v2026
    %v2030 = vsel %vm215, %v2027, 0.0
    %2031 = vadd.xlane.f32.xlu0 %v2030
    %v2032 = vpop.xlane.xlu0 %2031
    %v2033 = vsel %vm215, %v2028, 0.0
    %2034 = vadd.xlane.f32.xlu0 %v2033
    %v2035 = vpop.xlane.xlu0 %2034
    %v2036 = vsel %vm222, %v2029, 0.0
    %2037 = vadd.xlane.f32.xlu0 %v2036
    %v2038 = vpop.xlane.xlu0 %2037
    %v2039 = vmul.f32 %v2032, %v232
    %v2040 = vmul.f32 %v2035, %v232
    %v2041 = vmul.f32 %v2038, %v232
    %v2042 = vadd.f32 %v2039, 1e-05
    %v2043 = vadd.f32 %v2040, 1e-05
    %v2044 = vadd.f32 %v2041, 1e-05
    %v2045 = vrsqrt.pop %v2042
    %v2046 = vmul.f32 %v2045, %v2042
    %v2047 = vmul.f32 %v2046, %v2045
    %v2048 = vmul.f32 0.5, %v2047
    %v2049 = vsub.f32 1.5, %v2048
    %v2050 = vmul.f32 %v2045, %v2049
    %vm2051 = vweird.f32 %v2042
    %vm2052 = vweird.f32 %v2045
    %vm2053 = vmor %vm2051, %vm2052
    %v2054 = vsel %vm2053, %v2045, %v2050
    %v2055 = vrsqrt.pop %v2043
    %v2056 = vmul.f32 %v2055, %v2043
    %v2057 = vmul.f32 %v2056, %v2055
    %v2058 = vmul.f32 0.5, %v2057
    %v2059 = vsub.f32 1.5, %v2058
    %v2060 = vmul.f32 %v2055, %v2059
    %vm2061 = vweird.f32 %v2043
    %vm2062 = vweird.f32 %v2055
    %vm2063 = vmor %vm2061, %vm2062
    %v2064 = vsel %vm2063, %v2055, %v2060
    %v2065 = vrsqrt.pop %v2044
    %v2066 = vmul.f32 %v2065, %v2044
    %v2067 = vmul.f32 %v2066, %v2065
    %v2068 = vmul.f32 0.5, %v2067
    %v2069 = vsub.f32 1.5, %v2068
    %v2070 = vmul.f32 %v2065, %v2069
    %vm2071 = vweird.f32 %v2044
    %vm2072 = vweird.f32 %v2065
    %vm2073 = vmor %vm2071, %vm2072
    %v2074 = vsel %vm2073, %v2065, %v2070
    %v2075 = vmul.f32 %v2024, %v2054
    %v2076 = vmul.f32 %v2025, %v2064
    %v2077 = vmul.f32 %v2026, %v2074
    %v2079 = vperm.slane %v2009, 0
    %v2081 = vmul.f32 %v2075, %v2079
    %v2082 = vmul.f32 %v2076, %v2079
    %v2083 = vmul.f32 %v2077, %v2079
    %v2085 = vperm.slane %v2011, 0
    %v2087 = vadd.f32 %v2081, %v2085
    %v2088 = vadd.f32 %v2082, %v2085
    %v2089 = vadd.f32 %v2083, %v2085
    %s2090 = scalar_lea.vmem %s12, 32
    %v2091 = vld [vmem:[%s2090] sm:$0xff]
    %v2092 = vld [vmem:[%s2090 + $0x8] sm:$0xff]
    %v2093 = vld [vmem:[%s2090 + $0x10] sm:$0xff]
    %v2094 = vld [vmem:[%s2090 + $0x18] sm:$0xff]
    %s2095 = scalar_lea.vmem [#allocation7], 1
    %v2096 = vld [vmem:[%s2095] sm:$0x1]
    %v2098 = vperm.slane %v2096, 0
    %v2101 = vsel %vm215, %v2087, 0
    %v2104 = vsel %vm215, %v2088, 0
    %v2107 = vsel %vm215, %v2089, 0
    %2109 = vmatpush.msra.mxu0 0.0
    %2110 = vmatpush.msra.mxu0 0.0
    %2111 = vmatpush.msra.mxu0 0.0
    %2112 = vmatpush.msra.mxu0 0.0
    %2113 = vmatpush.msra.mxu0 0.0
    %2114 = vmatpush.msra.mxu0 0.0
    %2115 = vmatpush.msra.mxu0 0.0
    %2116 = vmatpush.msra.mxu0 0.0
    %2117 = vmatpush.msra.mxu0 0.0
    %2118 = vmatpush.msra.mxu0 0.0
    %2119 = vmatpush.msra.mxu0 0.0
    %2120 = vmatpush.msra.mxu0 0.0
    %2121 = vmatpush.msra.mxu0 %v2094
    %2122 = vmatpush.msra.mxu0 %v2093
    %2123 = vmatpush.msra.mxu0 %v2092
    %2124 = vmatpush.msra.mxu0 %v2091
    %2125 = vmatmul.f32.gmra.mxu0 %v2101
    %v2126 = vpop.f32.mrf.mxu0
    %v2127 = vadd.f32 %v2098, %v2126
    %2128 = vmatmul.f32.gmra.mxu0 %v2104
    %v2129 = vpop.f32.mrf.mxu0
    %v2130 = vadd.f32 %v2098, %v2129
    %2131 = vmatmul.f32.gmra.mxu0 %v2107
    %v2132 = vpop.f32.mrf.mxu0
    %v2133 = vadd.f32 %v2098, %v2132
    %2134 = vdwg.mxu0
    %v2135 = vmul.f32 %v2127, 0.5
    %v2136 = vmul.f32 %v2130, 0.5
    %v2137 = vmul.f32 %v2133, 0.5
    %v2138 = vmul.f32 %v2127, 0.044715
    %v2139 = vmul.f32 %v2130, 0.044715
    %v2140 = vmul.f32 %v2133, 0.044715
    %v2141 = vmul.f32 %v2138, %v2127
    %v2142 = vmul.f32 %v2139, %v2130
    %v2143 = vmul.f32 %v2140, %v2133
    %v2144 = vmul.f32 %v2141, %v2127
    %v2145 = vmul.f32 %v2142, %v2130
    %v2146 = vmul.f32 %v2143, %v2133
    %v2147 = vadd.f32 %v2127, %v2144
    %v2148 = vadd.f32 %v2130, %v2145
    %v2149 = vadd.f32 %v2133, %v2146
    %v2150 = vmul.f32 %v2147, 0.7978846
    %v2151 = vmul.f32 %v2148, 0.7978846
    %v2152 = vmul.f32 %v2149, 0.7978846
    %v2153 = vtanh.pop %v2150
    %v2154 = vtanh.pop %v2151
    %v2155 = vtanh.pop %v2152
    %v2156 = vadd.f32 %v2153, 1.0
    %v2157 = vadd.f32 %v2154, 1.0
    %v2158 = vadd.f32 %v2155, 1.0
    %v2159 = vmul.f32 %v2135, %v2156
    %v2160 = vmul.f32 %v2136, %v2157
    %v2161 = vmul.f32 %v2137, %v2158
    %s2162 = scalar_lea.vmem %s14, 64
    %v2163 = vld [vmem:[%s2162] sm:$0xff]
    %v2164 = vld [vmem:[%s2162 + $0x8] sm:$0xff]
    %v2165 = vld [vmem:[%s2162 + $0x10] sm:$0xff]
    %v2166 = vld [vmem:[%s2162 + $0x18] sm:$0xff]
    %v2167 = vld [vmem:[%s2162 + $0x20] sm:$0xff]
    %v2168 = vld [vmem:[%s2162 + $0x28] sm:$0xff]
    %v2169 = vld [vmem:[%s2162 + $0x30] sm:$0xff]
    %v2170 = vld [vmem:[%s2162 + $0x38] sm:$0xff]
    %s2171 = scalar_lea.vmem [#allocation9], 1
    %v2172 = vld [vmem:[%s2171] sm:$0x1]
    %v2174 = vperm.slane %v2172, 0
    %v2177 = vsel %vm1176, %v2159, 0
    %v2180 = vsel %vm1176, %v2160, 0
    %v2183 = vsel %vm1176, %v2161, 0
    %2185 = vmatpush.msra.mxu0 0.0
    %2186 = vmatpush.msra.mxu0 0.0
    %2187 = vmatpush.msra.mxu0 0.0
    %2188 = vmatpush.msra.mxu0 0.0
    %2189 = vmatpush.msra.mxu0 0.0
    %2190 = vmatpush.msra.mxu0 0.0
    %2191 = vmatpush.msra.mxu0 0.0
    %2192 = vmatpush.msra.mxu0 0.0
    %2193 = vmatpush.msra.mxu0 %v2170
    %2194 = vmatpush.msra.mxu0 %v2169
    %2195 = vmatpush.msra.mxu0 %v2168
    %2196 = vmatpush.msra.mxu0 %v2167
    %2197 = vmatpush.msra.mxu0 %v2166
    %2198 = vmatpush.msra.mxu0 %v2165
    %2199 = vmatpush.msra.mxu0 %v2164
    %2200 = vmatpush.msra.mxu0 %v2163
    %2201 = vmatmul.f32.gmra.mxu0 %v2177
    %v2202 = vpop.f32.mrf.mxu0
    %v2203 = vadd.f32 %v2174, %v2202
    %2204 = vmatmul.f32.gmra.mxu0 %v2180
    %v2205 = vpop.f32.mrf.mxu0
    %v2206 = vadd.f32 %v2174, %v2205
    %2207 = vmatmul.f32.gmra.mxu0 %v2183
    %v2208 = vpop.f32.mrf.mxu0
    %v2209 = vadd.f32 %v2174, %v2208
    %2210 = vdwg.mxu0
    %v2211 = vadd.f32 %v2005, %v2203
    %v2212 = vadd.f32 %v2006, %v2206
    %v2213 = vadd.f32 %v2007, %v2209
    %v2214 = vld [vmem:[#allocation2] sm:$0xff]
    %v2215 = vld [vmem:[#allocation2 + $0x8] sm:$0xff]
    %v2217 = vsel %vm393, %v2214, 0
    %v2220 = vsel %vm393, %v2215, 0
    %v2223 = vsel %vm445, %v2213, 0
    %2225 = vmatpush.msra.mxu0 0.0
    %2226 = vmatpush.msra.mxu0 0.0
    %2227 = vmatpush.msra.mxu0 0.0
    %2228 = vmatpush.msra.mxu0 0.0
    %2229 = vmatpush.msra.mxu0 0.0
    %2230 = vmatpush.msra.mxu0 0.0
    %2231 = vmatpush.msra.mxu0 0.0
    %2232 = vmatpush.msra.mxu0 0.0
    %2233 = vmatpush.msra.mxu0 0.0
    %2234 = vmatpush.msra.mxu0 0.0
    %2235 = vmatpush.msra.mxu0 0.0
    %2236 = vmatpush.msra.mxu0 0.0
    %2237 = vmatpush.msra.mxu0 0.0
    %2238 = vmatpush.msra.mxu0 %v2223
    %2239 = vmatpush.msra.mxu0 %v2212
    %2240 = vmatpush.msra.mxu0 %v2211
    %2241 = vmatmul.f32.gmra.mxu0 %v2217
    %v2242 = vpop.f32.mrf.mxu0
    %v2243 = vadd.f32 0.0, %v2242
    %2244 = vmatmul.f32.gmra.mxu0 %v2220
    %v2245 = vpop.f32.mrf.mxu0
    %v2246 = vadd.f32 0.0, %v2245
    %2247 = vdwg.mxu0
    %v2248 = vld [vmem:[#allocation12] sm:$0x1]
    %v2250 = vperm.slane %v2248, 0
    %v2252 = vadd.f32 %v2250, 0.0
    %v2253 = vld [vmem:[#allocation10] sm:$0xff]
    %v2254 = vld [vmem:[#allocation10 + $0x8] sm:$0xff]
    %v2255 = vld [vmem:[#allocation10 + $0x10] sm:$0xff]
    %v2256 = vld [vmem:[#allocation10 + $0x18] sm:$0xff]
    %v2258 = vsel %vm215, %v2243, 0
    %2260 = vmatpush.msra.mxu0 0.0
    %2261 = vmatpush.msra.mxu0 0.0
    %2262 = vmatpush.msra.mxu0 0.0
    %2263 = vmatpush.msra.mxu0 0.0
    %2264 = vmatpush.msra.mxu0 0.0
    %2265 = vmatpush.msra.mxu0 0.0
    %2266 = vmatpush.msra.mxu0 0.0
    %2267 = vmatpush.msra.mxu0 0.0
    %2268 = vmatpush.msra.mxu0 0.0
    %2269 = vmatpush.msra.mxu0 0.0
    %2270 = vmatpush.msra.mxu0 0.0
    %2271 = vmatpush.msra.mxu0 0.0
    %2272 = vmatpush.msra.mxu0 %v2256
    %2273 = vmatpush.msra.mxu0 %v2255
    %2274 = vmatpush.msra.mxu0 %v2254
    %2275 = vmatpush.msra.mxu0 %v2253
    %2276 = vmatmul.f32.gmra.mxu0 %v2258
    %v2277 = vpop.f32.mrf.mxu0
    %v2278 = vadd.f32 0.0, %v2277
    %2279 = vdwg.mxu0
    %v2280 = vadd.f32 %v2252, %v2278
    %s2281 = scalar_lea.vmem [#allocation10], 32
    %v2282 = vld [vmem:[%s2281] sm:$0xff]
    %v2283 = vld [vmem:[%s2281 + $0x8] sm:$0xff]
    %v2284 = vld [vmem:[%s2281 + $0x10] sm:$0xff]
    %v2285 = vld [vmem:[%s2281 + $0x18] sm:$0xff]
    %v2286 = vrot.slane %v2243, 2
    %v2287 = vsel %vm215, %v2286, 0
    %2289 = vmatpush.msra.mxu0 0.0
    %2290 = vmatpush.msra.mxu0 0.0
    %2291 = vmatpush.msra.mxu0 0.0
    %2292 = vmatpush.msra.mxu0 0.0
    %2293 = vmatpush.msra.mxu0 0.0
    %2294 = vmatpush.msra.mxu0 0.0
    %2295 = vmatpush.msra.mxu0 0.0
    %2296 = vmatpush.msra.mxu0 0.0
    %2297 = vmatpush.msra.mxu0 0.0
    %2298 = vmatpush.msra.mxu0 0.0
    %2299 = vmatpush.msra.mxu0 0.0
    %2300 = vmatpush.msra.mxu0 0.0
    %2301 = vmatpush.msra.mxu0 %v2285
    %2302 = vmatpush.msra.mxu0 %v2284
    %2303 = vmatpush.msra.mxu0 %v2283
    %2304 = vmatpush.msra.mxu0 %v2282
    %2305 = vmatmul.f32.gmra.mxu0 %v2287
    %v2306 = vpop.f32.mrf.mxu0
    %v2307 = vadd.f32 0.0, %v2306
    %2308 = vdwg.mxu0
    %v2309 = vadd.f32 %v2280, %v2307
    %s2310 = scalar_lea.vmem [#allocation10], 64
    %v2311 = vld [vmem:[%s2310] sm:$0xff]
    %v2312 = vld [vmem:[%s2310 + $0x8] sm:$0xff]
    %v2313 = vld [vmem:[%s2310 + $0x10] sm:$0xff]
    %v2314 = vld [vmem:[%s2310 + $0x18] sm:$0xff]
    %v2315 = vrot.slane %v2243, 4
    %v2316 = vsel %vm215, %v2315, 0
    %2318 = vmatpush.msra.mxu0 0.0
    %2319 = vmatpush.msra.mxu0 0.0
    %2320 = vmatpush.msra.mxu0 0.0
    %2321 = vmatpush.msra.mxu0 0.0
    %2322 = vmatpush.msra.mxu0 0.0
    %2323 = vmatpush.msra.mxu0 0.0
    %2324 = vmatpush.msra.mxu0 0.0
    %2325 = vmatpush.msra.mxu0 0.0
    %2326 = vmatpush.msra.mxu0 0.0
    %2327 = vmatpush.msra.mxu0 0.0
    %2328 = vmatpush.msra.mxu0 0.0
    %2329 = vmatpush.msra.mxu0 0.0
    %2330 = vmatpush.msra.mxu0 %v2314
    %2331 = vmatpush.msra.mxu0 %v2313
    %2332 = vmatpush.msra.mxu0 %v2312
    %2333 = vmatpush.msra.mxu0 %v2311
    %2334 = vmatmul.f32.gmra.mxu0 %v2316
    %v2335 = vpop.f32.mrf.mxu0
    %v2336 = vadd.f32 0.0, %v2335
    %2337 = vdwg.mxu0
    %v2338 = vadd.f32 %v2309, %v2336
    %s2339 = scalar_lea.vmem [#allocation10], 96
    %v2340 = vld [vmem:[%s2339] sm:$0xff]
    %v2341 = vld [vmem:[%s2339 + $0x8] sm:$0xff]
    %v2342 = vld [vmem:[%s2339 + $0x10] sm:$0xff]
    %v2343 = vld [vmem:[%s2339 + $0x18] sm:$0xff]
    %v2344 = vrot.slane %v2243, 6
    %v2345 = vsel %vm215, %v2344, 0
    %2347 = vmatpush.msra.mxu0 0.0
    %2348 = vmatpush.msra.mxu0 0.0
    %2349 = vmatpush.msra.mxu0 0.0
    %2350 = vmatpush.msra.mxu0 0.0
    %2351 = vmatpush.msra.mxu0 0.0
    %2352 = vmatpush.msra.mxu0 0.0
    %2353 = vmatpush.msra.mxu0 0.0
    %2354 = vmatpush.msra.mxu0 0.0
    %2355 = vmatpush.msra.mxu0 0.0
    %2356 = vmatpush.msra.mxu0 0.0
    %2357 = vmatpush.msra.mxu0 0.0
    %2358 = vmatpush.msra.mxu0 0.0
    %2359 = vmatpush.msra.mxu0 %v2343
    %2360 = vmatpush.msra.mxu0 %v2342
    %2361 = vmatpush.msra.mxu0 %v2341
    %2362 = vmatpush.msra.mxu0 %v2340
    %2363 = vmatmul.f32.gmra.mxu0 %v2345
    %v2364 = vpop.f32.mrf.mxu0
    %v2365 = vadd.f32 0.0, %v2364
    %2366 = vdwg.mxu0
    %v2367 = vadd.f32 %v2338, %v2365
    %s2368 = scalar_lea.vmem [#allocation10], 128
    %v2369 = vld [vmem:[%s2368] sm:$0xff]
    %v2370 = vld [vmem:[%s2368 + $0x8] sm:$0xff]
    %v2371 = vld [vmem:[%s2368 + $0x10] sm:$0xff]
    %v2372 = vld [vmem:[%s2368 + $0x18] sm:$0xff]
    %v2374 = vsel %vm215, %v2246, 0
    %2376 = vmatpush.msra.mxu0 0.0
    %2377 = vmatpush.msra.mxu0 0.0
    %2378 = vmatpush.msra.mxu0 0.0
    %2379 = vmatpush.msra.mxu0 0.0
    %2380 = vmatpush.msra.mxu0 0.0
    %2381 = vmatpush.msra.mxu0 0.0
    %2382 = vmatpush.msra.mxu0 0.0
    %2383 = vmatpush.msra.mxu0 0.0
    %2384 = vmatpush.msra.mxu0 0.0
    %2385 = vmatpush.msra.mxu0 0.0
    %2386 = vmatpush.msra.mxu0 0.0
    %2387 = vmatpush.msra.mxu0 0.0
    %2388 = vmatpush.msra.mxu0 %v2372
    %2389 = vmatpush.msra.mxu0 %v2371
    %2390 = vmatpush.msra.mxu0 %v2370
    %2391 = vmatpush.msra.mxu0 %v2369
    %2392 = vmatmul.f32.gmra.mxu0 %v2374
    %v2393 = vpop.f32.mrf.mxu0
    %v2394 = vadd.f32 0.0, %v2393
    %2395 = vdwg.mxu0
    %v2396 = vadd.f32 %v2367, %v2394
    %s2397 = scalar_lea.vmem [#allocation10], 160
    %v2398 = vld [vmem:[%s2397] sm:$0xff]
    %v2399 = vld [vmem:[%s2397 + $0x8] sm:$0xff]
    %v2400 = vld [vmem:[%s2397 + $0x10] sm:$0xff]
    %v2401 = vld [vmem:[%s2397 + $0x18] sm:$0xff]
    %v2402 = vrot.slane %v2246, 2
    %v2403 = vsel %vm215, %v2402, 0
    %2405 = vmatpush.msra.mxu0 0.0
    %2406 = vmatpush.msra.mxu0 0.0
    %2407 = vmatpush.msra.mxu0 0.0
    %2408 = vmatpush.msra.mxu0 0.0
    %2409 = vmatpush.msra.mxu0 0.0
    %2410 = vmatpush.msra.mxu0 0.0
    %2411 = vmatpush.msra.mxu0 0.0
    %2412 = vmatpush.msra.mxu0 0.0
    %2413 = vmatpush.msra.mxu0 0.0
    %2414 = vmatpush.msra.mxu0 0.0
    %2415 = vmatpush.msra.mxu0 0.0
    %2416 = vmatpush.msra.mxu0 0.0
    %2417 = vmatpush.msra.mxu0 %v2401
    %2418 = vmatpush.msra.mxu0 %v2400
    %2419 = vmatpush.msra.mxu0 %v2399
    %2420 = vmatpush.msra.mxu0 %v2398
    %2421 = vmatmul.f32.gmra.mxu0 %v2403
    %v2422 = vpop.f32.mrf.mxu0
    %v2423 = vadd.f32 0.0, %v2422
    %2424 = vdwg.mxu0
    %v2425 = vadd.f32 %v2396, %v2423
    %s2426 = scalar_lea.vmem [#allocation10], 192
    %v2427 = vld [vmem:[%s2426] sm:$0xff]
    %v2428 = vld [vmem:[%s2426 + $0x8] sm:$0xff]
    %v2429 = vld [vmem:[%s2426 + $0x10] sm:$0xff]
    %v2430 = vld [vmem:[%s2426 + $0x18] sm:$0xff]
    %v2431 = vrot.slane %v2246, 4
    %v2432 = vsel %vm215, %v2431, 0
    %2434 = vmatpush.msra.mxu0 0.0
    %2435 = vmatpush.msra.mxu0 0.0
    %2436 = vmatpush.msra.mxu0 0.0
    %2437 = vmatpush.msra.mxu0 0.0
    %2438 = vmatpush.msra.mxu0 0.0
    %2439 = vmatpush.msra.mxu0 0.0
    %2440 = vmatpush.msra.mxu0 0.0
    %2441 = vmatpush.msra.mxu0 0.0
    %2442 = vmatpush.msra.mxu0 0.0
    %2443 = vmatpush.msra.mxu0 0.0
    %2444 = vmatpush.msra.mxu0 0.0
    %2445 = vmatpush.msra.mxu0 0.0
    %2446 = vmatpush.msra.mxu0 %v2430
    %2447 = vmatpush.msra.mxu0 %v2429
    %2448 = vmatpush.msra.mxu0 %v2428
    %2449 = vmatpush.msra.mxu0 %v2427
    %2450 = vmatmul.f32.gmra.mxu0 %v2432
    %v2451 = vpop.f32.mrf.mxu0
    %v2452 = vadd.f32 0.0, %v2451
    %2453 = vdwg.mxu0
    %v2454 = vadd.f32 %v2425, %v2452
    %s2455 = scalar_lea.vmem [#allocation10], 224
    %v2456 = vld [vmem:[%s2455] sm:$0xff]
    %v2457 = vld [vmem:[%s2455 + $0x8] sm:$0xff]
    %v2458 = vld [vmem:[%s2455 + $0x10] sm:$0xff]
    %v2459 = vld [vmem:[%s2455 + $0x18] sm:$0xff]
    %v2460 = vrot.slane %v2246, 6
    %v2461 = vsel %vm215, %v2460, 0
    %2463 = vmatpush.msra.mxu0 0.0
    %2464 = vmatpush.msra.mxu0 0.0
    %2465 = vmatpush.msra.mxu0 0.0
    %2466 = vmatpush.msra.mxu0 0.0
    %2467 = vmatpush.msra.mxu0 0.0
    %2468 = vmatpush.msra.mxu0 0.0
    %2469 = vmatpush.msra.mxu0 0.0
    %2470 = vmatpush.msra.mxu0 0.0
    %2471 = vmatpush.msra.mxu0 0.0
    %2472 = vmatpush.msra.mxu0 0.0
    %2473 = vmatpush.msra.mxu0 0.0
    %2474 = vmatpush.msra.mxu0 0.0
    %2475 = vmatpush.msra.mxu0 %v2459
    %2476 = vmatpush.msra.mxu0 %v2458
    %2477 = vmatpush.msra.mxu0 %v2457
    %2478 = vmatpush.msra.mxu0 %v2456
    %2479 = vmatmul.f32.gmra.mxu0 %v2461
    %v2480 = vpop.f32.mrf.mxu0
    %v2481 = vadd.f32 0.0, %v2480
    %2482 = vdwg.mxu0
    %v2483 = vadd.f32 %v2454, %v2481
    %2484 = vst [vmem:[%s18] sm:$0x3] %v2483
    // Predicated region
    $region102: #{transformer_decoder_3d.1} parent=1 // pred_check
      _
    $region103: #{transformer_decoder_3d.1} parent=1 // pred_check_branch
      %2486 = sbr.rel (0) target = $region105
    $region104: #{transformer_decoder_3d.1} parent=1 // pred_region
      _
    $region105: #{transformer_decoder_3d.1} parent=1 // pred_fallthru
      _
    // Predicated region
    $region106: #{transformer_decoder_3d.1} parent=1 // pred_check
      _
    $region107: #{transformer_decoder_3d.1} parent=1 // pred_check_branch
      %2488 = sbr.rel (0) target = $region109
    $region108: #{transformer_decoder_3d.1} parent=1 // pred_region
      _
    $region109: #{transformer_decoder_3d.1} parent=1 // pred_fallthru
      _
    %2489 = vsyncpa [#allocation3], 1
    %2490 = vsyncpa [#allocation5], 1
    %2491 = vsyncpa [#allocation8], 1
    %2492 = vsyncpa [#allocation11], 1

</llo_original>
